<compile_context>
chip_gen: v5e
topology: v5e:2x2
jax: 0.10.0
libtpu: 0.0.40
codegen_flags: <defaults>
</compile_context>

<pallas_src>
import functools

import jax
import jax.numpy as jnp
from jax import lax
from jax.experimental import pallas as pl
from jax.experimental.pallas import tpu as pltpu


def _pospow(x, p):
  # relu(x) ** p  with  0 ** p == 0  (p > 0), written with exp/log so it
  # lowers cleanly on the EUP and never touches log(0).
  base = jnp.maximum(x, 0.0)
  pos = base > 0.0
  safe = jnp.where(pos, base, 1.0)
  return jnp.where(pos, jnp.exp(p * jnp.log(safe)), 0.0)


# --------------------------------------------------------------------------
# Fused kernel: one grid step == one batch element (everything lane-dense, C on lanes)
# --------------------------------------------------------------------------
def _pola_fused_kernel(x_ref, wqg_ref, bqg_ref, wkv_ref, bkv_ref, pos_ref,
                       iscale_ref, power_ref, ma_ref, mb_ref, wdw_ref, bdw_ref,
                       wproj_ref, bproj_ref, o_ref, dwc_scr, *,
                       img_h, img_w, ksize, eps):
  f32 = jnp.float32
  n_tok, C = x_ref.shape
  pad = ksize // 2

  x = x_ref[...].astype(f32)                                        # (N, C)

  # ---- fused qg / kv projections (weights resident in VMEM) --------------
  qg = jnp.dot(x, wqg_ref[...].astype(f32), preferred_element_type=f32)
  qg = qg + bqg_ref[...].astype(f32)
  q, g = qg[:, :C], qg[:, C:]                                       # lane-aligned splits
  kv = jnp.dot(x, wkv_ref[...].astype(f32), preferred_element_type=f32)
  kv = kv + bkv_ref[...].astype(f32)
  k, v = kv[:, :C], kv[:, C:]

  inv_scale = iscale_ref[...].astype(f32)                           # (1, C)
  power = power_ref[...].astype(f32)                                # (1, C)

  qs = q * inv_scale
  ks = (k + pos_ref[...].astype(f32)) * inv_scale

  # ---- polarity feature maps (elementwise, all heads at once) ------------
  q_pos = _pospow(qs, power)
  q_neg = _pospow(-qs, power)
  k_pos = _pospow(ks, power)
  k_neg = _pospow(-ks, power)

  m_pos = jnp.mean(k_pos, axis=0, keepdims=True)                    # (1, C)
  m_neg = jnp.mean(k_neg, axis=0, keepdims=True)

  # ---- block-diagonal-masked full-width linear attention ------------------
  # kv_p[i, j] = sum_t (k_pos[t, i] * r) * (v[t, j] * r);  masks m_a / m_b pick
  # the per-head diagonal blocks and route the "sim" / "opp" output columns.
  r = float(n_tok) ** -0.5
  v_s = v * r
  dn = (((0,), (0,)), ((), ()))                                     # contract token axis
  kv_p = lax.dot_general(k_pos * r, v_s, dn, preferred_element_type=f32)  # (C, C)
  kv_n = lax.dot_general(k_neg * r, v_s, dn, preferred_element_type=f32)

  ma = ma_ref[...].astype(f32)
  mb = mb_ref[...].astype(f32)
  w1 = kv_p * ma + kv_n * mb
  w2 = kv_n * ma + kv_p * mb
  num = (jnp.dot(q_pos, w1, preferred_element_type=f32)
         + jnp.dot(q_neg, w2, preferred_element_type=f32))          # (N, C)

  t_sim = q_pos * m_pos + q_neg * m_neg
  t_opp = q_neg * m_pos + q_pos * m_neg
  den = (jnp.dot(t_sim, ma, preferred_element_type=f32)
         + jnp.dot(t_opp, mb, preferred_element_type=f32))          # (N, C)
  attn = num / (den + eps)

  # ---- depthwise KxK conv on v (halo scratch, channels on lanes) ----------
  dwc_scr[...] = jnp.zeros_like(dwc_scr)
  dwc_scr[pad:pad + img_h, pad:pad + img_w, :] = v.reshape(img_h, img_w, C)
  acc = jnp.zeros((img_h, img_w, C), f32)
  for ky in range(ksize):
    for kx in range(ksize):
      tap = wdw_ref[ky:ky + 1, kx:kx + 1, :].astype(f32)            # (1, 1, C)
      acc = acc + dwc_scr[ky:ky + img_h, kx:kx + img_w, :] * tap
  vd = (acc + bdw_ref[...].astype(f32)).reshape(n_tok, C)

  # ---- gate + output projection -------------------------------------------
  t = (attn + vd) * g
  out = jnp.dot(t, wproj_ref[...].astype(f32), preferred_element_type=f32)
  out = out + bproj_ref[...].astype(f32)
  o_ref[...] = out.astype(o_ref.dtype)


# --------------------------------------------------------------------------
# Wrapper
# --------------------------------------------------------------------------
def pola_linear_attention_pallas(x, H, W, params, *, num_heads, alpha,
                                 kernel_size=5, sr_ratio=1):
  # TODO(synk): sr_ratio > 1 path (strided Conv2d spatial reduction + LayerNorm
  # and the F.interpolate of v back to N tokens) is not implemented here.
  assert sr_ratio == 1, "only the sr_ratio == 1 forward path is implemented"
  B, N, C = x.shape
  assert N == H * W
  assert C % num_heads == 0 and (C // num_heads) % 2 == 0
  d = C // num_heads
  dtype = x.dtype
  pad = kernel_size // 2
  n = N  # sr_ratio == 1 -> n == N

  # Parameter-only preprocessing (tiny (1,C)/(K,K,C) tensors; done once).
  inv_scale = (1.0 / jax.nn.softplus(params["scale"])).reshape(1, C)
  power = (1.0 + alpha * jax.nn.sigmoid(params["power"])).reshape(1, C)
  pos = params["pos"].reshape(N, C)
  b_qg = params["b_qg"].reshape(1, 2 * C)
  b_kv = params["b_kv"].reshape(1, 2 * C)
  b_proj = params["b_proj"].reshape(1, C)
  w_kkd = jnp.transpose(params["w_dwc"][:, 0], (1, 2, 0))           # (K, K, d)
  w_dw = jnp.tile(w_kkd, (1, 1, num_heads))                         # (K, K, C)
  b_dw = jnp.tile(params["b_dwc"], (num_heads,)).reshape(1, 1, C)

  # Block-diagonal head masks routing the sim / opp output halves.
  idx = jnp.arange(C)
  head_id = idx // d
  first_half = (idx % d) < (d // 2)
  same_head = head_id[:, None] == head_id[None, :]
  m_a = (same_head & first_half[None, :]).astype(jnp.float32)
  m_b = (same_head & (~first_half)[None, :]).astype(jnp.float32)

  kernel = functools.partial(_pola_fused_kernel, img_h=H, img_w=W,
                             ksize=kernel_size, eps=1e-6)

  macs = B * N * C * C * 11                       # qg+kv+kv_p/n+num+den+proj
  bytes_est = 4 * (2 * B * N * C + 2 * (C * 2 * C) + 5 * C * C + N * C
                   + kernel_size * kernel_size * C + 8 * C)

  out = pl.pallas_call(
      kernel,
      out_shape=jax.ShapeDtypeStruct((B, N, C), dtype),
      grid_spec=pltpu.PrefetchScalarGridSpec(
          num_scalar_prefetch=0,
          grid=(B,),
          in_specs=[
              pl.BlockSpec((None, N, C), lambda b: (b, 0, 0)),          # x
              pl.BlockSpec((C, 2 * C), lambda b: (0, 0)),               # w_qg
              pl.BlockSpec((1, 2 * C), lambda b: (0, 0)),               # b_qg
              pl.BlockSpec((C, 2 * C), lambda b: (0, 0)),               # w_kv
              pl.BlockSpec((1, 2 * C), lambda b: (0, 0)),               # b_kv
              pl.BlockSpec((N, C), lambda b: (0, 0)),                   # pos
              pl.BlockSpec((1, C), lambda b: (0, 0)),                   # inv_scale
              pl.BlockSpec((1, C), lambda b: (0, 0)),                   # power
              pl.BlockSpec((C, C), lambda b: (0, 0)),                   # mask A
              pl.BlockSpec((C, C), lambda b: (0, 0)),                   # mask B
              pl.BlockSpec((kernel_size, kernel_size, C),
                           lambda b: (0, 0, 0)),                        # w_dwc
              pl.BlockSpec((1, 1, C), lambda b: (0, 0, 0)),             # b_dwc
              pl.BlockSpec((C, C), lambda b: (0, 0)),                   # w_proj
              pl.BlockSpec((1, C), lambda b: (0, 0)),                   # b_proj
          ],
          out_specs=pl.BlockSpec((None, N, C), lambda b: (b, 0, 0)),
          scratch_shapes=[
              pltpu.VMEM((H + 2 * pad, W + 2 * pad, C), jnp.float32)]),
      compiler_params=pltpu.CompilerParams(
          dimension_semantics=("parallel",)),
      cost_estimate=pl.CostEstimate(
          flops=2 * macs,
          transcendentals=8 * B * N * C,
          bytes_accessed=bytes_est),
  )(x, params["w_qg"], b_qg, params["w_kv"], b_kv, pos, inv_scale, power,
    m_a, m_b, w_dw, b_dw, params["w_proj"], b_proj)

  # proj_drop / attn_drop have p = 0 -> identity.
  return out


# --------------------------------------------------------------------------
# Pure-JAX reference (direct translation of the torch forward, sr_ratio == 1)
# --------------------------------------------------------------------------
def pola_reference(x, H, W, params, *, num_heads, alpha):
  B, N, C = x.shape
  d = C // num_heads
  qg = x @ params["w_qg"] + params["b_qg"]
  q, g = qg[..., :C], qg[..., C:]
  kvp = x @ params["w_kv"] + params["b_kv"]
  k, v = kvp[..., :C], kvp[..., C:]
  n = k.shape[1]
  k = k + params["pos"]
  scale = jax.nn.softplus(params["scale"])
  power = 1.0 + alpha * jax.nn.sigmoid(params["power"])
  q = q / scale
  k = k / scale
  q = q.reshape(B, N, num_heads, d).transpose(0, 2, 1, 3)
  k = k.reshape(B, n, num_heads, d).transpose(0, 2, 1, 3)
  v = v.reshape(B, n, num_heads, d).transpose(0, 2, 1, 3)
  q_pos = jnp.maximum(q, 0.0) ** power
  q_neg = jnp.maximum(-q, 0.0) ** power
  k_pos = jnp.maximum(k, 0.0) ** power
  k_neg = jnp.maximum(-k, 0.0) ** power
  q_sim = jnp.concatenate([q_pos, q_neg], -1)
  q_opp = jnp.concatenate([q_neg, q_pos], -1)
  kf = jnp.concatenate([k_pos, k_neg], -1)
  v1, v2 = jnp.split(v, 2, axis=-1)
  kmean = jnp.mean(kf, axis=-2, keepdims=True)
  z = 1.0 / (q_sim @ jnp.swapaxes(kmean, -2, -1) + 1e-6)
  kv1 = (jnp.swapaxes(kf, -2, -1) * n ** -0.5) @ (v1 * n ** -0.5)
  x_sim = (q_sim @ kv1) * z
  z2 = 1.0 / (q_opp @ jnp.swapaxes(kmean, -2, -1) + 1e-6)
  kv2 = (jnp.swapaxes(kf, -2, -1) * n ** -0.5) @ (v2 * n ** -0.5)
  x_opp = (q_opp @ kv2) * z2
  xa = jnp.concatenate([x_sim, x_opp], -1).transpose(0, 2, 1, 3).reshape(B, N, C)

  K = params["w_dwc"].shape[-1]
  pad = K // 2
  vimg = v.reshape(B * num_heads, H, W, d).transpose(0, 3, 1, 2)
  vd = lax.conv_general_dilated(
      vimg, params["w_dwc"], window_strides=(1, 1),
      padding=((pad, pad), (pad, pad)), feature_group_count=d,
      dimension_numbers=("NCHW", "OIHW", "NCHW"))
  vd = vd + params["b_dwc"].reshape(1, d, 1, 1)
  vd = vd.reshape(B, C, N).transpose(0, 2, 1)

  out = (xa + vd) * g
  return out @ params["w_proj"] + params["b_proj"]


if __name__ == "__main__":
  # Small shapes consistent with the module: dim=128 (lane-dense), 8 heads
  # (head_dim=16), batch=2, H=W=8 -> N=num_patches=64, sr_ratio=1, kernel=5.
  B = 2
  H = W = 8
  N = H * W
  C = 128
  num_heads = 8
  head_dim = C // num_heads
  alpha = 4
  kernel_size = 5

  key = jax.random.PRNGKey(0)
  ks = jax.random.split(key, 10)

  x = jax.random.normal(ks[0], (B, N, C), jnp.float32) * 0.5

  def lin_init(k, fan_in, shape):
    return jax.random.normal(k, shape, jnp.float32) / jnp.sqrt(float(fan_in))

  params = dict(
      w_qg=lin_init(ks[1], C, (C, 2 * C)),
      b_qg=jnp.zeros((2 * C,), jnp.float32),     # qkv_bias=False
      w_kv=lin_init(ks[2], C, (C, 2 * C)),
      b_kv=jnp.zeros((2 * C,), jnp.float32),     # qkv_bias=False
      w_proj=lin_init(ks[3], C, (C, C)),
      b_proj=jax.random.normal(ks[4], (C,), jnp.float32) * 0.02,
      w_dwc=jax.random.normal(ks[5], (head_dim, 1, kernel_size, kernel_size),
                              jnp.float32) * 0.2,
      b_dwc=jax.random.normal(ks[6], (head_dim,), jnp.float32) * 0.02,
      power=jax.random.normal(ks[7], (1, num_heads, 1, head_dim), jnp.float32) * 0.5,
      scale=jax.random.normal(ks[8], (1, 1, C), jnp.float32) * 0.2,
      pos=jax.random.normal(ks[9], (1, N, C), jnp.float32) * 0.1,
  )

  out = pola_linear_attention_pallas(
      x, H, W, params, num_heads=num_heads, alpha=alpha, kernel_size=kernel_size)
  out = jax.block_until_ready(out)

  ref = pola_reference(x, H, W, params, num_heads=num_heads, alpha=alpha)

  assert out.shape == (B, N, C)
  max_err = float(jnp.max(jnp.abs(out - ref)))
  assert jnp.allclose(out, ref, atol=2e-4, rtol=2e-4), (
      f"mismatch vs reference: max abs err {max_err}")

  print("KERNEL_OK")
</pallas_src>

<mosaic_0001>
module attributes {stable_mosaic.version = 11 : i64} {
  func.func @_pola_fused_kernel(%arg0: i32, %arg1: memref<1x64x128xf32, #tpu.memory_space<vmem>>, %arg2: memref<128x256xf32, #tpu.memory_space<vmem>>, %arg3: memref<1x256xf32, #tpu.memory_space<vmem>>, %arg4: memref<128x256xf32, #tpu.memory_space<vmem>>, %arg5: memref<1x256xf32, #tpu.memory_space<vmem>>, %arg6: memref<64x128xf32, #tpu.memory_space<vmem>>, %arg7: memref<1x128xf32, #tpu.memory_space<vmem>>, %arg8: memref<1x128xf32, #tpu.memory_space<vmem>>, %arg9: memref<128x128xf32, #tpu.memory_space<vmem>>, %arg10: memref<128x128xf32, #tpu.memory_space<vmem>>, %arg11: memref<5x5x128xf32, #tpu.memory_space<vmem>>, %arg12: memref<1x1x128xf32, #tpu.memory_space<vmem>>, %arg13: memref<128x128xf32, #tpu.memory_space<vmem>>, %arg14: memref<1x128xf32, #tpu.memory_space<vmem>>, %arg15: memref<1x64x128xf32, #tpu.memory_space<vmem>>, %arg16: memref<12x12x128xf32, #tpu.memory_space<vmem>>) attributes {dimension_semantics = [#tpu.dimension_semantics<parallel>], iteration_bounds = array<i64: 2>, scalar_prefetch = 0 : i64, scratch_operands = 1 : i64, tpu.core_type = #tpu.core_type<tc>, window_params = [{transform_indices = @transform_0, window_bounds = array<i64: 1, 64, 128>}, {pipeline_mode = #tpu.pipeline_mode<synchronous>, transform_indices = @transform_1, window_bounds = array<i64: 128, 256>}, {pipeline_mode = #tpu.pipeline_mode<synchronous>, transform_indices = @transform_2, window_bounds = array<i64: 1, 256>}, {pipeline_mode = #tpu.pipeline_mode<synchronous>, transform_indices = @transform_3, window_bounds = array<i64: 128, 256>}, {pipeline_mode = #tpu.pipeline_mode<synchronous>, transform_indices = @transform_4, window_bounds = array<i64: 1, 256>}, {pipeline_mode = #tpu.pipeline_mode<synchronous>, transform_indices = @transform_5, window_bounds = array<i64: 64, 128>}, {pipeline_mode = #tpu.pipeline_mode<synchronous>, transform_indices = @transform_6, window_bounds = array<i64: 1, 128>}, {pipeline_mode = #tpu.pipeline_mode<synchronous>, transform_indices = @transform_7, window_bounds = array<i64: 1, 128>}, {pipeline_mode = #tpu.pipeline_mode<synchronous>, transform_indices = @transform_8, window_bounds = array<i64: 128, 128>}, {pipeline_mode = #tpu.pipeline_mode<synchronous>, transform_indices = @transform_9, window_bounds = array<i64: 128, 128>}, {pipeline_mode = #tpu.pipeline_mode<synchronous>, transform_indices = @transform_10, window_bounds = array<i64: 5, 5, 128>}, {pipeline_mode = #tpu.pipeline_mode<synchronous>, transform_indices = @transform_11, window_bounds = array<i64: 1, 1, 128>}, {pipeline_mode = #tpu.pipeline_mode<synchronous>, transform_indices = @transform_12, window_bounds = array<i64: 128, 128>}, {pipeline_mode = #tpu.pipeline_mode<synchronous>, transform_indices = @transform_13, window_bounds = array<i64: 1, 128>}, {transform_indices = @transform_14, window_bounds = array<i64: 1, 64, 128>}]} {
    %c0 = arith.constant 0 : index
    %c0_0 = arith.constant 0 : index
    %c0_1 = arith.constant 0 : index
    %0 = vector.load %arg1[%c0, %c0_0, %c0_1] : memref<1x64x128xf32, #tpu.memory_space<vmem>>, vector<1x64x128xf32>
    %1 = vector.shape_cast %0 : vector<1x64x128xf32> to vector<64x128xf32>
    %c0_2 = arith.constant 0 : index
    %c0_3 = arith.constant 0 : index
    %2 = vector.load %arg2[%c0_2, %c0_3] : memref<128x256xf32, #tpu.memory_space<vmem>>, vector<128x256xf32>
    %cst = arith.constant dense<0.000000e+00> : vector<64x256xf32>
    %3 = tpu.matmul %1, %2, %cst {dimension_numbers = #tpu.dot_dimension_numbers<[1], [0], [0], [1], [0, 0, 1, 1], [], []>} : vector<64x128xf32>, vector<128x256xf32>, vector<64x256xf32> -> vector<64x256xf32>
    %c0_4 = arith.constant 0 : index
    %c0_5 = arith.constant 0 : index
    %4 = vector.load %arg3[%c0_4, %c0_5] : memref<1x256xf32, #tpu.memory_space<vmem>>, vector<1x256xf32>
    %5 = vector.broadcast %4 : vector<1x256xf32> to vector<64x256xf32>
    %6 = arith.addf %3, %5 : vector<64x256xf32>
    %7 = vector.extract_strided_slice %6 {offsets = [0, 0], sizes = [64, 128], strides = [1, 1]} : vector<64x256xf32> to vector<64x128xf32>
    %8 = vector.extract_strided_slice %6 {offsets = [0, 128], sizes = [64, 128], strides = [1, 1]} : vector<64x256xf32> to vector<64x128xf32>
    %c0_6 = arith.constant 0 : index
    %c0_7 = arith.constant 0 : index
    %9 = vector.load %arg4[%c0_6, %c0_7] : memref<128x256xf32, #tpu.memory_space<vmem>>, vector<128x256xf32>
    %cst_8 = arith.constant dense<0.000000e+00> : vector<64x256xf32>
    %10 = tpu.matmul %1, %9, %cst_8 {dimension_numbers = #tpu.dot_dimension_numbers<[1], [0], [0], [1], [0, 0, 1, 1], [], []>} : vector<64x128xf32>, vector<128x256xf32>, vector<64x256xf32> -> vector<64x256xf32>
    %c0_9 = arith.constant 0 : index
    %c0_10 = arith.constant 0 : index
    %11 = vector.load %arg5[%c0_9, %c0_10] : memref<1x256xf32, #tpu.memory_space<vmem>>, vector<1x256xf32>
    %12 = vector.broadcast %11 : vector<1x256xf32> to vector<64x256xf32>
    %13 = arith.addf %10, %12 : vector<64x256xf32>
    %14 = vector.extract_strided_slice %13 {offsets = [0, 0], sizes = [64, 128], strides = [1, 1]} : vector<64x256xf32> to vector<64x128xf32>
    %15 = vector.extract_strided_slice %13 {offsets = [0, 128], sizes = [64, 128], strides = [1, 1]} : vector<64x256xf32> to vector<64x128xf32>
    %c0_11 = arith.constant 0 : index
    %c0_12 = arith.constant 0 : index
    %16 = vector.load %arg7[%c0_11, %c0_12] : memref<1x128xf32, #tpu.memory_space<vmem>>, vector<1x128xf32>
    %c0_13 = arith.constant 0 : index
    %c0_14 = arith.constant 0 : index
    %17 = vector.load %arg8[%c0_13, %c0_14] : memref<1x128xf32, #tpu.memory_space<vmem>>, vector<1x128xf32>
    %18 = vector.broadcast %16 : vector<1x128xf32> to vector<64x128xf32>
    %19 = arith.mulf %7, %18 : vector<64x128xf32>
    %c0_15 = arith.constant 0 : index
    %c0_16 = arith.constant 0 : index
    %20 = vector.load %arg6[%c0_15, %c0_16] : memref<64x128xf32, #tpu.memory_space<vmem>>, vector<64x128xf32>
    %21 = arith.addf %14, %20 : vector<64x128xf32>
    %22 = vector.broadcast %16 : vector<1x128xf32> to vector<64x128xf32>
    %23 = arith.mulf %21, %22 : vector<64x128xf32>
    %cst_17 = arith.constant 0.000000e+00 : f32
    %24 = vector.broadcast %cst_17 : f32 to vector<64x128xf32>
    %25 = arith.maximumf %19, %24 : vector<64x128xf32>
    %cst_18 = arith.constant 0.000000e+00 : f32
    %26 = vector.broadcast %cst_18 : f32 to vector<64x128xf32>
    %27 = arith.cmpf ogt, %25, %26 : vector<64x128xf32>
    %cst_19 = arith.constant 1.000000e+00 : f32
    %28 = vector.broadcast %cst_19 : f32 to vector<64x128xf32>
    %29 = arith.select %27, %25, %28 : vector<64x128xi1>, vector<64x128xf32>
    %30 = math.log %29 : vector<64x128xf32>
    %31 = vector.broadcast %17 : vector<1x128xf32> to vector<64x128xf32>
    %32 = arith.mulf %31, %30 : vector<64x128xf32>
    %33 = math.exp %32 : vector<64x128xf32>
    %cst_20 = arith.constant 0.000000e+00 : f32
    %34 = vector.broadcast %cst_20 : f32 to vector<64x128xf32>
    %35 = arith.select %27, %33, %34 : vector<64x128xi1>, vector<64x128xf32>
    %cst_21 = arith.constant 0.000000e+00 : f32
    %36 = vector.broadcast %cst_21 : f32 to vector<64x128xf32>
    %37 = arith.subf %36, %19 : vector<64x128xf32>
    %cst_22 = arith.constant 0.000000e+00 : f32
    %38 = vector.broadcast %cst_22 : f32 to vector<64x128xf32>
    %39 = arith.maximumf %37, %38 : vector<64x128xf32>
    %cst_23 = arith.constant 0.000000e+00 : f32
    %40 = vector.broadcast %cst_23 : f32 to vector<64x128xf32>
    %41 = arith.cmpf ogt, %39, %40 : vector<64x128xf32>
    %cst_24 = arith.constant 1.000000e+00 : f32
    %42 = vector.broadcast %cst_24 : f32 to vector<64x128xf32>
    %43 = arith.select %41, %39, %42 : vector<64x128xi1>, vector<64x128xf32>
    %44 = math.log %43 : vector<64x128xf32>
    %45 = vector.broadcast %17 : vector<1x128xf32> to vector<64x128xf32>
    %46 = arith.mulf %45, %44 : vector<64x128xf32>
    %47 = math.exp %46 : vector<64x128xf32>
    %cst_25 = arith.constant 0.000000e+00 : f32
    %48 = vector.broadcast %cst_25 : f32 to vector<64x128xf32>
    %49 = arith.select %41, %47, %48 : vector<64x128xi1>, vector<64x128xf32>
    %cst_26 = arith.constant 0.000000e+00 : f32
    %50 = vector.broadcast %cst_26 : f32 to vector<64x128xf32>
    %51 = arith.maximumf %23, %50 : vector<64x128xf32>
    %cst_27 = arith.constant 0.000000e+00 : f32
    %52 = vector.broadcast %cst_27 : f32 to vector<64x128xf32>
    %53 = arith.cmpf ogt, %51, %52 : vector<64x128xf32>
    %cst_28 = arith.constant 1.000000e+00 : f32
    %54 = vector.broadcast %cst_28 : f32 to vector<64x128xf32>
    %55 = arith.select %53, %51, %54 : vector<64x128xi1>, vector<64x128xf32>
    %56 = math.log %55 : vector<64x128xf32>
    %57 = vector.broadcast %17 : vector<1x128xf32> to vector<64x128xf32>
    %58 = arith.mulf %57, %56 : vector<64x128xf32>
    %59 = math.exp %58 : vector<64x128xf32>
    %cst_29 = arith.constant 0.000000e+00 : f32
    %60 = vector.broadcast %cst_29 : f32 to vector<64x128xf32>
    %61 = arith.select %53, %59, %60 : vector<64x128xi1>, vector<64x128xf32>
    %cst_30 = arith.constant 0.000000e+00 : f32
    %62 = vector.broadcast %cst_30 : f32 to vector<64x128xf32>
    %63 = arith.subf %62, %23 : vector<64x128xf32>
    %cst_31 = arith.constant 0.000000e+00 : f32
    %64 = vector.broadcast %cst_31 : f32 to vector<64x128xf32>
    %65 = arith.maximumf %63, %64 : vector<64x128xf32>
    %cst_32 = arith.constant 0.000000e+00 : f32
    %66 = vector.broadcast %cst_32 : f32 to vector<64x128xf32>
    %67 = arith.cmpf ogt, %65, %66 : vector<64x128xf32>
    %cst_33 = arith.constant 1.000000e+00 : f32
    %68 = vector.broadcast %cst_33 : f32 to vector<64x128xf32>
    %69 = arith.select %67, %65, %68 : vector<64x128xi1>, vector<64x128xf32>
    %70 = math.log %69 : vector<64x128xf32>
    %71 = vector.broadcast %17 : vector<1x128xf32> to vector<64x128xf32>
    %72 = arith.mulf %71, %70 : vector<64x128xf32>
    %73 = math.exp %72 : vector<64x128xf32>
    %cst_34 = arith.constant 0.000000e+00 : f32
    %74 = vector.broadcast %cst_34 : f32 to vector<64x128xf32>
    %75 = arith.select %67, %73, %74 : vector<64x128xi1>, vector<64x128xf32>
    %cst_35 = arith.constant dense<0.000000e+00> : vector<128xf32>
    %76 = vector.multi_reduction <add>, %61, %cst_35 [0] : vector<64x128xf32> to vector<128xf32>
    %77 = vector.shape_cast %76 : vector<128xf32> to vector<1x128xf32>
    %cst_36 = arith.constant 6.400000e+01 : f32
    %78 = vector.broadcast %cst_36 : f32 to vector<1x128xf32>
    %79 = arith.divf %77, %78 : vector<1x128xf32>
    %cst_37 = arith.constant dense<0.000000e+00> : vector<128xf32>
    %80 = vector.multi_reduction <add>, %75, %cst_37 [0] : vector<64x128xf32> to vector<128xf32>
    %81 = vector.shape_cast %80 : vector<128xf32> to vector<1x128xf32>
    %cst_38 = arith.constant 6.400000e+01 : f32
    %82 = vector.broadcast %cst_38 : f32 to vector<1x128xf32>
    %83 = arith.divf %81, %82 : vector<1x128xf32>
    %cst_39 = arith.constant 1.250000e-01 : f32
    %84 = vector.broadcast %cst_39 : f32 to vector<64x128xf32>
    %85 = arith.mulf %15, %84 : vector<64x128xf32>
    %cst_40 = arith.constant 1.250000e-01 : f32
    %86 = vector.broadcast %cst_40 : f32 to vector<64x128xf32>
    %87 = arith.mulf %61, %86 : vector<64x128xf32>
    %cst_41 = arith.constant dense<0.000000e+00> : vector<128x128xf32>
    %88 = tpu.matmul %87, %85, %cst_41 {dimension_numbers = #tpu.dot_dimension_numbers<[0], [0], [1], [1], [0, 1, 1, 1], [], []>} : vector<64x128xf32>, vector<64x128xf32>, vector<128x128xf32> -> vector<128x128xf32>
    %cst_42 = arith.constant 1.250000e-01 : f32
    %89 = vector.broadcast %cst_42 : f32 to vector<64x128xf32>
    %90 = arith.mulf %75, %89 : vector<64x128xf32>
    %cst_43 = arith.constant dense<0.000000e+00> : vector<128x128xf32>
    %91 = tpu.matmul %90, %85, %cst_43 {dimension_numbers = #tpu.dot_dimension_numbers<[0], [0], [1], [1], [0, 1, 1, 1], [], []>} : vector<64x128xf32>, vector<64x128xf32>, vector<128x128xf32> -> vector<128x128xf32>
    %c0_44 = arith.constant 0 : index
    %c0_45 = arith.constant 0 : index
    %92 = vector.load %arg9[%c0_44, %c0_45] : memref<128x128xf32, #tpu.memory_space<vmem>>, vector<128x128xf32>
    %c0_46 = arith.constant 0 : index
    %c0_47 = arith.constant 0 : index
    %93 = vector.load %arg10[%c0_46, %c0_47] : memref<128x128xf32, #tpu.memory_space<vmem>>, vector<128x128xf32>
    %94 = arith.mulf %88, %92 : vector<128x128xf32>
    %95 = arith.mulf %91, %93 : vector<128x128xf32>
    %96 = arith.addf %94, %95 : vector<128x128xf32>
    %97 = arith.mulf %91, %92 : vector<128x128xf32>
    %98 = arith.mulf %88, %93 : vector<128x128xf32>
    %99 = arith.addf %97, %98 : vector<128x128xf32>
    %cst_48 = arith.constant dense<0.000000e+00> : vector<64x128xf32>
    %100 = tpu.matmul %35, %96, %cst_48 {dimension_numbers = #tpu.dot_dimension_numbers<[1], [0], [0], [1], [0, 0, 1, 1], [], []>} : vector<64x128xf32>, vector<128x128xf32>, vector<64x128xf32> -> vector<64x128xf32>
    %cst_49 = arith.constant dense<0.000000e+00> : vector<64x128xf32>
    %101 = tpu.matmul %49, %99, %cst_49 {dimension_numbers = #tpu.dot_dimension_numbers<[1], [0], [0], [1], [0, 0, 1, 1], [], []>} : vector<64x128xf32>, vector<128x128xf32>, vector<64x128xf32> -> vector<64x128xf32>
    %102 = arith.addf %100, %101 : vector<64x128xf32>
    %103 = vector.broadcast %79 : vector<1x128xf32> to vector<64x128xf32>
    %104 = arith.mulf %35, %103 : vector<64x128xf32>
    %105 = vector.broadcast %83 : vector<1x128xf32> to vector<64x128xf32>
    %106 = arith.mulf %49, %105 : vector<64x128xf32>
    %107 = arith.addf %104, %106 : vector<64x128xf32>
    %108 = vector.broadcast %79 : vector<1x128xf32> to vector<64x128xf32>
    %109 = arith.mulf %49, %108 : vector<64x128xf32>
    %110 = vector.broadcast %83 : vector<1x128xf32> to vector<64x128xf32>
    %111 = arith.mulf %35, %110 : vector<64x128xf32>
    %112 = arith.addf %109, %111 : vector<64x128xf32>
    %cst_50 = arith.constant dense<0.000000e+00> : vector<64x128xf32>
    %113 = tpu.matmul %107, %92, %cst_50 {dimension_numbers = #tpu.dot_dimension_numbers<[1], [0], [0], [1], [0, 0, 1, 1], [], []>} : vector<64x128xf32>, vector<128x128xf32>, vector<64x128xf32> -> vector<64x128xf32>
    %cst_51 = arith.constant dense<0.000000e+00> : vector<64x128xf32>
    %114 = tpu.matmul %112, %93, %cst_51 {dimension_numbers = #tpu.dot_dimension_numbers<[1], [0], [0], [1], [0, 0, 1, 1], [], []>} : vector<64x128xf32>, vector<128x128xf32>, vector<64x128xf32> -> vector<64x128xf32>
    %115 = arith.addf %113, %114 : vector<64x128xf32>
    %cst_52 = arith.constant 9.99999997E-7 : f32
    %116 = vector.broadcast %cst_52 : f32 to vector<64x128xf32>
    %117 = arith.addf %115, %116 : vector<64x128xf32>
    %118 = arith.divf %102, %117 : vector<64x128xf32>
    %cst_53 = arith.constant 0.000000e+00 : f32
    %119 = vector.broadcast %cst_53 : f32 to vector<12x12x128xf32>
    %c0_54 = arith.constant 0 : index
    %c0_55 = arith.constant 0 : index
    %c0_56 = arith.constant 0 : index
    %120 = vector.load %arg16[%c0_54, %c0_55, %c0_56] : memref<12x12x128xf32, #tpu.memory_space<vmem>>, vector<12x12x128xf32>
    tpu.vector_store %arg16[%c0_54, %c0_55, %c0_56], %119 {strides = array<i32>} : memref<12x12x128xf32, #tpu.memory_space<vmem>>, vector<12x12x128xf32>,
    %121 = vector.shape_cast %15 : vector<64x128xf32> to vector<8x8x128xf32>
    %c2 = arith.constant 2 : index
    %c2_57 = arith.constant 2 : index
    %c0_58 = arith.constant 0 : index
    %122 = vector.load %arg16[%c2, %c2_57, %c0_58] : memref<12x12x128xf32, #tpu.memory_space<vmem>>, vector<8x8x128xf32>
    tpu.vector_store %arg16[%c2, %c2_57, %c0_58], %121 {strides = array<i32>} : memref<12x12x128xf32, #tpu.memory_space<vmem>>, vector<8x8x128xf32>,
    %cst_59 = arith.constant 0.000000e+00 : f32
    %123 = vector.broadcast %cst_59 : f32 to vector<8x8x128xf32>
    %c0_60 = arith.constant 0 : index
    %c0_61 = arith.constant 0 : index
    %c0_62 = arith.constant 0 : index
    %124 = vector.load %arg11[%c0_60, %c0_61, %c0_62] : memref<5x5x128xf32, #tpu.memory_space<vmem>>, vector<1x1x128xf32>
    %c0_63 = arith.constant 0 : index
    %c0_64 = arith.constant 0 : index
    %c0_65 = arith.constant 0 : index
    %125 = vector.load %arg16[%c0_63, %c0_64, %c0_65] : memref<12x12x128xf32, #tpu.memory_space<vmem>>, vector<8x8x128xf32>
    %126 = vector.broadcast %124 : vector<1x1x128xf32> to vector<8x8x128xf32>
    %127 = arith.mulf %125, %126 : vector<8x8x128xf32>
    %128 = arith.addf %123, %127 : vector<8x8x128xf32>
    %c0_66 = arith.constant 0 : index
    %c1 = arith.constant 1 : index
    %c0_67 = arith.constant 0 : index
    %129 = vector.load %arg11[%c0_66, %c1, %c0_67] : memref<5x5x128xf32, #tpu.memory_space<vmem>>, vector<1x1x128xf32>
    %c0_68 = arith.constant 0 : index
    %c1_69 = arith.constant 1 : index
    %c0_70 = arith.constant 0 : index
    %130 = vector.load %arg16[%c0_68, %c1_69, %c0_70] : memref<12x12x128xf32, #tpu.memory_space<vmem>>, vector<8x8x128xf32>
    %131 = vector.broadcast %129 : vector<1x1x128xf32> to vector<8x8x128xf32>
    %132 = arith.mulf %130, %131 : vector<8x8x128xf32>
    %133 = arith.addf %128, %132 : vector<8x8x128xf32>
    %c0_71 = arith.constant 0 : index
    %c2_72 = arith.constant 2 : index
    %c0_73 = arith.constant 0 : index
    %134 = vector.load %arg11[%c0_71, %c2_72, %c0_73] : memref<5x5x128xf32, #tpu.memory_space<vmem>>, vector<1x1x128xf32>
    %c0_74 = arith.constant 0 : index
    %c2_75 = arith.constant 2 : index
    %c0_76 = arith.constant 0 : index
    %135 = vector.load %arg16[%c0_74, %c2_75, %c0_76] : memref<12x12x128xf32, #tpu.memory_space<vmem>>, vector<8x8x128xf32>
    %136 = vector.broadcast %134 : vector<1x1x128xf32> to vector<8x8x128xf32>
    %137 = arith.mulf %135, %136 : vector<8x8x128xf32>
    %138 = arith.addf %133, %137 : vector<8x8x128xf32>
    %c0_77 = arith.constant 0 : index
    %c3 = arith.constant 3 : index
    %c0_78 = arith.constant 0 : index
    %139 = vector.load %arg11[%c0_77, %c3, %c0_78] : memref<5x5x128xf32, #tpu.memory_space<vmem>>, vector<1x1x128xf32>
    %c0_79 = arith.constant 0 : index
    %c3_80 = arith.constant 3 : index
    %c0_81 = arith.constant 0 : index
    %140 = vector.load %arg16[%c0_79, %c3_80, %c0_81] : memref<12x12x128xf32, #tpu.memory_space<vmem>>, vector<8x8x128xf32>
    %141 = vector.broadcast %139 : vector<1x1x128xf32> to vector<8x8x128xf32>
    %142 = arith.mulf %140, %141 : vector<8x8x128xf32>
    %143 = arith.addf %138, %142 : vector<8x8x128xf32>
    %c0_82 = arith.constant 0 : index
    %c4 = arith.constant 4 : index
    %c0_83 = arith.constant 0 : index
    %144 = vector.load %arg11[%c0_82, %c4, %c0_83] : memref<5x5x128xf32, #tpu.memory_space<vmem>>, vector<1x1x128xf32>
    %c0_84 = arith.constant 0 : index
    %c4_85 = arith.constant 4 : index
    %c0_86 = arith.constant 0 : index
    %145 = vector.load %arg16[%c0_84, %c4_85, %c0_86] : memref<12x12x128xf32, #tpu.memory_space<vmem>>, vector<8x8x128xf32>
    %146 = vector.broadcast %144 : vector<1x1x128xf32> to vector<8x8x128xf32>
    %147 = arith.mulf %145, %146 : vector<8x8x128xf32>
    %148 = arith.addf %143, %147 : vector<8x8x128xf32>
    %c1_87 = arith.constant 1 : index
    %c0_88 = arith.constant 0 : index
    %c0_89 = arith.constant 0 : index
    %149 = vector.load %arg11[%c1_87, %c0_88, %c0_89] : memref<5x5x128xf32, #tpu.memory_space<vmem>>, vector<1x1x128xf32>
    %c1_90 = arith.constant 1 : index
    %c0_91 = arith.constant 0 : index
    %c0_92 = arith.constant 0 : index
    %150 = vector.load %arg16[%c1_90, %c0_91, %c0_92] : memref<12x12x128xf32, #tpu.memory_space<vmem>>, vector<8x8x128xf32>
    %151 = vector.broadcast %149 : vector<1x1x128xf32> to vector<8x8x128xf32>
    %152 = arith.mulf %150, %151 : vector<8x8x128xf32>
    %153 = arith.addf %148, %152 : vector<8x8x128xf32>
    %c1_93 = arith.constant 1 : index
    %c1_94 = arith.constant 1 : index
    %c0_95 = arith.constant 0 : index
    %154 = vector.load %arg11[%c1_93, %c1_94, %c0_95] : memref<5x5x128xf32, #tpu.memory_space<vmem>>, vector<1x1x128xf32>
    %c1_96 = arith.constant 1 : index
    %c1_97 = arith.constant 1 : index
    %c0_98 = arith.constant 0 : index
    %155 = vector.load %arg16[%c1_96, %c1_97, %c0_98] : memref<12x12x128xf32, #tpu.memory_space<vmem>>, vector<8x8x128xf32>
    %156 = vector.broadcast %154 : vector<1x1x128xf32> to vector<8x8x128xf32>
    %157 = arith.mulf %155, %156 : vector<8x8x128xf32>
    %158 = arith.addf %153, %157 : vector<8x8x128xf32>
    %c1_99 = arith.constant 1 : index
    %c2_100 = arith.constant 2 : index
    %c0_101 = arith.constant 0 : index
    %159 = vector.load %arg11[%c1_99, %c2_100, %c0_101] : memref<5x5x128xf32, #tpu.memory_space<vmem>>, vector<1x1x128xf32>
    %c1_102 = arith.constant 1 : index
    %c2_103 = arith.constant 2 : index
    %c0_104 = arith.constant 0 : index
    %160 = vector.load %arg16[%c1_102, %c2_103, %c0_104] : memref<12x12x128xf32, #tpu.memory_space<vmem>>, vector<8x8x128xf32>
    %161 = vector.broadcast %159 : vector<1x1x128xf32> to vector<8x8x128xf32>
    %162 = arith.mulf %160, %161 : vector<8x8x128xf32>
    %163 = arith.addf %158, %162 : vector<8x8x128xf32>
    %c1_105 = arith.constant 1 : index
    %c3_106 = arith.constant 3 : index
    %c0_107 = arith.constant 0 : index
    %164 = vector.load %arg11[%c1_105, %c3_106, %c0_107] : memref<5x5x128xf32, #tpu.memory_space<vmem>>, vector<1x1x128xf32>
    %c1_108 = arith.constant 1 : index
    %c3_109 = arith.constant 3 : index
    %c0_110 = arith.constant 0 : index
    %165 = vector.load %arg16[%c1_108, %c3_109, %c0_110] : memref<12x12x128xf32, #tpu.memory_space<vmem>>, vector<8x8x128xf32>
    %166 = vector.broadcast %164 : vector<1x1x128xf32> to vector<8x8x128xf32>
    %167 = arith.mulf %165, %166 : vector<8x8x128xf32>
    %168 = arith.addf %163, %167 : vector<8x8x128xf32>
    %c1_111 = arith.constant 1 : index
    %c4_112 = arith.constant 4 : index
    %c0_113 = arith.constant 0 : index
    %169 = vector.load %arg11[%c1_111, %c4_112, %c0_113] : memref<5x5x128xf32, #tpu.memory_space<vmem>>, vector<1x1x128xf32>
    %c1_114 = arith.constant 1 : index
    %c4_115 = arith.constant 4 : index
    %c0_116 = arith.constant 0 : index
    %170 = vector.load %arg16[%c1_114, %c4_115, %c0_116] : memref<12x12x128xf32, #tpu.memory_space<vmem>>, vector<8x8x128xf32>
    %171 = vector.broadcast %169 : vector<1x1x128xf32> to vector<8x8x128xf32>
    %172 = arith.mulf %170, %171 : vector<8x8x128xf32>
    %173 = arith.addf %168, %172 : vector<8x8x128xf32>
    %c2_117 = arith.constant 2 : index
    %c0_118 = arith.constant 0 : index
    %c0_119 = arith.constant 0 : index
    %174 = vector.load %arg11[%c2_117, %c0_118, %c0_119] : memref<5x5x128xf32, #tpu.memory_space<vmem>>, vector<1x1x128xf32>
    %c2_120 = arith.constant 2 : index
    %c0_121 = arith.constant 0 : index
    %c0_122 = arith.constant 0 : index
    %175 = vector.load %arg16[%c2_120, %c0_121, %c0_122] : memref<12x12x128xf32, #tpu.memory_space<vmem>>, vector<8x8x128xf32>
    %176 = vector.broadcast %174 : vector<1x1x128xf32> to vector<8x8x128xf32>
    %177 = arith.mulf %175, %176 : vector<8x8x128xf32>
    %178 = arith.addf %173, %177 : vector<8x8x128xf32>
    %c2_123 = arith.constant 2 : index
    %c1_124 = arith.constant 1 : index
    %c0_125 = arith.constant 0 : index
    %179 = vector.load %arg11[%c2_123, %c1_124, %c0_125] : memref<5x5x128xf32, #tpu.memory_space<vmem>>, vector<1x1x128xf32>
    %c2_126 = arith.constant 2 : index
    %c1_127 = arith.constant 1 : index
    %c0_128 = arith.constant 0 : index
    %180 = vector.load %arg16[%c2_126, %c1_127, %c0_128] : memref<12x12x128xf32, #tpu.memory_space<vmem>>, vector<8x8x128xf32>
    %181 = vector.broadcast %179 : vector<1x1x128xf32> to vector<8x8x128xf32>
    %182 = arith.mulf %180, %181 : vector<8x8x128xf32>
    %183 = arith.addf %178, %182 : vector<8x8x128xf32>
    %c2_129 = arith.constant 2 : index
    %c2_130 = arith.constant 2 : index
    %c0_131 = arith.constant 0 : index
    %184 = vector.load %arg11[%c2_129, %c2_130, %c0_131] : memref<5x5x128xf32, #tpu.memory_space<vmem>>, vector<1x1x128xf32>
    %c2_132 = arith.constant 2 : index
    %c2_133 = arith.constant 2 : index
    %c0_134 = arith.constant 0 : index
    %185 = vector.load %arg16[%c2_132, %c2_133, %c0_134] : memref<12x12x128xf32, #tpu.memory_space<vmem>>, vector<8x8x128xf32>
    %186 = vector.broadcast %184 : vector<1x1x128xf32> to vector<8x8x128xf32>
    %187 = arith.mulf %185, %186 : vector<8x8x128xf32>
    %188 = arith.addf %183, %187 : vector<8x8x128xf32>
    %c2_135 = arith.constant 2 : index
    %c3_136 = arith.constant 3 : index
    %c0_137 = arith.constant 0 : index
    %189 = vector.load %arg11[%c2_135, %c3_136, %c0_137] : memref<5x5x128xf32, #tpu.memory_space<vmem>>, vector<1x1x128xf32>
    %c2_138 = arith.constant 2 : index
    %c3_139 = arith.constant 3 : index
    %c0_140 = arith.constant 0 : index
    %190 = vector.load %arg16[%c2_138, %c3_139, %c0_140] : memref<12x12x128xf32, #tpu.memory_space<vmem>>, vector<8x8x128xf32>
    %191 = vector.broadcast %189 : vector<1x1x128xf32> to vector<8x8x128xf32>
    %192 = arith.mulf %190, %191 : vector<8x8x128xf32>
    %193 = arith.addf %188, %192 : vector<8x8x128xf32>
    %c2_141 = arith.constant 2 : index
    %c4_142 = arith.constant 4 : index
    %c0_143 = arith.constant 0 : index
    %194 = vector.load %arg11[%c2_141, %c4_142, %c0_143] : memref<5x5x128xf32, #tpu.memory_space<vmem>>, vector<1x1x128xf32>
    %c2_144 = arith.constant 2 : index
    %c4_145 = arith.constant 4 : index
    %c0_146 = arith.constant 0 : index
    %195 = vector.load %arg16[%c2_144, %c4_145, %c0_146] : memref<12x12x128xf32, #tpu.memory_space<vmem>>, vector<8x8x128xf32>
    %196 = vector.broadcast %194 : vector<1x1x128xf32> to vector<8x8x128xf32>
    %197 = arith.mulf %195, %196 : vector<8x8x128xf32>
    %198 = arith.addf %193, %197 : vector<8x8x128xf32>
    %c3_147 = arith.constant 3 : index
    %c0_148 = arith.constant 0 : index
    %c0_149 = arith.constant 0 : index
    %199 = vector.load %arg11[%c3_147, %c0_148, %c0_149] : memref<5x5x128xf32, #tpu.memory_space<vmem>>, vector<1x1x128xf32>
    %c3_150 = arith.constant 3 : index
    %c0_151 = arith.constant 0 : index
    %c0_152 = arith.constant 0 : index
    %200 = vector.load %arg16[%c3_150, %c0_151, %c0_152] : memref<12x12x128xf32, #tpu.memory_space<vmem>>, vector<8x8x128xf32>
    %201 = vector.broadcast %199 : vector<1x1x128xf32> to vector<8x8x128xf32>
    %202 = arith.mulf %200, %201 : vector<8x8x128xf32>
    %203 = arith.addf %198, %202 : vector<8x8x128xf32>
    %c3_153 = arith.constant 3 : index
    %c1_154 = arith.constant 1 : index
    %c0_155 = arith.constant 0 : index
    %204 = vector.load %arg11[%c3_153, %c1_154, %c0_155] : memref<5x5x128xf32, #tpu.memory_space<vmem>>, vector<1x1x128xf32>
    %c3_156 = arith.constant 3 : index
    %c1_157 = arith.constant 1 : index
    %c0_158 = arith.constant 0 : index
    %205 = vector.load %arg16[%c3_156, %c1_157, %c0_158] : memref<12x12x128xf32, #tpu.memory_space<vmem>>, vector<8x8x128xf32>
    %206 = vector.broadcast %204 : vector<1x1x128xf32> to vector<8x8x128xf32>
    %207 = arith.mulf %205, %206 : vector<8x8x128xf32>
    %208 = arith.addf %203, %207 : vector<8x8x128xf32>
    %c3_159 = arith.constant 3 : index
    %c2_160 = arith.constant 2 : index
    %c0_161 = arith.constant 0 : index
    %209 = vector.load %arg11[%c3_159, %c2_160, %c0_161] : memref<5x5x128xf32, #tpu.memory_space<vmem>>, vector<1x1x128xf32>
    %c3_162 = arith.constant 3 : index
    %c2_163 = arith.constant 2 : index
    %c0_164 = arith.constant 0 : index
    %210 = vector.load %arg16[%c3_162, %c2_163, %c0_164] : memref<12x12x128xf32, #tpu.memory_space<vmem>>, vector<8x8x128xf32>
    %211 = vector.broadcast %209 : vector<1x1x128xf32> to vector<8x8x128xf32>
    %212 = arith.mulf %210, %211 : vector<8x8x128xf32>
    %213 = arith.addf %208, %212 : vector<8x8x128xf32>
    %c3_165 = arith.constant 3 : index
    %c3_166 = arith.constant 3 : index
    %c0_167 = arith.constant 0 : index
    %214 = vector.load %arg11[%c3_165, %c3_166, %c0_167] : memref<5x5x128xf32, #tpu.memory_space<vmem>>, vector<1x1x128xf32>
    %c3_168 = arith.constant 3 : index
    %c3_169 = arith.constant 3 : index
    %c0_170 = arith.constant 0 : index
    %215 = vector.load %arg16[%c3_168, %c3_169, %c0_170] : memref<12x12x128xf32, #tpu.memory_space<vmem>>, vector<8x8x128xf32>
    %216 = vector.broadcast %214 : vector<1x1x128xf32> to vector<8x8x128xf32>
    %217 = arith.mulf %215, %216 : vector<8x8x128xf32>
    %218 = arith.addf %213, %217 : vector<8x8x128xf32>
    %c3_171 = arith.constant 3 : index
    %c4_172 = arith.constant 4 : index
    %c0_173 = arith.constant 0 : index
    %219 = vector.load %arg11[%c3_171, %c4_172, %c0_173] : memref<5x5x128xf32, #tpu.memory_space<vmem>>, vector<1x1x128xf32>
    %c3_174 = arith.constant 3 : index
    %c4_175 = arith.constant 4 : index
    %c0_176 = arith.constant 0 : index
    %220 = vector.load %arg16[%c3_174, %c4_175, %c0_176] : memref<12x12x128xf32, #tpu.memory_space<vmem>>, vector<8x8x128xf32>
    %221 = vector.broadcast %219 : vector<1x1x128xf32> to vector<8x8x128xf32>
    %222 = arith.mulf %220, %221 : vector<8x8x128xf32>
    %223 = arith.addf %218, %222 : vector<8x8x128xf32>
    %c4_177 = arith.constant 4 : index
    %c0_178 = arith.constant 0 : index
    %c0_179 = arith.constant 0 : index
    %224 = vector.load %arg11[%c4_177, %c0_178, %c0_179] : memref<5x5x128xf32, #tpu.memory_space<vmem>>, vector<1x1x128xf32>
    %c4_180 = arith.constant 4 : index
    %c0_181 = arith.constant 0 : index
    %c0_182 = arith.constant 0 : index
    %225 = vector.load %arg16[%c4_180, %c0_181, %c0_182] : memref<12x12x128xf32, #tpu.memory_space<vmem>>, vector<8x8x128xf32>
    %226 = vector.broadcast %224 : vector<1x1x128xf32> to vector<8x8x128xf32>
    %227 = arith.mulf %225, %226 : vector<8x8x128xf32>
    %228 = arith.addf %223, %227 : vector<8x8x128xf32>
    %c4_183 = arith.constant 4 : index
    %c1_184 = arith.constant 1 : index
    %c0_185 = arith.constant 0 : index
    %229 = vector.load %arg11[%c4_183, %c1_184, %c0_185] : memref<5x5x128xf32, #tpu.memory_space<vmem>>, vector<1x1x128xf32>
    %c4_186 = arith.constant 4 : index
    %c1_187 = arith.constant 1 : index
    %c0_188 = arith.constant 0 : index
    %230 = vector.load %arg16[%c4_186, %c1_187, %c0_188] : memref<12x12x128xf32, #tpu.memory_space<vmem>>, vector<8x8x128xf32>
    %231 = vector.broadcast %229 : vector<1x1x128xf32> to vector<8x8x128xf32>
    %232 = arith.mulf %230, %231 : vector<8x8x128xf32>
    %233 = arith.addf %228, %232 : vector<8x8x128xf32>
    %c4_189 = arith.constant 4 : index
    %c2_190 = arith.constant 2 : index
    %c0_191 = arith.constant 0 : index
    %234 = vector.load %arg11[%c4_189, %c2_190, %c0_191] : memref<5x5x128xf32, #tpu.memory_space<vmem>>, vector<1x1x128xf32>
    %c4_192 = arith.constant 4 : index
    %c2_193 = arith.constant 2 : index
    %c0_194 = arith.constant 0 : index
    %235 = vector.load %arg16[%c4_192, %c2_193, %c0_194] : memref<12x12x128xf32, #tpu.memory_space<vmem>>, vector<8x8x128xf32>
    %236 = vector.broadcast %234 : vector<1x1x128xf32> to vector<8x8x128xf32>
    %237 = arith.mulf %235, %236 : vector<8x8x128xf32>
    %238 = arith.addf %233, %237 : vector<8x8x128xf32>
    %c4_195 = arith.constant 4 : index
    %c3_196 = arith.constant 3 : index
    %c0_197 = arith.constant 0 : index
    %239 = vector.load %arg11[%c4_195, %c3_196, %c0_197] : memref<5x5x128xf32, #tpu.memory_space<vmem>>, vector<1x1x128xf32>
    %c4_198 = arith.constant 4 : index
    %c3_199 = arith.constant 3 : index
    %c0_200 = arith.constant 0 : index
    %240 = vector.load %arg16[%c4_198, %c3_199, %c0_200] : memref<12x12x128xf32, #tpu.memory_space<vmem>>, vector<8x8x128xf32>
    %241 = vector.broadcast %239 : vector<1x1x128xf32> to vector<8x8x128xf32>
    %242 = arith.mulf %240, %241 : vector<8x8x128xf32>
    %243 = arith.addf %238, %242 : vector<8x8x128xf32>
    %c4_201 = arith.constant 4 : index
    %c4_202 = arith.constant 4 : index
    %c0_203 = arith.constant 0 : index
    %244 = vector.load %arg11[%c4_201, %c4_202, %c0_203] : memref<5x5x128xf32, #tpu.memory_space<vmem>>, vector<1x1x128xf32>
    %c4_204 = arith.constant 4 : index
    %c4_205 = arith.constant 4 : index
    %c0_206 = arith.constant 0 : index
    %245 = vector.load %arg16[%c4_204, %c4_205, %c0_206] : memref<12x12x128xf32, #tpu.memory_space<vmem>>, vector<8x8x128xf32>
    %246 = vector.broadcast %244 : vector<1x1x128xf32> to vector<8x8x128xf32>
    %247 = arith.mulf %245, %246 : vector<8x8x128xf32>
    %248 = arith.addf %243, %247 : vector<8x8x128xf32>
    %c0_207 = arith.constant 0 : index
    %c0_208 = arith.constant 0 : index
    %c0_209 = arith.constant 0 : index
    %249 = vector.load %arg12[%c0_207, %c0_208, %c0_209] : memref<1x1x128xf32, #tpu.memory_space<vmem>>, vector<1x1x128xf32>
    %250 = vector.broadcast %249 : vector<1x1x128xf32> to vector<8x8x128xf32>
    %251 = arith.addf %248, %250 : vector<8x8x128xf32>
    %252 = vector.shape_cast %251 : vector<8x8x128xf32> to vector<64x128xf32>
    %253 = arith.addf %118, %252 : vector<64x128xf32>
    %254 = arith.mulf %253, %8 : vector<64x128xf32>
    %c0_210 = arith.constant 0 : index
    %c0_211 = arith.constant 0 : index
    %255 = vector.load %arg13[%c0_210, %c0_211] : memref<128x128xf32, #tpu.memory_space<vmem>>, vector<128x128xf32>
    %cst_212 = arith.constant dense<0.000000e+00> : vector<64x128xf32>
    %256 = tpu.matmul %254, %255, %cst_212 {dimension_numbers = #tpu.dot_dimension_numbers<[1], [0], [0], [1], [0, 0, 1, 1], [], []>} : vector<64x128xf32>, vector<128x128xf32>, vector<64x128xf32> -> vector<64x128xf32>
    %c0_213 = arith.constant 0 : index
    %c0_214 = arith.constant 0 : index
    %257 = vector.load %arg14[%c0_213, %c0_214] : memref<1x128xf32, #tpu.memory_space<vmem>>, vector<1x128xf32>
    %258 = vector.broadcast %257 : vector<1x128xf32> to vector<64x128xf32>
    %259 = arith.addf %256, %258 : vector<64x128xf32>
    %c0_215 = arith.constant 0 : index
    %c0_216 = arith.constant 0 : index
    %c0_217 = arith.constant 0 : index
    %260 = vector.load %arg15[%c0_215, %c0_216, %c0_217] : memref<1x64x128xf32, #tpu.memory_space<vmem>>, vector<1x64x128xf32>
    %261 = vector.shape_cast %260 : vector<1x64x128xf32> to vector<64x128xf32>
    %262 = vector.shape_cast %259 : vector<64x128xf32> to vector<1x64x128xf32>
    tpu.vector_store %arg15[%c0_215, %c0_216, %c0_217], %262 {strides = array<i32>} : memref<1x64x128xf32, #tpu.memory_space<vmem>>, vector<1x64x128xf32>,
    return
  }
  func.func @transform_0(%arg0: i32) -> (i32, i32, i32) {
    %c0_i32 = arith.constant 0 : i32
    %c0_i32_0 = arith.constant 0 : i32
    %c0_i32_1 = arith.constant 0 : i32
    return %arg0, %c0_i32, %c0_i32_0 : i32, i32, i32
  }
  func.func @transform_1(%arg0: i32) -> (i32, i32) {
    %c0_i32 = arith.constant 0 : i32
    %c0_i32_0 = arith.constant 0 : i32
    %c0_i32_1 = arith.constant 0 : i32
    return %c0_i32, %c0_i32_0 : i32, i32
  }
  func.func @transform_2(%arg0: i32) -> (i32, i32) {
    %c0_i32 = arith.constant 0 : i32
    %c0_i32_0 = arith.constant 0 : i32
    %c0_i32_1 = arith.constant 0 : i32
    return %c0_i32, %c0_i32_0 : i32, i32
  }
  func.func @transform_3(%arg0: i32) -> (i32, i32) {
    %c0_i32 = arith.constant 0 : i32
    %c0_i32_0 = arith.constant 0 : i32
    %c0_i32_1 = arith.constant 0 : i32
    return %c0_i32, %c0_i32_0 : i32, i32
  }
  func.func @transform_4(%arg0: i32) -> (i32, i32) {
    %c0_i32 = arith.constant 0 : i32
    %c0_i32_0 = arith.constant 0 : i32
    %c0_i32_1 = arith.constant 0 : i32
    return %c0_i32, %c0_i32_0 : i32, i32
  }
  func.func @transform_5(%arg0: i32) -> (i32, i32) {
    %c0_i32 = arith.constant 0 : i32
    %c0_i32_0 = arith.constant 0 : i32
    %c0_i32_1 = arith.constant 0 : i32
    return %c0_i32, %c0_i32_0 : i32, i32
  }
  func.func @transform_6(%arg0: i32) -> (i32, i32) {
    %c0_i32 = arith.constant 0 : i32
    %c0_i32_0 = arith.constant 0 : i32
    %c0_i32_1 = arith.constant 0 : i32
    return %c0_i32, %c0_i32_0 : i32, i32
  }
  func.func @transform_7(%arg0: i32) -> (i32, i32) {
    %c0_i32 = arith.constant 0 : i32
    %c0_i32_0 = arith.constant 0 : i32
    %c0_i32_1 = arith.constant 0 : i32
    return %c0_i32, %c0_i32_0 : i32, i32
  }
  func.func @transform_8(%arg0: i32) -> (i32, i32) {
    %c0_i32 = arith.constant 0 : i32
    %c0_i32_0 = arith.constant 0 : i32
    %c0_i32_1 = arith.constant 0 : i32
    return %c0_i32, %c0_i32_0 : i32, i32
  }
  func.func @transform_9(%arg0: i32) -> (i32, i32) {
    %c0_i32 = arith.constant 0 : i32
    %c0_i32_0 = arith.constant 0 : i32
    %c0_i32_1 = arith.constant 0 : i32
    return %c0_i32, %c0_i32_0 : i32, i32
  }
  func.func @transform_10(%arg0: i32) -> (i32, i32, i32) {
    %c0_i32 = arith.constant 0 : i32
    %c0_i32_0 = arith.constant 0 : i32
    %c0_i32_1 = arith.constant 0 : i32
    %c0_i32_2 = arith.constant 0 : i32
    return %c0_i32, %c0_i32_0, %c0_i32_1 : i32, i32, i32
  }
  func.func @transform_11(%arg0: i32) -> (i32, i32, i32) {
    %c0_i32 = arith.constant 0 : i32
    %c0_i32_0 = arith.constant 0 : i32
    %c0_i32_1 = arith.constant 0 : i32
    %c0_i32_2 = arith.constant 0 : i32
    return %c0_i32, %c0_i32_0, %c0_i32_1 : i32, i32, i32
  }
  func.func @transform_12(%arg0: i32) -> (i32, i32) {
    %c0_i32 = arith.constant 0 : i32
    %c0_i32_0 = arith.constant 0 : i32
    %c0_i32_1 = arith.constant 0 : i32
    return %c0_i32, %c0_i32_0 : i32, i32
  }
  func.func @transform_13(%arg0: i32) -> (i32, i32) {
    %c0_i32 = arith.constant 0 : i32
    %c0_i32_0 = arith.constant 0 : i32
    %c0_i32_1 = arith.constant 0 : i32
    return %c0_i32, %c0_i32_0 : i32, i32
  }
  func.func @transform_14(%arg0: i32) -> (i32, i32, i32) {
    %c0_i32 = arith.constant 0 : i32
    %c0_i32_0 = arith.constant 0 : i32
    %c0_i32_1 = arith.constant 0 : i32
    return %arg0, %c0_i32, %c0_i32_0 : i32, i32, i32
  }
}

</mosaic_0001>

<llo_original>
// kernel: tpu_custom_call.1
$region0: #{tpu_custom_call.1}
  #allocation0 [shape = 'u32[]', space=smem, size = 0x4, offset = 0x4, fixed_abs, tag = 'smem constant byte address 0x4 - core index']
  #allocation1 [shape = 'u32[72,128]{1,0:T(1,128)}', space=vmem, size = 0x9000, scoped, tag = 'internal scratch']
  #allocation2 [shape = 'f32[12,12,128]{2,1,0:T(8,128)}', space=vmem, size = 0x18000, scoped, tag = 'scratch operand']
  %s0 = inlined_call_operand.hbm [shape: f32[2,64,128], index: 0, kind: input, shape index: {}]
  %s1 = inlined_call_operand.hbm [shape: f32[128,256], index: 1, kind: input, shape index: {}]
  %s2 = inlined_call_operand.hbm [shape: f32[1,256], index: 2, kind: input, shape index: {}]
  %s3 = inlined_call_operand.hbm [shape: f32[128,256], index: 3, kind: input, shape index: {}]
  %s4 = inlined_call_operand.vmem [shape: f32[1,256], index: 4, kind: input, shape index: {}]
  %s5 = inlined_call_operand.hbm [shape: f32[64,128], index: 5, kind: input, shape index: {}]
  %s6 = inlined_call_operand.vmem [shape: f32[1,128], index: 6, kind: input, shape index: {}]
  %s7 = inlined_call_operand.vmem [shape: f32[1,128], index: 7, kind: input, shape index: {}]
  %s8 = inlined_call_operand.hbm [shape: f32[128,128], index: 8, kind: input, shape index: {}]
  %s9 = inlined_call_operand.hbm [shape: f32[128,128], index: 9, kind: input, shape index: {}]
  %s10 = inlined_call_operand.hbm [shape: f32[5,5,128], index: 10, kind: input, shape index: {}]
  %s11 = inlined_call_operand.vmem [shape: f32[1,1,128], index: 11, kind: input, shape index: {}]
  %s12 = inlined_call_operand.hbm [shape: f32[128,128], index: 12, kind: input, shape index: {}]
  %s13 = inlined_call_operand.vmem [shape: f32[1,128], index: 13, kind: input, shape index: {}]
  %s14 = inlined_call_operand.hbm [shape: f32[2,64,128], index: 14, kind: output, shape index: {}]
  %s15 = sld [smem:[#allocation0]]
  $region125: #{tpu_custom_call.1} parent=0
    _
  %s17 = ssub.s32 1, %s15
  %s18 = scalar_select 0, %s17, %s15
  $region1: #{tpu_custom_call.1} parent=0
    #allocation3 [shape = 'u8[65536]{0}', space=vmem, size = 0x10000, scoped, tag = 'input window, operand 0']
    #allocation4 [shape = 's32[2]{0}', space=sflag, size = 0x8, scoped, tag = 'scoped memory for tpu_custom_call.1']
    #allocation5 [shape = 's32[2]{0}', space=sflag, size = 0x8, scoped, tag = 'scoped memory for tpu_custom_call.1']
    #allocation6 [shape = 'u8[131072]{0}', space=vmem, size = 0x20000, scoped, tag = 'input window, operand 1, single buffered']
    #allocation7 [shape = 's32[1]{0}', space=sflag, size = 0x4, scoped, tag = 'scoped memory for tpu_custom_call.1']
    #allocation8 [shape = 'u8[1024]{0}', space=vmem, size = 0x400, scoped, tag = 'input window, operand 2, single buffered']
    #allocation9 [shape = 'u8[131072]{0}', space=vmem, size = 0x20000, scoped, tag = 'input window, operand 3, single buffered']
    #allocation10 [shape = 's32[1]{0}', space=sflag, size = 0x4, scoped, tag = 'scoped memory for tpu_custom_call.1']
    #allocation11 [shape = 'u8[32768]{0}', space=vmem, size = 0x8000, scoped, tag = 'input window, operand 5, single buffered']
    #allocation12 [shape = 'u8[65536]{0}', space=vmem, size = 0x10000, scoped, tag = 'input window, operand 8, single buffered']
    #allocation13 [shape = 's32[1]{0}', space=sflag, size = 0x4, scoped, tag = 'scoped memory for tpu_custom_call.1']
    #allocation14 [shape = 'u8[65536]{0}', space=vmem, size = 0x10000, scoped, tag = 'input window, operand 9, single buffered']
    #allocation15 [shape = 'u8[20480]{0}', space=vmem, size = 0x5000, scoped, tag = 'input window, operand 10, single buffered']
    #allocation16 [shape = 's32[1]{0}', space=sflag, size = 0x4, scoped, tag = 'scoped memory for tpu_custom_call.1']
    #allocation17 [shape = 'u8[65536]{0}', space=vmem, size = 0x10000, scoped, tag = 'input window, operand 12, single buffered']
    #allocation18 [shape = 'u8[65536]{0}', space=vmem, size = 0x10000, scoped, tag = 'output window, operand 0']
    %19 = vsyncpa [#allocation4], 0
    %s20 = scalar_lea.sflag [#allocation4], 1
    %21 = vsyncpa %s20, 0
    %22 = vsyncpa [#allocation7], 0
    %23 = vsyncpa [#allocation10], 0
    %24 = vsyncpa [#allocation13], 0
    %25 = vsyncpa [#allocation16], 0
    %26 = vsyncpa [#allocation5], 0
    %s27 = scalar_lea.sflag [#allocation5], 1
    %28 = vsyncpa %s27, 0
    loop: start=0, step=1, limit=4
    $region2: #{tpu_custom_call.1} parent=1 // loop_pre_header
      _
    $region3: #{tpu_custom_call.1} parent=1 // loop_header
      %s30 = sphi 0, %s34
      %p31 = scmp.ge.s32.totalorder %s30, 4
      %s40 = sphi 0, %s42
      %s43 = sphi 0, %s40
      %s44 = sphi 0, %s43
      %s60 = sphi 0, %s44
      %s64 = sphi 0, %s64
      %s66 = sphi 0, %s64
      %s67 = sphi 0, %s66
      %s81 = sphi 0, %s67
      %s85 = sphi 0, %s85
      %s87 = sphi 0, %s85
      %s88 = sphi 0, %s87
      %s102 = sphi 0, %s88
      %s106 = sphi 0, %s106
      %s108 = sphi 0, %s106
      %s109 = sphi 0, %s108
      %s123 = sphi 0, %s109
      %s127 = sphi 0, %s127
      %s129 = sphi 0, %s127
      %s130 = sphi 0, %s129
      %s144 = sphi 0, %s130
      %s148 = sphi 0, %s148
      %s150 = sphi 0, %s148
      %s151 = sphi 0, %s150
      %s165 = sphi 0, %s151
      %s169 = sphi 0, %s169
      %s171 = sphi 0, %s169
      %s172 = sphi 0, %s171
      %s186 = sphi 0, %s172
      %s190 = sphi 0, %s190
      %s192 = sphi 0, %s190
      %s193 = sphi 0, %s192
      %s207 = sphi 0, %s193
      %s211 = sphi 0, %s211
      %s213 = sphi 0, %s211
      %s214 = sphi 0, %s213
      %s228 = sphi 0, %s214
      %s232 = sphi 0, %s232
      %s234 = sphi 0, %s232
      %s235 = sphi 0, %s234
      %s249 = sphi 0, %s235
      %s253 = sphi 0, %s253
      %s255 = sphi 0, %s253
      %s256 = sphi 0, %s255
      %s270 = sphi 0, %s256
      %s274 = sphi 0, %s274
      %s276 = sphi 0, %s274
      %s277 = sphi 0, %s276
      %s291 = sphi 0, %s277
      %s295 = sphi 0, %s295
      %s297 = sphi 0, %s295
      %s298 = sphi 0, %s297
      %s312 = sphi 0, %s298
      %s316 = sphi 0, %s316
      %s318 = sphi 0, %s316
      %s319 = sphi 0, %s318
      %s333 = sphi 0, %s319
      %s339 = sphi 0, %s341
      %s342 = sphi 0, %s339
      %s343 = sphi 0, %s342
      %s359 = sphi 0, %s343
    $region4: #{tpu_custom_call.1} parent=1 // loop_header_branch
      %33 = sbr.rel (%p31) target = $region8
    $region5: #{tpu_custom_call.1} parent=1 // loop_body
      %s35 = ssub.s32 %s30, 1
      %s36 = ssub.s32 %s30, 2
      %s37 = sadd.s32 %s30, 1
      %s38 = ssub.s32 %s30, %s37
      %p39 = scmp.eq.s32.totalorder %s38, 0
      %s41 = sadd.s32 %s40, 1
      %s42 = scalar_select %p39, %s40, %s41
      %p45 = pneg %p39
      %p46 = scmp.eq.s32.totalorder %s30, 1
      %p47 = por %p45, %p46
      %p48 = scmp.ne.s32.totalorder %s40, %s43
      %p49 = scmp.eq.s32.totalorder %s30, 0
      %p50 = por %p48, %p49
      %p51 = scmp.ne.s32.totalorder %s40, %s43
      %p52 = scmp.eq.s32.totalorder %s35, 1
      %p53 = por %p51, %p52
      %p54 = scmp.ne.s32.totalorder %s43, %s44
      %p55 = scmp.eq.s32.totalorder %s35, 0
      %p56 = por %p54, %p55
      %p57 = scmp.ne.s32.totalorder %s43, %s44
      %p58 = scmp.eq.s32.totalorder %s36, 1
      %p59 = por %p57, %p58
      %p61 = scmp.ne.s32.totalorder %s44, %s60
      %p62 = scmp.eq.s32.totalorder %s36, 0
      %p63 = por %p61, %p62
      %s65 = sadd.s32 %s64, 1
      %p68 = scmp.eq.s32.totalorder %s30, 1
      %p69 = scmp.ne.s32.totalorder %s64, %s66
      %p70 = scmp.eq.s32.totalorder %s30, 0
      %p71 = por %p69, %p70
      %p72 = scmp.ne.s32.totalorder %s64, %s66
      %p73 = scmp.eq.s32.totalorder %s35, 1
      %p74 = por %p72, %p73
      %p75 = scmp.ne.s32.totalorder %s66, %s67
      %p76 = scmp.eq.s32.totalorder %s35, 0
      %p77 = por %p75, %p76
      %p78 = scmp.ne.s32.totalorder %s66, %s67
      %p79 = scmp.eq.s32.totalorder %s36, 1
      %p80 = por %p78, %p79
      %p82 = scmp.ne.s32.totalorder %s67, %s81
      %p83 = scmp.eq.s32.totalorder %s36, 0
      %p84 = por %p82, %p83
      %s86 = sadd.s32 %s85, 1
      %p89 = scmp.eq.s32.totalorder %s30, 1
      %p90 = scmp.ne.s32.totalorder %s85, %s87
      %p91 = scmp.eq.s32.totalorder %s30, 0
      %p92 = por %p90, %p91
      %p93 = scmp.ne.s32.totalorder %s85, %s87
      %p94 = scmp.eq.s32.totalorder %s35, 1
      %p95 = por %p93, %p94
      %p96 = scmp.ne.s32.totalorder %s87, %s88
      %p97 = scmp.eq.s32.totalorder %s35, 0
      %p98 = por %p96, %p97
      %p99 = scmp.ne.s32.totalorder %s87, %s88
      %p100 = scmp.eq.s32.totalorder %s36, 1
      %p101 = por %p99, %p100
      %p103 = scmp.ne.s32.totalorder %s88, %s102
      %p104 = scmp.eq.s32.totalorder %s36, 0
      %p105 = por %p103, %p104
      %s107 = sadd.s32 %s106, 1
      %p110 = scmp.eq.s32.totalorder %s30, 1
      %p111 = scmp.ne.s32.totalorder %s106, %s108
      %p112 = scmp.eq.s32.totalorder %s30, 0
      %p113 = por %p111, %p112
      %p114 = scmp.ne.s32.totalorder %s106, %s108
      %p115 = scmp.eq.s32.totalorder %s35, 1
      %p116 = por %p114, %p115
      %p117 = scmp.ne.s32.totalorder %s108, %s109
      %p118 = scmp.eq.s32.totalorder %s35, 0
      %p119 = por %p117, %p118
      %p120 = scmp.ne.s32.totalorder %s108, %s109
      %p121 = scmp.eq.s32.totalorder %s36, 1
      %p122 = por %p120, %p121
      %p124 = scmp.ne.s32.totalorder %s109, %s123
      %p125 = scmp.eq.s32.totalorder %s36, 0
      %p126 = por %p124, %p125
      %s128 = sadd.s32 %s127, 1
      %p131 = scmp.eq.s32.totalorder %s30, 1
      %p132 = scmp.ne.s32.totalorder %s127, %s129
      %p133 = scmp.eq.s32.totalorder %s30, 0
      %p134 = por %p132, %p133
      %p135 = scmp.ne.s32.totalorder %s127, %s129
      %p136 = scmp.eq.s32.totalorder %s35, 1
      %p137 = por %p135, %p136
      %p138 = scmp.ne.s32.totalorder %s129, %s130
      %p139 = scmp.eq.s32.totalorder %s35, 0
      %p140 = por %p138, %p139
      %p141 = scmp.ne.s32.totalorder %s129, %s130
      %p142 = scmp.eq.s32.totalorder %s36, 1
      %p143 = por %p141, %p142
      %p145 = scmp.ne.s32.totalorder %s130, %s144
      %p146 = scmp.eq.s32.totalorder %s36, 0
      %p147 = por %p145, %p146
      %s149 = sadd.s32 %s148, 1
      %p152 = scmp.eq.s32.totalorder %s30, 1
      %p153 = scmp.ne.s32.totalorder %s148, %s150
      %p154 = scmp.eq.s32.totalorder %s30, 0
      %p155 = por %p153, %p154
      %p156 = scmp.ne.s32.totalorder %s148, %s150
      %p157 = scmp.eq.s32.totalorder %s35, 1
      %p158 = por %p156, %p157
      %p159 = scmp.ne.s32.totalorder %s150, %s151
      %p160 = scmp.eq.s32.totalorder %s35, 0
      %p161 = por %p159, %p160
      %p162 = scmp.ne.s32.totalorder %s150, %s151
      %p163 = scmp.eq.s32.totalorder %s36, 1
      %p164 = por %p162, %p163
      %p166 = scmp.ne.s32.totalorder %s151, %s165
      %p167 = scmp.eq.s32.totalorder %s36, 0
      %p168 = por %p166, %p167
      %s170 = sadd.s32 %s169, 1
      %p173 = scmp.eq.s32.totalorder %s30, 1
      %p174 = scmp.ne.s32.totalorder %s169, %s171
      %p175 = scmp.eq.s32.totalorder %s30, 0
      %p176 = por %p174, %p175
      %p177 = scmp.ne.s32.totalorder %s169, %s171
      %p178 = scmp.eq.s32.totalorder %s35, 1
      %p179 = por %p177, %p178
      %p180 = scmp.ne.s32.totalorder %s171, %s172
      %p181 = scmp.eq.s32.totalorder %s35, 0
      %p182 = por %p180, %p181
      %p183 = scmp.ne.s32.totalorder %s171, %s172
      %p184 = scmp.eq.s32.totalorder %s36, 1
      %p185 = por %p183, %p184
      %p187 = scmp.ne.s32.totalorder %s172, %s186
      %p188 = scmp.eq.s32.totalorder %s36, 0
      %p189 = por %p187, %p188
      %s191 = sadd.s32 %s190, 1
      %p194 = scmp.eq.s32.totalorder %s30, 1
      %p195 = scmp.ne.s32.totalorder %s190, %s192
      %p196 = scmp.eq.s32.totalorder %s30, 0
      %p197 = por %p195, %p196
      %p198 = scmp.ne.s32.totalorder %s190, %s192
      %p199 = scmp.eq.s32.totalorder %s35, 1
      %p200 = por %p198, %p199
      %p201 = scmp.ne.s32.totalorder %s192, %s193
      %p202 = scmp.eq.s32.totalorder %s35, 0
      %p203 = por %p201, %p202
      %p204 = scmp.ne.s32.totalorder %s192, %s193
      %p205 = scmp.eq.s32.totalorder %s36, 1
      %p206 = por %p204, %p205
      %p208 = scmp.ne.s32.totalorder %s193, %s207
      %p209 = scmp.eq.s32.totalorder %s36, 0
      %p210 = por %p208, %p209
      %s212 = sadd.s32 %s211, 1
      %p215 = scmp.eq.s32.totalorder %s30, 1
      %p216 = scmp.ne.s32.totalorder %s211, %s213
      %p217 = scmp.eq.s32.totalorder %s30, 0
      %p218 = por %p216, %p217
      %p219 = scmp.ne.s32.totalorder %s211, %s213
      %p220 = scmp.eq.s32.totalorder %s35, 1
      %p221 = por %p219, %p220
      %p222 = scmp.ne.s32.totalorder %s213, %s214
      %p223 = scmp.eq.s32.totalorder %s35, 0
      %p224 = por %p222, %p223
      %p225 = scmp.ne.s32.totalorder %s213, %s214
      %p226 = scmp.eq.s32.totalorder %s36, 1
      %p227 = por %p225, %p226
      %p229 = scmp.ne.s32.totalorder %s214, %s228
      %p230 = scmp.eq.s32.totalorder %s36, 0
      %p231 = por %p229, %p230
      %s233 = sadd.s32 %s232, 1
      %p236 = scmp.eq.s32.totalorder %s30, 1
      %p237 = scmp.ne.s32.totalorder %s232, %s234
      %p238 = scmp.eq.s32.totalorder %s30, 0
      %p239 = por %p237, %p238
      %p240 = scmp.ne.s32.totalorder %s232, %s234
      %p241 = scmp.eq.s32.totalorder %s35, 1
      %p242 = por %p240, %p241
      %p243 = scmp.ne.s32.totalorder %s234, %s235
      %p244 = scmp.eq.s32.totalorder %s35, 0
      %p245 = por %p243, %p244
      %p246 = scmp.ne.s32.totalorder %s234, %s235
      %p247 = scmp.eq.s32.totalorder %s36, 1
      %p248 = por %p246, %p247
      %p250 = scmp.ne.s32.totalorder %s235, %s249
      %p251 = scmp.eq.s32.totalorder %s36, 0
      %p252 = por %p250, %p251
      %s254 = sadd.s32 %s253, 1
      %p257 = scmp.eq.s32.totalorder %s30, 1
      %p258 = scmp.ne.s32.totalorder %s253, %s255
      %p259 = scmp.eq.s32.totalorder %s30, 0
      %p260 = por %p258, %p259
      %p261 = scmp.ne.s32.totalorder %s253, %s255
      %p262 = scmp.eq.s32.totalorder %s35, 1
      %p263 = por %p261, %p262
      %p264 = scmp.ne.s32.totalorder %s255, %s256
      %p265 = scmp.eq.s32.totalorder %s35, 0
      %p266 = por %p264, %p265
      %p267 = scmp.ne.s32.totalorder %s255, %s256
      %p268 = scmp.eq.s32.totalorder %s36, 1
      %p269 = por %p267, %p268
      %p271 = scmp.ne.s32.totalorder %s256, %s270
      %p272 = scmp.eq.s32.totalorder %s36, 0
      %p273 = por %p271, %p272
      %s275 = sadd.s32 %s274, 1
      %p278 = scmp.eq.s32.totalorder %s30, 1
      %p279 = scmp.ne.s32.totalorder %s274, %s276
      %p280 = scmp.eq.s32.totalorder %s30, 0
      %p281 = por %p279, %p280
      %p282 = scmp.ne.s32.totalorder %s274, %s276
      %p283 = scmp.eq.s32.totalorder %s35, 1
      %p284 = por %p282, %p283
      %p285 = scmp.ne.s32.totalorder %s276, %s277
      %p286 = scmp.eq.s32.totalorder %s35, 0
      %p287 = por %p285, %p286
      %p288 = scmp.ne.s32.totalorder %s276, %s277
      %p289 = scmp.eq.s32.totalorder %s36, 1
      %p290 = por %p288, %p289
      %p292 = scmp.ne.s32.totalorder %s277, %s291
      %p293 = scmp.eq.s32.totalorder %s36, 0
      %p294 = por %p292, %p293
      %s296 = sadd.s32 %s295, 1
      %p299 = scmp.eq.s32.totalorder %s30, 1
      %p300 = scmp.ne.s32.totalorder %s295, %s297
      %p301 = scmp.eq.s32.totalorder %s30, 0
      %p302 = por %p300, %p301
      %p303 = scmp.ne.s32.totalorder %s295, %s297
      %p304 = scmp.eq.s32.totalorder %s35, 1
      %p305 = por %p303, %p304
      %p306 = scmp.ne.s32.totalorder %s297, %s298
      %p307 = scmp.eq.s32.totalorder %s35, 0
      %p308 = por %p306, %p307
      %p309 = scmp.ne.s32.totalorder %s297, %s298
      %p310 = scmp.eq.s32.totalorder %s36, 1
      %p311 = por %p309, %p310
      %p313 = scmp.ne.s32.totalorder %s298, %s312
      %p314 = scmp.eq.s32.totalorder %s36, 0
      %p315 = por %p313, %p314
      %s317 = sadd.s32 %s316, 1
      %p320 = scmp.eq.s32.totalorder %s30, 1
      %p321 = scmp.ne.s32.totalorder %s316, %s318
      %p322 = scmp.eq.s32.totalorder %s30, 0
      %p323 = por %p321, %p322
      %p324 = scmp.ne.s32.totalorder %s316, %s318
      %p325 = scmp.eq.s32.totalorder %s35, 1
      %p326 = por %p324, %p325
      %p327 = scmp.ne.s32.totalorder %s318, %s319
      %p328 = scmp.eq.s32.totalorder %s35, 0
      %p329 = por %p327, %p328
      %p330 = scmp.ne.s32.totalorder %s318, %s319
      %p331 = scmp.eq.s32.totalorder %s36, 1
      %p332 = por %p330, %p331
      %p334 = scmp.ne.s32.totalorder %s319, %s333
      %p335 = scmp.eq.s32.totalorder %s36, 0
      %p336 = por %p334, %p335
      %s337 = ssub.s32 %s30, %s37
      %p338 = scmp.eq.s32.totalorder %s337, 0
      %s340 = sadd.s32 %s339, 1
      %s341 = scalar_select %p338, %s339, %s340
      %p344 = pneg %p338
      %p345 = scmp.eq.s32.totalorder %s30, 1
      %p346 = por %p344, %p345
      %p347 = scmp.ne.s32.totalorder %s339, %s342
      %p348 = scmp.eq.s32.totalorder %s30, 0
      %p349 = por %p347, %p348
      %p350 = scmp.ne.s32.totalorder %s339, %s342
      %p351 = scmp.eq.s32.totalorder %s35, 1
      %p352 = por %p350, %p351
      %p353 = scmp.ne.s32.totalorder %s342, %s343
      %p354 = scmp.eq.s32.totalorder %s35, 0
      %p355 = por %p353, %p354
      %p356 = scmp.ne.s32.totalorder %s342, %s343
      %p357 = scmp.eq.s32.totalorder %s36, 1
      %p358 = por %p356, %p357
      %p360 = scmp.ne.s32.totalorder %s343, %s359
      %p361 = scmp.eq.s32.totalorder %s36, 0
      %p362 = por %p360, %p361
      %p363 = scmp.le.s32.totalorder 1, %s30
      %p364 = scmp.lt.s32.totalorder %s30, 3
      %p365 = pnand %p363, %p364
      %p366 = pneg %p365
      // Predicated region
      $region9: #{tpu_custom_call.1} parent=5 // pred_check
        _
      $region10: #{tpu_custom_call.1} parent=5 // pred_check_branch
        %368 = sbr.rel (%p365) target = $region12
      $region11: #{tpu_custom_call.1} parent=5 // pred_region
        %s369 = ssub.s32 %s30, 1
        // Predicated region
        $region13: #{tpu_custom_call.1} parent=11 // pred_check
          %p370 = pneg %p77
        $region14: #{tpu_custom_call.1} parent=11 // pred_check_branch
          %372 = sbr.rel (%p370) target = $region16
        $region15: #{tpu_custom_call.1} parent=11 // pred_region
          %374 = vsyncadd [#allocation7], 0
          %s375 = sshll.u32 %s1, 4
          %s376 = int_to_ptr.hbm [resolvable:$true] %s375
          %s377 = sshll.u32 [#allocation6], 4
          %s378 = int_to_ptr.vmem [resolvable:$true] %s377
          %383 = dma.hbm_to_vmem [thread:$0]  %s376, 4096, %s378, [#allocation7], 256, 256, 16
        $region16: #{tpu_custom_call.1} parent=11 // pred_fallthru
          _
        // Predicated region
        $region17: #{tpu_custom_call.1} parent=11 // pred_check
          %p384 = pneg %p98
        $region18: #{tpu_custom_call.1} parent=11 // pred_check_branch
          %386 = sbr.rel (%p384) target = $region20
        $region19: #{tpu_custom_call.1} parent=11 // pred_region
          %388 = vsyncadd [#allocation7], 0
          %s390 = sshll.u32 %s2, 4
          %s391 = int_to_ptr.hbm [resolvable:$true] %s390
          %s392 = sshll.u32 [#allocation8], 4
          %s393 = int_to_ptr.vmem [resolvable:$true] %s392
          %395 = dma.hbm_to_vmem [thread:$0]  %s391, 32, %s393, [#allocation7]
        $region20: #{tpu_custom_call.1} parent=11 // pred_fallthru
          _
        // Predicated region
        $region21: #{tpu_custom_call.1} parent=11 // pred_check
          %p396 = pneg %p119
        $region22: #{tpu_custom_call.1} parent=11 // pred_check_branch
          %398 = sbr.rel (%p396) target = $region24
        $region23: #{tpu_custom_call.1} parent=11 // pred_region
          %400 = vsyncadd [#allocation10], 0
          %s401 = sshll.u32 %s3, 4
          %s402 = int_to_ptr.hbm [resolvable:$true] %s401
          %s403 = sshll.u32 [#allocation9], 4
          %s404 = int_to_ptr.vmem [resolvable:$true] %s403
          %409 = dma.hbm_to_vmem [thread:$0]  %s402, 4096, %s404, [#allocation10], 256, 256, 16
        $region24: #{tpu_custom_call.1} parent=11 // pred_fallthru
          _
        // Predicated region
        $region25: #{tpu_custom_call.1} parent=11 // pred_check
          %p410 = pneg %p140
        $region26: #{tpu_custom_call.1} parent=11 // pred_check_branch
          %412 = sbr.rel (%p410) target = $region28
        $region27: #{tpu_custom_call.1} parent=11 // pred_region
          _
        $region28: #{tpu_custom_call.1} parent=11 // pred_fallthru
          _
        // Predicated region
        $region29: #{tpu_custom_call.1} parent=11 // pred_check
          %p413 = pneg %p161
        $region30: #{tpu_custom_call.1} parent=11 // pred_check_branch
          %415 = sbr.rel (%p413) target = $region32
        $region31: #{tpu_custom_call.1} parent=11 // pred_region
          %417 = vsyncadd [#allocation10], 0
          %s418 = sshll.u32 %s5, 4
          %s419 = int_to_ptr.hbm [resolvable:$true] %s418
          %s420 = sshll.u32 [#allocation11], 4
          %s421 = int_to_ptr.vmem [resolvable:$true] %s420
          %426 = dma.hbm_to_vmem [thread:$0]  %s419, 1024, %s421, [#allocation10], 128, 128, 8
        $region32: #{tpu_custom_call.1} parent=11 // pred_fallthru
          _
        // Predicated region
        $region33: #{tpu_custom_call.1} parent=11 // pred_check
          %p427 = pneg %p182
        $region34: #{tpu_custom_call.1} parent=11 // pred_check_branch
          %429 = sbr.rel (%p427) target = $region36
        $region35: #{tpu_custom_call.1} parent=11 // pred_region
          _
        $region36: #{tpu_custom_call.1} parent=11 // pred_fallthru
          _
        // Predicated region
        $region37: #{tpu_custom_call.1} parent=11 // pred_check
          %p430 = pneg %p203
        $region38: #{tpu_custom_call.1} parent=11 // pred_check_branch
          %432 = sbr.rel (%p430) target = $region40
        $region39: #{tpu_custom_call.1} parent=11 // pred_region
          _
        $region40: #{tpu_custom_call.1} parent=11 // pred_fallthru
          _
        // Predicated region
        $region41: #{tpu_custom_call.1} parent=11 // pred_check
          %p433 = pneg %p224
        $region42: #{tpu_custom_call.1} parent=11 // pred_check_branch
          %435 = sbr.rel (%p433) target = $region44
        $region43: #{tpu_custom_call.1} parent=11 // pred_region
          %437 = vsyncadd [#allocation13], 0
          %s438 = sshll.u32 %s8, 4
          %s439 = int_to_ptr.hbm [resolvable:$true] %s438
          %s440 = sshll.u32 [#allocation12], 4
          %s441 = int_to_ptr.vmem [resolvable:$true] %s440
          %446 = dma.hbm_to_vmem [thread:$0]  %s439, 2048, %s441, [#allocation13], 128, 128, 8
        $region44: #{tpu_custom_call.1} parent=11 // pred_fallthru
          _
        // Predicated region
        $region45: #{tpu_custom_call.1} parent=11 // pred_check
          %p447 = pneg %p245
        $region46: #{tpu_custom_call.1} parent=11 // pred_check_branch
          %449 = sbr.rel (%p447) target = $region48
        $region47: #{tpu_custom_call.1} parent=11 // pred_region
          %451 = vsyncadd [#allocation13], 0
          %s452 = sshll.u32 %s9, 4
          %s453 = int_to_ptr.hbm [resolvable:$true] %s452
          %s454 = sshll.u32 [#allocation14], 4
          %s455 = int_to_ptr.vmem [resolvable:$true] %s454
          %460 = dma.hbm_to_vmem [thread:$0]  %s453, 2048, %s455, [#allocation13], 128, 128, 8
        $region48: #{tpu_custom_call.1} parent=11 // pred_fallthru
          _
        // Predicated region
        $region49: #{tpu_custom_call.1} parent=11 // pred_check
          %p461 = pneg %p266
        $region50: #{tpu_custom_call.1} parent=11 // pred_check_branch
          %463 = sbr.rel (%p461) target = $region52
        $region51: #{tpu_custom_call.1} parent=11 // pred_region
          %465 = vsyncadd [#allocation16], 0
          %s466 = sshll.u32 %s10, 4
          %s467 = int_to_ptr.hbm [resolvable:$true] %s466
          %s468 = sshll.u32 [#allocation15], 4
          %s469 = int_to_ptr.vmem [resolvable:$true] %s468
          %474 = dma.hbm_to_vmem [thread:$0]  %s467, 640, %s469, [#allocation16], 128, 128, 8
        $region52: #{tpu_custom_call.1} parent=11 // pred_fallthru
          _
        // Predicated region
        $region53: #{tpu_custom_call.1} parent=11 // pred_check
          %p475 = pneg %p287
        $region54: #{tpu_custom_call.1} parent=11 // pred_check_branch
          %477 = sbr.rel (%p475) target = $region56
        $region55: #{tpu_custom_call.1} parent=11 // pred_region
          _
        $region56: #{tpu_custom_call.1} parent=11 // pred_fallthru
          _
        // Predicated region
        $region57: #{tpu_custom_call.1} parent=11 // pred_check
          %p478 = pneg %p308
        $region58: #{tpu_custom_call.1} parent=11 // pred_check_branch
          %480 = sbr.rel (%p478) target = $region60
        $region59: #{tpu_custom_call.1} parent=11 // pred_region
          %482 = vsyncadd [#allocation16], 0
          %s483 = sshll.u32 %s12, 4
          %s484 = int_to_ptr.hbm [resolvable:$true] %s483
          %s485 = sshll.u32 [#allocation17], 4
          %s486 = int_to_ptr.vmem [resolvable:$true] %s485
          %491 = dma.hbm_to_vmem [thread:$0]  %s484, 2048, %s486, [#allocation16], 128, 128, 8
        $region60: #{tpu_custom_call.1} parent=11 // pred_fallthru
          _
        // Predicated region
        $region61: #{tpu_custom_call.1} parent=11 // pred_check
          %p492 = pneg %p329
        $region62: #{tpu_custom_call.1} parent=11 // pred_check_branch
          %494 = sbr.rel (%p492) target = $region64
        $region63: #{tpu_custom_call.1} parent=11 // pred_region
          _
        $region64: #{tpu_custom_call.1} parent=11 // pred_fallthru
          _
      $region12: #{tpu_custom_call.1} parent=5 // pred_fallthru
        _
      %p495 = scmp.lt.s32.totalorder %s30, 2
      // Predicated region
      $region65: #{tpu_custom_call.1} parent=5 // pred_check
        %p496 = pneg %p495
      $region66: #{tpu_custom_call.1} parent=5 // pred_check_branch
        %498 = sbr.rel (%p496) target = $region68
      $region67: #{tpu_custom_call.1} parent=5 // pred_region
        // Predicated region
        $region69: #{tpu_custom_call.1} parent=67 // pred_check
          %p499 = pneg %p50
        $region70: #{tpu_custom_call.1} parent=67 // pred_check_branch
          %501 = sbr.rel (%p499) target = $region72
        $region71: #{tpu_custom_call.1} parent=67 // pred_region
          %s502 = sand.u32 %s40, 1
          %s503 = scalar_lea.sflag [#allocation4], %s502
          %s504 = sand.u32 %s40, 1
          %s505 = smul.addr %s504, 64
          %s506 = scalar_lea.vmem [#allocation3], %s505
          %508 = vsyncadd %s503, 0
          %s509 = smul.addr %s30, 8
          %s510 = smul.addr %s509, 8
          %s511 = scalar_lea.hbm %s0, %s510
          %s512 = sshll.u32 %s511, 4
          %s513 = int_to_ptr.hbm [resolvable:$true] %s512
          %s514 = sshll.u32 %s506, 4
          %s515 = int_to_ptr.vmem [resolvable:$true] %s514
          %520 = dma.hbm_to_vmem [thread:$0]  %s513, 1024, %s515, %s503, 128, 128, 8
        $region72: #{tpu_custom_call.1} parent=67 // pred_fallthru
          _
      $region68: #{tpu_custom_call.1} parent=5 // pred_fallthru
        _
      %p521 = scmp.le.s32.totalorder 1, %s30
      %p522 = scmp.lt.s32.totalorder %s30, 3
      %p523 = pnand %p521, %p522
      %p524 = pneg %p523
      // Predicated region
      $region73: #{tpu_custom_call.1} parent=5 // pred_check
        _
      $region74: #{tpu_custom_call.1} parent=5 // pred_check_branch
        %526 = sbr.rel (%p523) target = $region76
      $region75: #{tpu_custom_call.1} parent=5 // pred_region
        %s527 = ssub.s32 %s30, 1
        %s528 = sand.u32 %s43, 1
        %s529 = scalar_lea.sflag [#allocation4], %s528
        %s530 = sand.u32 %s43, 1
        %s531 = smul.addr %s530, 64
        %s532 = scalar_lea.vmem [#allocation3], %s531
        // Predicated region
        $region77: #{tpu_custom_call.1} parent=75 // pred_check
          %p533 = pneg %p56
        $region78: #{tpu_custom_call.1} parent=75 // pred_check_branch
          %535 = sbr.rel (%p533) target = $region80
        $region79: #{tpu_custom_call.1} parent=75 // pred_region
          %537 = dma.done %s529, 1024
        $region80: #{tpu_custom_call.1} parent=75 // pred_fallthru
          _
        // Predicated region
        $region81: #{tpu_custom_call.1} parent=75 // pred_check
          %p538 = pneg %p77
        $region82: #{tpu_custom_call.1} parent=75 // pred_check_branch
          %540 = sbr.rel (%p538) target = $region84
        $region83: #{tpu_custom_call.1} parent=75 // pred_region
          %542 = dma.done [#allocation7], 4096
        $region84: #{tpu_custom_call.1} parent=75 // pred_fallthru
          _
        // Predicated region
        $region85: #{tpu_custom_call.1} parent=75 // pred_check
          %p543 = pneg %p98
        $region86: #{tpu_custom_call.1} parent=75 // pred_check_branch
          %545 = sbr.rel (%p543) target = $region88
        $region87: #{tpu_custom_call.1} parent=75 // pred_region
          %547 = dma.done [#allocation7], 32
        $region88: #{tpu_custom_call.1} parent=75 // pred_fallthru
          _
        // Predicated region
        $region89: #{tpu_custom_call.1} parent=75 // pred_check
          %p548 = pneg %p119
        $region90: #{tpu_custom_call.1} parent=75 // pred_check_branch
          %550 = sbr.rel (%p548) target = $region92
        $region91: #{tpu_custom_call.1} parent=75 // pred_region
          %552 = dma.done [#allocation10], 4096
        $region92: #{tpu_custom_call.1} parent=75 // pred_fallthru
          _
        // Predicated region
        $region93: #{tpu_custom_call.1} parent=75 // pred_check
          %p553 = pneg %p161
        $region94: #{tpu_custom_call.1} parent=75 // pred_check_branch
          %555 = sbr.rel (%p553) target = $region96
        $region95: #{tpu_custom_call.1} parent=75 // pred_region
          %557 = dma.done [#allocation10], 1024
        $region96: #{tpu_custom_call.1} parent=75 // pred_fallthru
          _
        // Predicated region
        $region97: #{tpu_custom_call.1} parent=75 // pred_check
          %p558 = pneg %p224
        $region98: #{tpu_custom_call.1} parent=75 // pred_check_branch
          %560 = sbr.rel (%p558) target = $region100
        $region99: #{tpu_custom_call.1} parent=75 // pred_region
          %562 = dma.done [#allocation13], 2048
        $region100: #{tpu_custom_call.1} parent=75 // pred_fallthru
          _
        // Predicated region
        $region101: #{tpu_custom_call.1} parent=75 // pred_check
          %p563 = pneg %p245
        $region102: #{tpu_custom_call.1} parent=75 // pred_check_branch
          %565 = sbr.rel (%p563) target = $region104
        $region103: #{tpu_custom_call.1} parent=75 // pred_region
          %567 = dma.done [#allocation13], 2048
        $region104: #{tpu_custom_call.1} parent=75 // pred_fallthru
          _
        // Predicated region
        $region105: #{tpu_custom_call.1} parent=75 // pred_check
          %p568 = pneg %p266
        $region106: #{tpu_custom_call.1} parent=75 // pred_check_branch
          %570 = sbr.rel (%p568) target = $region108
        $region107: #{tpu_custom_call.1} parent=75 // pred_region
          %572 = dma.done [#allocation16], 640
        $region108: #{tpu_custom_call.1} parent=75 // pred_fallthru
          _
        // Predicated region
        $region109: #{tpu_custom_call.1} parent=75 // pred_check
          %p573 = pneg %p308
        $region110: #{tpu_custom_call.1} parent=75 // pred_check_branch
          %575 = sbr.rel (%p573) target = $region112
        $region111: #{tpu_custom_call.1} parent=75 // pred_region
          %577 = dma.done [#allocation16], 2048
        $region112: #{tpu_custom_call.1} parent=75 // pred_fallthru
          _
        %s578 = sand.u32 %s43, 1
        %s579 = scalar_lea.sflag [#allocation4], %s578
        %s580 = sand.u32 %s43, 1
        %s581 = smul.addr %s580, 64
        %s582 = scalar_lea.vmem [#allocation3], %s581
        %p583 = pneg %p56
        %p584 = pneg %p53
        %p585 = pneg %p77
        %p586 = pneg %p74
        %p587 = pneg %p98
        %p588 = pneg %p95
        %p589 = pneg %p119
        %p590 = pneg %p116
        %p591 = pneg %p140
        %p592 = pneg %p137
        %p593 = pneg %p161
        %p594 = pneg %p158
        %p595 = pneg %p182
        %p596 = pneg %p179
        %p597 = pneg %p203
        %p598 = pneg %p200
        %p599 = pneg %p224
        %p600 = pneg %p221
        %p601 = pneg %p245
        %p602 = pneg %p242
        %p603 = pneg %p266
        %p604 = pneg %p263
        %p605 = pneg %p287
        %p606 = pneg %p284
        %p607 = pneg %p308
        %p608 = pneg %p305
        %p609 = pneg %p329
        %p610 = pneg %p326
        %p611 = pneg %p355
        %p612 = pneg %p352
        %s613 = sand.u32 %s342, 1
        %s614 = scalar_lea.sflag [#allocation5], %s613
        %s615 = sand.u32 %s342, 1
        %s616 = smul.addr %s615, 64
        %s617 = scalar_lea.vmem [#allocation18], %s616
        %v618 = vld [vmem:[%s532] sm:$0xff]
        %v619 = vld [vmem:[%s532 + $0x8] sm:$0xff]
        %v620 = vld [vmem:[%s532 + $0x10] sm:$0xff]
        %v621 = vld [vmem:[%s532 + $0x18] sm:$0xff]
        %v622 = vld [vmem:[%s532 + $0x20] sm:$0xff]
        %v623 = vld [vmem:[%s532 + $0x28] sm:$0xff]
        %v624 = vld [vmem:[%s532 + $0x30] sm:$0xff]
        %v625 = vld [vmem:[%s532 + $0x38] sm:$0xff]
        %v626 = vld [vmem:[#allocation6] sm:$0xff]
        %v627 = vld [vmem:[#allocation6 + $0x8] sm:$0xff]
        %v628 = vld [vmem:[#allocation6 + $0x10] sm:$0xff]
        %v629 = vld [vmem:[#allocation6 + $0x18] sm:$0xff]
        %v630 = vld [vmem:[#allocation6 + $0x20] sm:$0xff]
        %v631 = vld [vmem:[#allocation6 + $0x28] sm:$0xff]
        %v632 = vld [vmem:[#allocation6 + $0x30] sm:$0xff]
        %v633 = vld [vmem:[#allocation6 + $0x38] sm:$0xff]
        %v634 = vld [vmem:[#allocation6 + $0x40] sm:$0xff]
        %v635 = vld [vmem:[#allocation6 + $0x48] sm:$0xff]
        %v636 = vld [vmem:[#allocation6 + $0x50] sm:$0xff]
        %v637 = vld [vmem:[#allocation6 + $0x58] sm:$0xff]
        %v638 = vld [vmem:[#allocation6 + $0x60] sm:$0xff]
        %v639 = vld [vmem:[#allocation6 + $0x68] sm:$0xff]
        %v640 = vld [vmem:[#allocation6 + $0x70] sm:$0xff]
        %v641 = vld [vmem:[#allocation6 + $0x78] sm:$0xff]
        %v642 = vld [vmem:[#allocation6 + $0x80] sm:$0xff]
        %v643 = vld [vmem:[#allocation6 + $0x88] sm:$0xff]
        %v644 = vld [vmem:[#allocation6 + $0x90] sm:$0xff]
        %v645 = vld [vmem:[#allocation6 + $0x98] sm:$0xff]
        %v646 = vld [vmem:[#allocation6 + $0xa0] sm:$0xff]
        %v647 = vld [vmem:[#allocation6 + $0xa8] sm:$0xff]
        %v648 = vld [vmem:[#allocation6 + $0xb0] sm:$0xff]
        %v649 = vld [vmem:[#allocation6 + $0xb8] sm:$0xff]
        %v650 = vld [vmem:[#allocation6 + $0xc0] sm:$0xff]
        %v651 = vld [vmem:[#allocation6 + $0xc8] sm:$0xff]
        %v652 = vld [vmem:[#allocation6 + $0xd0] sm:$0xff]
        %v653 = vld [vmem:[#allocation6 + $0xd8] sm:$0xff]
        %v654 = vld [vmem:[#allocation6 + $0xe0] sm:$0xff]
        %v655 = vld [vmem:[#allocation6 + $0xe8] sm:$0xff]
        %v656 = vld [vmem:[#allocation6 + $0xf0] sm:$0xff]
        %v657 = vld [vmem:[#allocation6 + $0xf8] sm:$0xff]
        %v658 = vld [vmem:[#allocation8] sm:$0x3]
        %v660 = vperm.slane %v658, 0
        %v661 = vperm.slane %v658, 1
        %664 = vmatpush.msra.mxu0 %v656
        %665 = vmatpush.msra.mxu0 %v654
        %666 = vmatpush.msra.mxu0 %v652
        %667 = vmatpush.msra.mxu0 %v650
        %668 = vmatpush.msra.mxu0 %v648
        %669 = vmatpush.msra.mxu0 %v646
        %670 = vmatpush.msra.mxu0 %v644
        %671 = vmatpush.msra.mxu0 %v642
        %672 = vmatpush.msra.mxu0 %v640
        %673 = vmatpush.msra.mxu0 %v638
        %674 = vmatpush.msra.mxu0 %v636
        %675 = vmatpush.msra.mxu0 %v634
        %676 = vmatpush.msra.mxu0 %v632
        %677 = vmatpush.msra.mxu0 %v630
        %678 = vmatpush.msra.mxu0 %v628
        %679 = vmatpush.msra.mxu0 %v626
        %680 = vmatmul.f32.gmra.mxu0 %v618
        %v681 = vpop.f32.mrf.mxu0
        %v682 = vadd.f32 %v660, %v681
        %683 = vmatmul.f32.gmra.mxu0 %v619
        %v684 = vpop.f32.mrf.mxu0
        %v685 = vadd.f32 %v660, %v684
        %686 = vmatmul.f32.gmra.mxu0 %v620
        %v687 = vpop.f32.mrf.mxu0
        %v688 = vadd.f32 %v660, %v687
        %689 = vmatmul.f32.gmra.mxu0 %v621
        %v690 = vpop.f32.mrf.mxu0
        %v691 = vadd.f32 %v660, %v690
        %692 = vmatmul.f32.gmra.mxu0 %v622
        %v693 = vpop.f32.mrf.mxu0
        %v694 = vadd.f32 %v660, %v693
        %695 = vmatmul.f32.gmra.mxu0 %v623
        %v696 = vpop.f32.mrf.mxu0
        %v697 = vadd.f32 %v660, %v696
        %698 = vmatmul.f32.gmra.mxu0 %v624
        %v699 = vpop.f32.mrf.mxu0
        %v700 = vadd.f32 %v660, %v699
        %701 = vmatmul.f32.gmra.mxu0 %v625
        %v702 = vpop.f32.mrf.mxu0
        %v703 = vadd.f32 %v660, %v702
        %704 = vdwg.mxu0
        %705 = vmatpush.msra.mxu0 %v657
        %706 = vmatpush.msra.mxu0 %v655
        %707 = vmatpush.msra.mxu0 %v653
        %708 = vmatpush.msra.mxu0 %v651
        %709 = vmatpush.msra.mxu0 %v649
        %710 = vmatpush.msra.mxu0 %v647
        %711 = vmatpush.msra.mxu0 %v645
        %712 = vmatpush.msra.mxu0 %v643
        %713 = vmatpush.msra.mxu0 %v641
        %714 = vmatpush.msra.mxu0 %v639
        %715 = vmatpush.msra.mxu0 %v637
        %716 = vmatpush.msra.mxu0 %v635
        %717 = vmatpush.msra.mxu0 %v633
        %718 = vmatpush.msra.mxu0 %v631
        %719 = vmatpush.msra.mxu0 %v629
        %720 = vmatpush.msra.mxu0 %v627
        %721 = vmatmul.f32.gmra.mxu0 %v618
        %v722 = vpop.f32.mrf.mxu0
        %v723 = vadd.f32 %v661, %v722
        %724 = vmatmul.f32.gmra.mxu0 %v619
        %v725 = vpop.f32.mrf.mxu0
        %v726 = vadd.f32 %v661, %v725
        %727 = vmatmul.f32.gmra.mxu0 %v620
        %v728 = vpop.f32.mrf.mxu0
        %v729 = vadd.f32 %v661, %v728
        %730 = vmatmul.f32.gmra.mxu0 %v621
        %v731 = vpop.f32.mrf.mxu0
        %v732 = vadd.f32 %v661, %v731
        %733 = vmatmul.f32.gmra.mxu0 %v622
        %v734 = vpop.f32.mrf.mxu0
        %v735 = vadd.f32 %v661, %v734
        %736 = vmatmul.f32.gmra.mxu0 %v623
        %v737 = vpop.f32.mrf.mxu0
        %v738 = vadd.f32 %v661, %v737
        %739 = vmatmul.f32.gmra.mxu0 %v624
        %v740 = vpop.f32.mrf.mxu0
        %v741 = vadd.f32 %v661, %v740
        %742 = vmatmul.f32.gmra.mxu0 %v625
        %v743 = vpop.f32.mrf.mxu0
        %v744 = vadd.f32 %v661, %v743
        %745 = vdwg.mxu0
        %v746 = vld [vmem:[#allocation9] sm:$0xff]
        %v747 = vld [vmem:[#allocation9 + $0x8] sm:$0xff]
        %v748 = vld [vmem:[#allocation9 + $0x10] sm:$0xff]
        %v749 = vld [vmem:[#allocation9 + $0x18] sm:$0xff]
        %v750 = vld [vmem:[#allocation9 + $0x20] sm:$0xff]
        %v751 = vld [vmem:[#allocation9 + $0x28] sm:$0xff]
        %v752 = vld [vmem:[#allocation9 + $0x30] sm:$0xff]
        %v753 = vld [vmem:[#allocation9 + $0x38] sm:$0xff]
        %v754 = vld [vmem:[#allocation9 + $0x40] sm:$0xff]
        %v755 = vld [vmem:[#allocation9 + $0x48] sm:$0xff]
        %v756 = vld [vmem:[#allocation9 + $0x50] sm:$0xff]
        %v757 = vld [vmem:[#allocation9 + $0x58] sm:$0xff]
        %v758 = vld [vmem:[#allocation9 + $0x60] sm:$0xff]
        %v759 = vld [vmem:[#allocation9 + $0x68] sm:$0xff]
        %v760 = vld [vmem:[#allocation9 + $0x70] sm:$0xff]
        %v761 = vld [vmem:[#allocation9 + $0x78] sm:$0xff]
        %v762 = vld [vmem:[#allocation9 + $0x80] sm:$0xff]
        %v763 = vld [vmem:[#allocation9 + $0x88] sm:$0xff]
        %v764 = vld [vmem:[#allocation9 + $0x90] sm:$0xff]
        %v765 = vld [vmem:[#allocation9 + $0x98] sm:$0xff]
        %v766 = vld [vmem:[#allocation9 + $0xa0] sm:$0xff]
        %v767 = vld [vmem:[#allocation9 + $0xa8] sm:$0xff]
        %v768 = vld [vmem:[#allocation9 + $0xb0] sm:$0xff]
        %v769 = vld [vmem:[#allocation9 + $0xb8] sm:$0xff]
        %v770 = vld [vmem:[#allocation9 + $0xc0] sm:$0xff]
        %v771 = vld [vmem:[#allocation9 + $0xc8] sm:$0xff]
        %v772 = vld [vmem:[#allocation9 + $0xd0] sm:$0xff]
        %v773 = vld [vmem:[#allocation9 + $0xd8] sm:$0xff]
        %v774 = vld [vmem:[#allocation9 + $0xe0] sm:$0xff]
        %v775 = vld [vmem:[#allocation9 + $0xe8] sm:$0xff]
        %v776 = vld [vmem:[#allocation9 + $0xf0] sm:$0xff]
        %v777 = vld [vmem:[#allocation9 + $0xf8] sm:$0xff]
        %v778 = vld [vmem:[%s4] sm:$0x3]
        %v780 = vperm.slane %v778, 0
        %v781 = vperm.slane %v778, 1
        %784 = vmatpush.msra.mxu0 %v776
        %785 = vmatpush.msra.mxu0 %v774
        %786 = vmatpush.msra.mxu0 %v772
        %787 = vmatpush.msra.mxu0 %v770
        %788 = vmatpush.msra.mxu0 %v768
        %789 = vmatpush.msra.mxu0 %v766
        %790 = vmatpush.msra.mxu0 %v764
        %791 = vmatpush.msra.mxu0 %v762
        %792 = vmatpush.msra.mxu0 %v760
        %793 = vmatpush.msra.mxu0 %v758
        %794 = vmatpush.msra.mxu0 %v756
        %795 = vmatpush.msra.mxu0 %v754
        %796 = vmatpush.msra.mxu0 %v752
        %797 = vmatpush.msra.mxu0 %v750
        %798 = vmatpush.msra.mxu0 %v748
        %799 = vmatpush.msra.mxu0 %v746
        %800 = vmatmul.f32.gmra.mxu0 %v618
        %v801 = vpop.f32.mrf.mxu0
        %v802 = vadd.f32 %v780, %v801
        %803 = vmatmul.f32.gmra.mxu0 %v619
        %v804 = vpop.f32.mrf.mxu0
        %v805 = vadd.f32 %v780, %v804
        %806 = vmatmul.f32.gmra.mxu0 %v620
        %v807 = vpop.f32.mrf.mxu0
        %v808 = vadd.f32 %v780, %v807
        %809 = vmatmul.f32.gmra.mxu0 %v621
        %v810 = vpop.f32.mrf.mxu0
        %v811 = vadd.f32 %v780, %v810
        %812 = vmatmul.f32.gmra.mxu0 %v622
        %v813 = vpop.f32.mrf.mxu0
        %v814 = vadd.f32 %v780, %v813
        %815 = vmatmul.f32.gmra.mxu0 %v623
        %v816 = vpop.f32.mrf.mxu0
        %v817 = vadd.f32 %v780, %v816
        %818 = vmatmul.f32.gmra.mxu0 %v624
        %v819 = vpop.f32.mrf.mxu0
        %v820 = vadd.f32 %v780, %v819
        %821 = vmatmul.f32.gmra.mxu0 %v625
        %v822 = vpop.f32.mrf.mxu0
        %v823 = vadd.f32 %v780, %v822
        %824 = vdwg.mxu0
        %825 = vmatpush.msra.mxu0 %v777
        %826 = vmatpush.msra.mxu0 %v775
        %827 = vmatpush.msra.mxu0 %v773
        %828 = vmatpush.msra.mxu0 %v771
        %829 = vmatpush.msra.mxu0 %v769
        %830 = vmatpush.msra.mxu0 %v767
        %831 = vmatpush.msra.mxu0 %v765
        %832 = vmatpush.msra.mxu0 %v763
        %833 = vmatpush.msra.mxu0 %v761
        %834 = vmatpush.msra.mxu0 %v759
        %835 = vmatpush.msra.mxu0 %v757
        %836 = vmatpush.msra.mxu0 %v755
        %837 = vmatpush.msra.mxu0 %v753
        %838 = vmatpush.msra.mxu0 %v751
        %839 = vmatpush.msra.mxu0 %v749
        %840 = vmatpush.msra.mxu0 %v747
        %841 = vmatmul.f32.gmra.mxu0 %v618
        %v842 = vpop.f32.mrf.mxu0
        %v843 = vadd.f32 %v781, %v842
        %844 = vmatmul.f32.gmra.mxu0 %v619
        %v845 = vpop.f32.mrf.mxu0
        %v846 = vadd.f32 %v781, %v845
        %847 = vmatmul.f32.gmra.mxu0 %v620
        %v848 = vpop.f32.mrf.mxu0
        %v849 = vadd.f32 %v781, %v848
        %850 = vmatmul.f32.gmra.mxu0 %v621
        %v851 = vpop.f32.mrf.mxu0
        %v852 = vadd.f32 %v781, %v851
        %853 = vmatmul.f32.gmra.mxu0 %v622
        %v854 = vpop.f32.mrf.mxu0
        %v855 = vadd.f32 %v781, %v854
        %856 = vmatmul.f32.gmra.mxu0 %v623
        %v857 = vpop.f32.mrf.mxu0
        %v858 = vadd.f32 %v781, %v857
        %859 = vmatmul.f32.gmra.mxu0 %v624
        %v860 = vpop.f32.mrf.mxu0
        %v861 = vadd.f32 %v781, %v860
        %862 = vmatmul.f32.gmra.mxu0 %v625
        %v863 = vpop.f32.mrf.mxu0
        %v864 = vadd.f32 %v781, %v863
        %865 = vdwg.mxu0
        %v866 = vld [vmem:[%s6] sm:$0x1]
        %v867 = vld [vmem:[%s7] sm:$0x1]
        %v869 = vperm.slane %v866, 0
        %v871 = vmul.f32 %v682, %v869
        %v872 = vmul.f32 %v685, %v869
        %v873 = vmul.f32 %v688, %v869
        %v874 = vmul.f32 %v691, %v869
        %v875 = vmul.f32 %v694, %v869
        %v876 = vmul.f32 %v697, %v869
        %v877 = vmul.f32 %v700, %v869
        %v878 = vmul.f32 %v703, %v869
        %v879 = vld [vmem:[#allocation11] sm:$0xff]
        %v880 = vld [vmem:[#allocation11 + $0x8] sm:$0xff]
        %v881 = vld [vmem:[#allocation11 + $0x10] sm:$0xff]
        %v882 = vld [vmem:[#allocation11 + $0x18] sm:$0xff]
        %v883 = vld [vmem:[#allocation11 + $0x20] sm:$0xff]
        %v884 = vld [vmem:[#allocation11 + $0x28] sm:$0xff]
        %v885 = vld [vmem:[#allocation11 + $0x30] sm:$0xff]
        %v886 = vld [vmem:[#allocation11 + $0x38] sm:$0xff]
        %v887 = vadd.f32 %v802, %v879
        %v888 = vadd.f32 %v805, %v880
        %v889 = vadd.f32 %v808, %v881
        %v890 = vadd.f32 %v811, %v882
        %v891 = vadd.f32 %v814, %v883
        %v892 = vadd.f32 %v817, %v884
        %v893 = vadd.f32 %v820, %v885
        %v894 = vadd.f32 %v823, %v886
        %v895 = vmul.f32 %v887, %v869
        %v896 = vmul.f32 %v888, %v869
        %v897 = vmul.f32 %v889, %v869
        %v898 = vmul.f32 %v890, %v869
        %v899 = vmul.f32 %v891, %v869
        %v900 = vmul.f32 %v892, %v869
        %v901 = vmul.f32 %v893, %v869
        %v902 = vmul.f32 %v894, %v869
        %v903 = vmax.f32 %v871, 0.0
        %v904 = vmax.f32 %v872, 0.0
        %v905 = vmax.f32 %v873, 0.0
        %v906 = vmax.f32 %v874, 0.0
        %v907 = vmax.f32 %v875, 0.0
        %v908 = vmax.f32 %v876, 0.0
        %v909 = vmax.f32 %v877, 0.0
        %v910 = vmax.f32 %v878, 0.0
        %vm911 = vcmp.gt.f32.partialorder %v903, 0.0
        %vm912 = vcmp.gt.f32.partialorder %v904, 0.0
        %vm913 = vcmp.gt.f32.partialorder %v905, 0.0
        %vm914 = vcmp.gt.f32.partialorder %v906, 0.0
        %vm915 = vcmp.gt.f32.partialorder %v907, 0.0
        %vm916 = vcmp.gt.f32.partialorder %v908, 0.0
        %vm917 = vcmp.gt.f32.partialorder %v909, 0.0
        %vm918 = vcmp.gt.f32.partialorder %v910, 0.0
        %v919 = vsel %vm911, %v903, 1.0
        %v920 = vsel %vm912, %v904, 1.0
        %v921 = vsel %vm913, %v905, 1.0
        %v922 = vsel %vm914, %v906, 1.0
        %v923 = vsel %vm915, %v907, 1.0
        %v924 = vsel %vm916, %v908, 1.0
        %v925 = vsel %vm917, %v909, 1.0
        %v926 = vsel %vm918, %v910, 1.0
        %v927 = vlog2.pop %v919
        %v928 = vmul.f32 %v927, 0.6931472
        %v929 = vlog2.pop %v920
        %v930 = vmul.f32 %v929, 0.6931472
        %v931 = vlog2.pop %v921
        %v932 = vmul.f32 %v931, 0.6931472
        %v933 = vlog2.pop %v922
        %v934 = vmul.f32 %v933, 0.6931472
        %v935 = vlog2.pop %v923
        %v936 = vmul.f32 %v935, 0.6931472
        %v937 = vlog2.pop %v924
        %v938 = vmul.f32 %v937, 0.6931472
        %v939 = vlog2.pop %v925
        %v940 = vmul.f32 %v939, 0.6931472
        %v941 = vlog2.pop %v926
        %v942 = vmul.f32 %v941, 0.6931472
        %v944 = vperm.slane %v867, 0
        %v946 = vmul.f32 %v944, %v928
        %v947 = vmul.f32 %v944, %v930
        %v948 = vmul.f32 %v944, %v932
        %v949 = vmul.f32 %v944, %v934
        %v950 = vmul.f32 %v944, %v936
        %v951 = vmul.f32 %v944, %v938
        %v952 = vmul.f32 %v944, %v940
        %v953 = vmul.f32 %v944, %v942
        %v954 = vmul.f32 %v946, 1.442695
        %v955 = vpow.pop %v954
        %v956 = vmul.f32 %v947, 1.442695
        %v957 = vpow.pop %v956
        %v958 = vmul.f32 %v948, 1.442695
        %v959 = vpow.pop %v958
        %v960 = vmul.f32 %v949, 1.442695
        %v961 = vpow.pop %v960
        %v962 = vmul.f32 %v950, 1.442695
        %v963 = vpow.pop %v962
        %v964 = vmul.f32 %v951, 1.442695
        %v965 = vpow.pop %v964
        %v966 = vmul.f32 %v952, 1.442695
        %v967 = vpow.pop %v966
        %v968 = vmul.f32 %v953, 1.442695
        %v969 = vpow.pop %v968
        %v970 = vsel %vm911, %v955, 0.0
        %v971 = vsel %vm912, %v957, 0.0
        %v972 = vsel %vm913, %v959, 0.0
        %v973 = vsel %vm914, %v961, 0.0
        %v974 = vsel %vm915, %v963, 0.0
        %v975 = vsel %vm916, %v965, 0.0
        %v976 = vsel %vm917, %v967, 0.0
        %v977 = vsel %vm918, %v969, 0.0
        %v978 = vsub.f32 0.0, %v871
        %v979 = vsub.f32 0.0, %v872
        %v980 = vsub.f32 0.0, %v873
        %v981 = vsub.f32 0.0, %v874
        %v982 = vsub.f32 0.0, %v875
        %v983 = vsub.f32 0.0, %v876
        %v984 = vsub.f32 0.0, %v877
        %v985 = vsub.f32 0.0, %v878
        %v986 = vmax.f32 %v978, 0.0
        %v987 = vmax.f32 %v979, 0.0
        %v988 = vmax.f32 %v980, 0.0
        %v989 = vmax.f32 %v981, 0.0
        %v990 = vmax.f32 %v982, 0.0
        %v991 = vmax.f32 %v983, 0.0
        %v992 = vmax.f32 %v984, 0.0
        %v993 = vmax.f32 %v985, 0.0
        %vm994 = vcmp.gt.f32.partialorder %v986, 0.0
        %vm995 = vcmp.gt.f32.partialorder %v987, 0.0
        %vm996 = vcmp.gt.f32.partialorder %v988, 0.0
        %vm997 = vcmp.gt.f32.partialorder %v989, 0.0
        %vm998 = vcmp.gt.f32.partialorder %v990, 0.0
        %vm999 = vcmp.gt.f32.partialorder %v991, 0.0
        %vm1000 = vcmp.gt.f32.partialorder %v992, 0.0
        %vm1001 = vcmp.gt.f32.partialorder %v993, 0.0
        %v1002 = vsel %vm994, %v986, 1.0
        %v1003 = vsel %vm995, %v987, 1.0
        %v1004 = vsel %vm996, %v988, 1.0
        %v1005 = vsel %vm997, %v989, 1.0
        %v1006 = vsel %vm998, %v990, 1.0
        %v1007 = vsel %vm999, %v991, 1.0
        %v1008 = vsel %vm1000, %v992, 1.0
        %v1009 = vsel %vm1001, %v993, 1.0
        %v1010 = vlog2.pop %v1002
        %v1011 = vmul.f32 %v1010, 0.6931472
        %v1012 = vlog2.pop %v1003
        %v1013 = vmul.f32 %v1012, 0.6931472
        %v1014 = vlog2.pop %v1004
        %v1015 = vmul.f32 %v1014, 0.6931472
        %v1016 = vlog2.pop %v1005
        %v1017 = vmul.f32 %v1016, 0.6931472
        %v1018 = vlog2.pop %v1006
        %v1019 = vmul.f32 %v1018, 0.6931472
        %v1020 = vlog2.pop %v1007
        %v1021 = vmul.f32 %v1020, 0.6931472
        %v1022 = vlog2.pop %v1008
        %v1023 = vmul.f32 %v1022, 0.6931472
        %v1024 = vlog2.pop %v1009
        %v1025 = vmul.f32 %v1024, 0.6931472
        %v1026 = vmul.f32 %v944, %v1011
        %v1027 = vmul.f32 %v944, %v1013
        %v1028 = vmul.f32 %v944, %v1015
        %v1029 = vmul.f32 %v944, %v1017
        %v1030 = vmul.f32 %v944, %v1019
        %v1031 = vmul.f32 %v944, %v1021
        %v1032 = vmul.f32 %v944, %v1023
        %v1033 = vmul.f32 %v944, %v1025
        %v1034 = vmul.f32 %v1026, 1.442695
        %v1035 = vpow.pop %v1034
        %v1036 = vmul.f32 %v1027, 1.442695
        %v1037 = vpow.pop %v1036
        %v1038 = vmul.f32 %v1028, 1.442695
        %v1039 = vpow.pop %v1038
        %v1040 = vmul.f32 %v1029, 1.442695
        %v1041 = vpow.pop %v1040
        %v1042 = vmul.f32 %v1030, 1.442695
        %v1043 = vpow.pop %v1042
        %v1044 = vmul.f32 %v1031, 1.442695
        %v1045 = vpow.pop %v1044
        %v1046 = vmul.f32 %v1032, 1.442695
        %v1047 = vpow.pop %v1046
        %v1048 = vmul.f32 %v1033, 1.442695
        %v1049 = vpow.pop %v1048
        %v1050 = vsel %vm994, %v1035, 0.0
        %v1051 = vsel %vm995, %v1037, 0.0
        %v1052 = vsel %vm996, %v1039, 0.0
        %v1053 = vsel %vm997, %v1041, 0.0
        %v1054 = vsel %vm998, %v1043, 0.0
        %v1055 = vsel %vm999, %v1045, 0.0
        %v1056 = vsel %vm1000, %v1047, 0.0
        %v1057 = vsel %vm1001, %v1049, 0.0
        %v1058 = vmax.f32 %v895, 0.0
        %v1059 = vmax.f32 %v896, 0.0
        %v1060 = vmax.f32 %v897, 0.0
        %v1061 = vmax.f32 %v898, 0.0
        %v1062 = vmax.f32 %v899, 0.0
        %v1063 = vmax.f32 %v900, 0.0
        %v1064 = vmax.f32 %v901, 0.0
        %v1065 = vmax.f32 %v902, 0.0
        %vm1066 = vcmp.gt.f32.partialorder %v1058, 0.0
        %vm1067 = vcmp.gt.f32.partialorder %v1059, 0.0
        %vm1068 = vcmp.gt.f32.partialorder %v1060, 0.0
        %vm1069 = vcmp.gt.f32.partialorder %v1061, 0.0
        %vm1070 = vcmp.gt.f32.partialorder %v1062, 0.0
        %vm1071 = vcmp.gt.f32.partialorder %v1063, 0.0
        %vm1072 = vcmp.gt.f32.partialorder %v1064, 0.0
        %vm1073 = vcmp.gt.f32.partialorder %v1065, 0.0
        %v1074 = vsel %vm1066, %v1058, 1.0
        %v1075 = vsel %vm1067, %v1059, 1.0
        %v1076 = vsel %vm1068, %v1060, 1.0
        %v1077 = vsel %vm1069, %v1061, 1.0
        %v1078 = vsel %vm1070, %v1062, 1.0
        %v1079 = vsel %vm1071, %v1063, 1.0
        %v1080 = vsel %vm1072, %v1064, 1.0
        %v1081 = vsel %vm1073, %v1065, 1.0
        %v1082 = vlog2.pop %v1074
        %v1083 = vmul.f32 %v1082, 0.6931472
        %v1084 = vlog2.pop %v1075
        %v1085 = vmul.f32 %v1084, 0.6931472
        %v1086 = vlog2.pop %v1076
        %v1087 = vmul.f32 %v1086, 0.6931472
        %v1088 = vlog2.pop %v1077
        %v1089 = vmul.f32 %v1088, 0.6931472
        %v1090 = vlog2.pop %v1078
        %v1091 = vmul.f32 %v1090, 0.6931472
        %v1092 = vlog2.pop %v1079
        %v1093 = vmul.f32 %v1092, 0.6931472
        %v1094 = vlog2.pop %v1080
        %v1095 = vmul.f32 %v1094, 0.6931472
        %v1096 = vlog2.pop %v1081
        %v1097 = vmul.f32 %v1096, 0.6931472
        %v1098 = vmul.f32 %v944, %v1083
        %v1099 = vmul.f32 %v944, %v1085
        %v1100 = vmul.f32 %v944, %v1087
        %v1101 = vmul.f32 %v944, %v1089
        %v1102 = vmul.f32 %v944, %v1091
        %v1103 = vmul.f32 %v944, %v1093
        %v1104 = vmul.f32 %v944, %v1095
        %v1105 = vmul.f32 %v944, %v1097
        %v1106 = vmul.f32 %v1098, 1.442695
        %v1107 = vpow.pop %v1106
        %v1108 = vmul.f32 %v1099, 1.442695
        %v1109 = vpow.pop %v1108
        %v1110 = vmul.f32 %v1100, 1.442695
        %v1111 = vpow.pop %v1110
        %v1112 = vmul.f32 %v1101, 1.442695
        %v1113 = vpow.pop %v1112
        %v1114 = vmul.f32 %v1102, 1.442695
        %v1115 = vpow.pop %v1114
        %v1116 = vmul.f32 %v1103, 1.442695
        %v1117 = vpow.pop %v1116
        %v1118 = vmul.f32 %v1104, 1.442695
        %v1119 = vpow.pop %v1118
        %v1120 = vmul.f32 %v1105, 1.442695
        %v1121 = vpow.pop %v1120
        %v1122 = vsel %vm1066, %v1107, 0.0
        %v1123 = vsel %vm1067, %v1109, 0.0
        %v1124 = vsel %vm1068, %v1111, 0.0
        %v1125 = vsel %vm1069, %v1113, 0.0
        %v1126 = vsel %vm1070, %v1115, 0.0
        %v1127 = vsel %vm1071, %v1117, 0.0
        %v1128 = vsel %vm1072, %v1119, 0.0
        %v1129 = vsel %vm1073, %v1121, 0.0
        %v1130 = vsub.f32 0.0, %v895
        %v1131 = vsub.f32 0.0, %v896
        %v1132 = vsub.f32 0.0, %v897
        %v1133 = vsub.f32 0.0, %v898
        %v1134 = vsub.f32 0.0, %v899
        %v1135 = vsub.f32 0.0, %v900
        %v1136 = vsub.f32 0.0, %v901
        %v1137 = vsub.f32 0.0, %v902
        %v1138 = vmax.f32 %v1130, 0.0
        %v1139 = vmax.f32 %v1131, 0.0
        %v1140 = vmax.f32 %v1132, 0.0
        %v1141 = vmax.f32 %v1133, 0.0
        %v1142 = vmax.f32 %v1134, 0.0
        %v1143 = vmax.f32 %v1135, 0.0
        %v1144 = vmax.f32 %v1136, 0.0
        %v1145 = vmax.f32 %v1137, 0.0
        %vm1146 = vcmp.gt.f32.partialorder %v1138, 0.0
        %vm1147 = vcmp.gt.f32.partialorder %v1139, 0.0
        %vm1148 = vcmp.gt.f32.partialorder %v1140, 0.0
        %vm1149 = vcmp.gt.f32.partialorder %v1141, 0.0
        %vm1150 = vcmp.gt.f32.partialorder %v1142, 0.0
        %vm1151 = vcmp.gt.f32.partialorder %v1143, 0.0
        %vm1152 = vcmp.gt.f32.partialorder %v1144, 0.0
        %vm1153 = vcmp.gt.f32.partialorder %v1145, 0.0
        %v1154 = vsel %vm1146, %v1138, 1.0
        %v1155 = vsel %vm1147, %v1139, 1.0
        %v1156 = vsel %vm1148, %v1140, 1.0
        %v1157 = vsel %vm1149, %v1141, 1.0
        %v1158 = vsel %vm1150, %v1142, 1.0
        %v1159 = vsel %vm1151, %v1143, 1.0
        %v1160 = vsel %vm1152, %v1144, 1.0
        %v1161 = vsel %vm1153, %v1145, 1.0
        %v1162 = vlog2.pop %v1154
        %v1163 = vmul.f32 %v1162, 0.6931472
        %v1164 = vlog2.pop %v1155
        %v1165 = vmul.f32 %v1164, 0.6931472
        %v1166 = vlog2.pop %v1156
        %v1167 = vmul.f32 %v1166, 0.6931472
        %v1168 = vlog2.pop %v1157
        %v1169 = vmul.f32 %v1168, 0.6931472
        %v1170 = vlog2.pop %v1158
        %v1171 = vmul.f32 %v1170, 0.6931472
        %v1172 = vlog2.pop %v1159
        %v1173 = vmul.f32 %v1172, 0.6931472
        %v1174 = vlog2.pop %v1160
        %v1175 = vmul.f32 %v1174, 0.6931472
        %v1176 = vlog2.pop %v1161
        %v1177 = vmul.f32 %v1176, 0.6931472
        %v1178 = vmul.f32 %v944, %v1163
        %v1179 = vmul.f32 %v944, %v1165
        %v1180 = vmul.f32 %v944, %v1167
        %v1181 = vmul.f32 %v944, %v1169
        %v1182 = vmul.f32 %v944, %v1171
        %v1183 = vmul.f32 %v944, %v1173
        %v1184 = vmul.f32 %v944, %v1175
        %v1185 = vmul.f32 %v944, %v1177
        %v1186 = vmul.f32 %v1178, 1.442695
        %v1187 = vpow.pop %v1186
        %v1188 = vmul.f32 %v1179, 1.442695
        %v1189 = vpow.pop %v1188
        %v1190 = vmul.f32 %v1180, 1.442695
        %v1191 = vpow.pop %v1190
        %v1192 = vmul.f32 %v1181, 1.442695
        %v1193 = vpow.pop %v1192
        %v1194 = vmul.f32 %v1182, 1.442695
        %v1195 = vpow.pop %v1194
        %v1196 = vmul.f32 %v1183, 1.442695
        %v1197 = vpow.pop %v1196
        %v1198 = vmul.f32 %v1184, 1.442695
        %v1199 = vpow.pop %v1198
        %v1200 = vmul.f32 %v1185, 1.442695
        %v1201 = vpow.pop %v1200
        %v1202 = vsel %vm1146, %v1187, 0.0
        %v1203 = vsel %vm1147, %v1189, 0.0
        %v1204 = vsel %vm1148, %v1191, 0.0
        %v1205 = vsel %vm1149, %v1193, 0.0
        %v1206 = vsel %vm1150, %v1195, 0.0
        %v1207 = vsel %vm1151, %v1197, 0.0
        %v1208 = vsel %vm1152, %v1199, 0.0
        %v1209 = vsel %vm1153, %v1201, 0.0
        %v1210 = vadd.f32 %v1122, %v1123
        %v1211 = vadd.f32 %v1210, %v1124
        %v1212 = vadd.f32 %v1211, %v1125
        %v1213 = vadd.f32 %v1212, %v1126
        %v1214 = vadd.f32 %v1213, %v1127
        %v1215 = vadd.f32 %v1214, %v1128
        %v1216 = vadd.f32 %v1215, %v1129
        %v1217 = vrot.slane %v1216, 4
        %v1218 = vadd.f32 %v1216, %v1217
        %v1219 = vrot.slane %v1218, 2
        %v1220 = vadd.f32 %v1218, %v1219
        %v1221 = vrot.slane %v1220, 1
        %v1222 = vadd.f32 %v1220, %v1221
        %v1223 = vrcp.pop 64.0
        %v1224 = vmul.f32 64.0, %v1223
        %v1225 = vsub.f32 1.0, %v1224
        %v1226 = vmul.f32 %v1223, %v1225
        %v1227 = vadd.f32 %v1223, %v1226
        %vm1228 = vweird.f32 %v1223
        %v1229 = vsel %vm1228, %v1223, %v1227
        %v1230 = vmul.f32 %v1222, %v1229
        %v1231 = vadd.f32 %v1202, %v1203
        %v1232 = vadd.f32 %v1231, %v1204
        %v1233 = vadd.f32 %v1232, %v1205
        %v1234 = vadd.f32 %v1233, %v1206
        %v1235 = vadd.f32 %v1234, %v1207
        %v1236 = vadd.f32 %v1235, %v1208
        %v1237 = vadd.f32 %v1236, %v1209
        %v1238 = vrot.slane %v1237, 4
        %v1239 = vadd.f32 %v1237, %v1238
        %v1240 = vrot.slane %v1239, 2
        %v1241 = vadd.f32 %v1239, %v1240
        %v1242 = vrot.slane %v1241, 1
        %v1243 = vadd.f32 %v1241, %v1242
        %v1244 = vmul.f32 %v1243, %v1229
        %v1245 = vmul.f32 %v843, 0.125
        %v1246 = vmul.f32 %v846, 0.125
        %v1247 = vmul.f32 %v849, 0.125
        %v1248 = vmul.f32 %v852, 0.125
        %v1249 = vmul.f32 %v855, 0.125
        %v1250 = vmul.f32 %v858, 0.125
        %v1251 = vmul.f32 %v861, 0.125
        %v1252 = vmul.f32 %v864, 0.125
        %v1253 = vmul.f32 %v1122, 0.125
        %v1254 = vmul.f32 %v1123, 0.125
        %v1255 = vmul.f32 %v1124, 0.125
        %v1256 = vmul.f32 %v1125, 0.125
        %v1257 = vmul.f32 %v1126, 0.125
        %v1258 = vmul.f32 %v1127, 0.125
        %v1259 = vmul.f32 %v1128, 0.125
        %v1260 = vmul.f32 %v1129, 0.125
        %1261 = vxpose.xlu0.b32.start [1/16] %v1253, 128
        %1262 = vxpose.xlu0.b32.cont [2/16] %v1254, 128
        %1263 = vxpose.xlu0.b32.cont [3/16] %v1255, 128
        %1264 = vxpose.xlu0.b32.cont [4/16] %v1256, 128
        %1265 = vxpose.xlu0.b32.cont [5/16] %v1257, 128
        %1266 = vxpose.xlu0.b32.cont [6/16] %v1258, 128
        %1267 = vxpose.xlu0.b32.cont [7/16] %v1259, 128
        %1268 = vxpose.xlu0.b32.cont [8/16] %v1260, 128
        %1269 = vxpose.xlu0.b32.cont [9/16] 0.0, 128
        %1270 = vxpose.xlu0.b32.cont [10/16] 0.0, 128
        %1271 = vxpose.xlu0.b32.cont [11/16] 0.0, 128
        %1272 = vxpose.xlu0.b32.cont [12/16] 0.0, 128
        %1273 = vxpose.xlu0.b32.cont [13/16] 0.0, 128
        %1274 = vxpose.xlu0.b32.cont [14/16] 0.0, 128
        %1275 = vxpose.xlu0.b32.cont [15/16] 0.0, 128
        %1276 = vxpose.xlu0.b32.end [16/16] 0.0, 128
        %v1277 = vpop.trf.xlu0
        %v1278 = vpop.trf.xlu0
        %v1279 = vpop.trf.xlu0
        %v1280 = vpop.trf.xlu0
        %v1281 = vpop.trf.xlu0
        %v1282 = vpop.trf.xlu0
        %v1283 = vpop.trf.xlu0
        %v1284 = vpop.trf.xlu0
        %v1285 = vpop.trf.xlu0
        %v1286 = vpop.trf.xlu0
        %v1287 = vpop.trf.xlu0
        %v1288 = vpop.trf.xlu0
        %v1289 = vpop.trf.xlu0
        %v1290 = vpop.trf.xlu0
        %v1291 = vpop.trf.xlu0
        %v1292 = vpop.trf.xlu0
        %vm1293 = vcmask 523264
        %v1295 = vsel %vm1293, %v1277, 0
        %v1298 = vsel %vm1293, %v1278, 0
        %v1301 = vsel %vm1293, %v1279, 0
        %v1304 = vsel %vm1293, %v1280, 0
        %v1307 = vsel %vm1293, %v1281, 0
        %v1310 = vsel %vm1293, %v1282, 0
        %v1313 = vsel %vm1293, %v1283, 0
        %v1316 = vsel %vm1293, %v1284, 0
        %v1319 = vsel %vm1293, %v1285, 0
        %v1322 = vsel %vm1293, %v1286, 0
        %v1325 = vsel %vm1293, %v1287, 0
        %v1328 = vsel %vm1293, %v1288, 0
        %v1331 = vsel %vm1293, %v1289, 0
        %v1334 = vsel %vm1293, %v1290, 0
        %v1337 = vsel %vm1293, %v1291, 0
        %v1340 = vsel %vm1293, %v1292, 0
        %1342 = vmatpush.msra.mxu0 0.0
        %1343 = vmatpush.msra.mxu0 0.0
        %1344 = vmatpush.msra.mxu0 0.0
        %1345 = vmatpush.msra.mxu0 0.0
        %1346 = vmatpush.msra.mxu0 0.0
        %1347 = vmatpush.msra.mxu0 0.0
        %1348 = vmatpush.msra.mxu0 0.0
        %1349 = vmatpush.msra.mxu0 0.0
        %1350 = vmatpush.msra.mxu0 %v1252
        %1351 = vmatpush.msra.mxu0 %v1251
        %1352 = vmatpush.msra.mxu0 %v1250
        %1353 = vmatpush.msra.mxu0 %v1249
        %1354 = vmatpush.msra.mxu0 %v1248
        %1355 = vmatpush.msra.mxu0 %v1247
        %1356 = vmatpush.msra.mxu0 %v1246
        %1357 = vmatpush.msra.mxu0 %v1245
        %1358 = vmatmul.f32.gmra.mxu0 %v1295
        %v1359 = vpop.f32.mrf.mxu0
        %v1360 = vadd.f32 0.0, %v1359
        %1361 = vmatmul.f32.gmra.mxu0 %v1298
        %v1362 = vpop.f32.mrf.mxu0
        %v1363 = vadd.f32 0.0, %v1362
        %1364 = vmatmul.f32.gmra.mxu0 %v1301
        %v1365 = vpop.f32.mrf.mxu0
        %v1366 = vadd.f32 0.0, %v1365
        %1367 = vmatmul.f32.gmra.mxu0 %v1304
        %v1368 = vpop.f32.mrf.mxu0
        %v1369 = vadd.f32 0.0, %v1368
        %1370 = vmatmul.f32.gmra.mxu0 %v1307
        %v1371 = vpop.f32.mrf.mxu0
        %v1372 = vadd.f32 0.0, %v1371
        %1373 = vmatmul.f32.gmra.mxu0 %v1310
        %v1374 = vpop.f32.mrf.mxu0
        %v1375 = vadd.f32 0.0, %v1374
        %1376 = vmatmul.f32.gmra.mxu0 %v1313
        %v1377 = vpop.f32.mrf.mxu0
        %v1378 = vadd.f32 0.0, %v1377
        %1379 = vmatmul.f32.gmra.mxu0 %v1316
        %v1380 = vpop.f32.mrf.mxu0
        %v1381 = vadd.f32 0.0, %v1380
        %1382 = vmatmul.f32.gmra.mxu0 %v1319
        %v1383 = vpop.f32.mrf.mxu0
        %v1384 = vadd.f32 0.0, %v1383
        %1385 = vmatmul.f32.gmra.mxu0 %v1322
        %v1386 = vpop.f32.mrf.mxu0
        %v1387 = vadd.f32 0.0, %v1386
        %1388 = vmatmul.f32.gmra.mxu0 %v1325
        %v1389 = vpop.f32.mrf.mxu0
        %v1390 = vadd.f32 0.0, %v1389
        %1391 = vmatmul.f32.gmra.mxu0 %v1328
        %v1392 = vpop.f32.mrf.mxu0
        %v1393 = vadd.f32 0.0, %v1392
        %1394 = vmatmul.f32.gmra.mxu0 %v1331
        %v1395 = vpop.f32.mrf.mxu0
        %v1396 = vadd.f32 0.0, %v1395
        %1397 = vmatmul.f32.gmra.mxu0 %v1334
        %v1398 = vpop.f32.mrf.mxu0
        %v1399 = vadd.f32 0.0, %v1398
        %1400 = vmatmul.f32.gmra.mxu0 %v1337
        %v1401 = vpop.f32.mrf.mxu0
        %v1402 = vadd.f32 0.0, %v1401
        %1403 = vmatmul.f32.gmra.mxu0 %v1340
        %v1404 = vpop.f32.mrf.mxu0
        %v1405 = vadd.f32 0.0, %v1404
        %1406 = vdwg.mxu0
        %v1407 = vmul.f32 %v1202, 0.125
        %v1408 = vmul.f32 %v1203, 0.125
        %v1409 = vmul.f32 %v1204, 0.125
        %v1410 = vmul.f32 %v1205, 0.125
        %v1411 = vmul.f32 %v1206, 0.125
        %v1412 = vmul.f32 %v1207, 0.125
        %v1413 = vmul.f32 %v1208, 0.125
        %v1414 = vmul.f32 %v1209, 0.125
        %1415 = vxpose.xlu0.b32.start [1/16] %v1407, 128
        %1416 = vxpose.xlu0.b32.cont [2/16] %v1408, 128
        %1417 = vxpose.xlu0.b32.cont [3/16] %v1409, 128
        %1418 = vxpose.xlu0.b32.cont [4/16] %v1410, 128
        %1419 = vxpose.xlu0.b32.cont [5/16] %v1411, 128
        %1420 = vxpose.xlu0.b32.cont [6/16] %v1412, 128
        %1421 = vxpose.xlu0.b32.cont [7/16] %v1413, 128
        %1422 = vxpose.xlu0.b32.cont [8/16] %v1414, 128
        %1423 = vxpose.xlu0.b32.cont [9/16] 0.0, 128
        %1424 = vxpose.xlu0.b32.cont [10/16] 0.0, 128
        %1425 = vxpose.xlu0.b32.cont [11/16] 0.0, 128
        %1426 = vxpose.xlu0.b32.cont [12/16] 0.0, 128
        %1427 = vxpose.xlu0.b32.cont [13/16] 0.0, 128
        %1428 = vxpose.xlu0.b32.cont [14/16] 0.0, 128
        %1429 = vxpose.xlu0.b32.cont [15/16] 0.0, 128
        %1430 = vxpose.xlu0.b32.end [16/16] 0.0, 128
        %v1431 = vpop.trf.xlu0
        %v1432 = vpop.trf.xlu0
        %v1433 = vpop.trf.xlu0
        %v1434 = vpop.trf.xlu0
        %v1435 = vpop.trf.xlu0
        %v1436 = vpop.trf.xlu0
        %v1437 = vpop.trf.xlu0
        %v1438 = vpop.trf.xlu0
        %v1439 = vpop.trf.xlu0
        %v1440 = vpop.trf.xlu0
        %v1441 = vpop.trf.xlu0
        %v1442 = vpop.trf.xlu0
        %v1443 = vpop.trf.xlu0
        %v1444 = vpop.trf.xlu0
        %v1445 = vpop.trf.xlu0
        %v1446 = vpop.trf.xlu0
        %v1448 = vsel %vm1293, %v1431, 0
        %v1451 = vsel %vm1293, %v1432, 0
        %v1454 = vsel %vm1293, %v1433, 0
        %v1457 = vsel %vm1293, %v1434, 0
        %v1460 = vsel %vm1293, %v1435, 0
        %v1463 = vsel %vm1293, %v1436, 0
        %v1466 = vsel %vm1293, %v1437, 0
        %v1469 = vsel %vm1293, %v1438, 0
        %v1472 = vsel %vm1293, %v1439, 0
        %v1475 = vsel %vm1293, %v1440, 0
        %v1478 = vsel %vm1293, %v1441, 0
        %v1481 = vsel %vm1293, %v1442, 0
        %v1484 = vsel %vm1293, %v1443, 0
        %v1487 = vsel %vm1293, %v1444, 0
        %v1490 = vsel %vm1293, %v1445, 0
        %v1493 = vsel %vm1293, %v1446, 0
        %1495 = vmatpush.msra.mxu0 0.0
        %1496 = vmatpush.msra.mxu0 0.0
        %1497 = vmatpush.msra.mxu0 0.0
        %1498 = vmatpush.msra.mxu0 0.0
        %1499 = vmatpush.msra.mxu0 0.0
        %1500 = vmatpush.msra.mxu0 0.0
        %1501 = vmatpush.msra.mxu0 0.0
        %1502 = vmatpush.msra.mxu0 0.0
        %1503 = vmatpush.msra.mxu0 %v1252
        %1504 = vmatpush.msra.mxu0 %v1251
        %1505 = vmatpush.msra.mxu0 %v1250
        %1506 = vmatpush.msra.mxu0 %v1249
        %1507 = vmatpush.msra.mxu0 %v1248
        %1508 = vmatpush.msra.mxu0 %v1247
        %1509 = vmatpush.msra.mxu0 %v1246
        %1510 = vmatpush.msra.mxu0 %v1245
        %1511 = vmatmul.f32.gmra.mxu0 %v1448
        %v1512 = vpop.f32.mrf.mxu0
        %v1513 = vadd.f32 0.0, %v1512
        %1514 = vmatmul.f32.gmra.mxu0 %v1451
        %v1515 = vpop.f32.mrf.mxu0
        %v1516 = vadd.f32 0.0, %v1515
        %1517 = vmatmul.f32.gmra.mxu0 %v1454
        %v1518 = vpop.f32.mrf.mxu0
        %v1519 = vadd.f32 0.0, %v1518
        %1520 = vmatmul.f32.gmra.mxu0 %v1457
        %v1521 = vpop.f32.mrf.mxu0
        %v1522 = vadd.f32 0.0, %v1521
        %1523 = vmatmul.f32.gmra.mxu0 %v1460
        %v1524 = vpop.f32.mrf.mxu0
        %v1525 = vadd.f32 0.0, %v1524
        %1526 = vmatmul.f32.gmra.mxu0 %v1463
        %v1527 = vpop.f32.mrf.mxu0
        %v1528 = vadd.f32 0.0, %v1527
        %1529 = vmatmul.f32.gmra.mxu0 %v1466
        %v1530 = vpop.f32.mrf.mxu0
        %v1531 = vadd.f32 0.0, %v1530
        %1532 = vmatmul.f32.gmra.mxu0 %v1469
        %v1533 = vpop.f32.mrf.mxu0
        %v1534 = vadd.f32 0.0, %v1533
        %1535 = vmatmul.f32.gmra.mxu0 %v1472
        %v1536 = vpop.f32.mrf.mxu0
        %v1537 = vadd.f32 0.0, %v1536
        %1538 = vmatmul.f32.gmra.mxu0 %v1475
        %v1539 = vpop.f32.mrf.mxu0
        %v1540 = vadd.f32 0.0, %v1539
        %1541 = vmatmul.f32.gmra.mxu0 %v1478
        %v1542 = vpop.f32.mrf.mxu0
        %v1543 = vadd.f32 0.0, %v1542
        %1544 = vmatmul.f32.gmra.mxu0 %v1481
        %v1545 = vpop.f32.mrf.mxu0
        %v1546 = vadd.f32 0.0, %v1545
        %1547 = vmatmul.f32.gmra.mxu0 %v1484
        %v1548 = vpop.f32.mrf.mxu0
        %v1549 = vadd.f32 0.0, %v1548
        %1550 = vmatmul.f32.gmra.mxu0 %v1487
        %v1551 = vpop.f32.mrf.mxu0
        %v1552 = vadd.f32 0.0, %v1551
        %1553 = vmatmul.f32.gmra.mxu0 %v1490
        %v1554 = vpop.f32.mrf.mxu0
        %v1555 = vadd.f32 0.0, %v1554
        %1556 = vmatmul.f32.gmra.mxu0 %v1493
        %v1557 = vpop.f32.mrf.mxu0
        %v1558 = vadd.f32 0.0, %v1557
        %1559 = vdwg.mxu0
        %v1560 = vld [vmem:[#allocation12] sm:$0xff]
        %v1561 = vld [vmem:[#allocation12 + $0x8] sm:$0xff]
        %v1562 = vld [vmem:[#allocation12 + $0x10] sm:$0xff]
        %v1563 = vld [vmem:[#allocation12 + $0x18] sm:$0xff]
        %v1564 = vld [vmem:[#allocation12 + $0x20] sm:$0xff]
        %v1565 = vld [vmem:[#allocation12 + $0x28] sm:$0xff]
        %v1566 = vld [vmem:[#allocation12 + $0x30] sm:$0xff]
        %v1567 = vld [vmem:[#allocation12 + $0x38] sm:$0xff]
        %v1568 = vld [vmem:[#allocation12 + $0x40] sm:$0xff]
        %v1569 = vld [vmem:[#allocation12 + $0x48] sm:$0xff]
        %v1570 = vld [vmem:[#allocation12 + $0x50] sm:$0xff]
        %v1571 = vld [vmem:[#allocation12 + $0x58] sm:$0xff]
        %v1572 = vld [vmem:[#allocation12 + $0x60] sm:$0xff]
        %v1573 = vld [vmem:[#allocation12 + $0x68] sm:$0xff]
        %v1574 = vld [vmem:[#allocation12 + $0x70] sm:$0xff]
        %v1575 = vld [vmem:[#allocation12 + $0x78] sm:$0xff]
        %v1576 = vld [vmem:[#allocation14] sm:$0xff]
        %v1577 = vld [vmem:[#allocation14 + $0x8] sm:$0xff]
        %v1578 = vld [vmem:[#allocation14 + $0x10] sm:$0xff]
        %v1579 = vld [vmem:[#allocation14 + $0x18] sm:$0xff]
        %v1580 = vld [vmem:[#allocation14 + $0x20] sm:$0xff]
        %v1581 = vld [vmem:[#allocation14 + $0x28] sm:$0xff]
        %v1582 = vld [vmem:[#allocation14 + $0x30] sm:$0xff]
        %v1583 = vld [vmem:[#allocation14 + $0x38] sm:$0xff]
        %v1584 = vld [vmem:[#allocation14 + $0x40] sm:$0xff]
        %v1585 = vld [vmem:[#allocation14 + $0x48] sm:$0xff]
        %v1586 = vld [vmem:[#allocation14 + $0x50] sm:$0xff]
        %v1587 = vld [vmem:[#allocation14 + $0x58] sm:$0xff]
        %v1588 = vld [vmem:[#allocation14 + $0x60] sm:$0xff]
        %v1589 = vld [vmem:[#allocation14 + $0x68] sm:$0xff]
        %v1590 = vld [vmem:[#allocation14 + $0x70] sm:$0xff]
        %v1591 = vld [vmem:[#allocation14 + $0x78] sm:$0xff]
        %v1592 = vmul.f32 %v1360, %v1560
        %v1593 = vmul.f32 %v1363, %v1561
        %v1594 = vmul.f32 %v1366, %v1562
        %v1595 = vmul.f32 %v1369, %v1563
        %v1596 = vmul.f32 %v1372, %v1564
        %v1597 = vmul.f32 %v1375, %v1565
        %v1598 = vmul.f32 %v1378, %v1566
        %v1599 = vmul.f32 %v1381, %v1567
        %v1600 = vmul.f32 %v1384, %v1568
        %v1601 = vmul.f32 %v1387, %v1569
        %v1602 = vmul.f32 %v1390, %v1570
        %v1603 = vmul.f32 %v1393, %v1571
        %v1604 = vmul.f32 %v1396, %v1572
        %v1605 = vmul.f32 %v1399, %v1573
        %v1606 = vmul.f32 %v1402, %v1574
        %v1607 = vmul.f32 %v1405, %v1575
        %v1608 = vmul.f32 %v1513, %v1576
        %v1609 = vmul.f32 %v1516, %v1577
        %v1610 = vmul.f32 %v1519, %v1578
        %v1611 = vmul.f32 %v1522, %v1579
        %v1612 = vmul.f32 %v1525, %v1580
        %v1613 = vmul.f32 %v1528, %v1581
        %v1614 = vmul.f32 %v1531, %v1582
        %v1615 = vmul.f32 %v1534, %v1583
        %v1616 = vmul.f32 %v1537, %v1584
        %v1617 = vmul.f32 %v1540, %v1585
        %v1618 = vmul.f32 %v1543, %v1586
        %v1619 = vmul.f32 %v1546, %v1587
        %v1620 = vmul.f32 %v1549, %v1588
        %v1621 = vmul.f32 %v1552, %v1589
        %v1622 = vmul.f32 %v1555, %v1590
        %v1623 = vmul.f32 %v1558, %v1591
        %v1624 = vadd.f32 %v1592, %v1608
        %v1625 = vadd.f32 %v1593, %v1609
        %v1626 = vadd.f32 %v1594, %v1610
        %v1627 = vadd.f32 %v1595, %v1611
        %v1628 = vadd.f32 %v1596, %v1612
        %v1629 = vadd.f32 %v1597, %v1613
        %v1630 = vadd.f32 %v1598, %v1614
        %v1631 = vadd.f32 %v1599, %v1615
        %v1632 = vadd.f32 %v1600, %v1616
        %v1633 = vadd.f32 %v1601, %v1617
        %v1634 = vadd.f32 %v1602, %v1618
        %v1635 = vadd.f32 %v1603, %v1619
        %v1636 = vadd.f32 %v1604, %v1620
        %v1637 = vadd.f32 %v1605, %v1621
        %v1638 = vadd.f32 %v1606, %v1622
        %v1639 = vadd.f32 %v1607, %v1623
        %v1640 = vmul.f32 %v1513, %v1560
        %v1641 = vmul.f32 %v1516, %v1561
        %v1642 = vmul.f32 %v1519, %v1562
        %v1643 = vmul.f32 %v1522, %v1563
        %v1644 = vmul.f32 %v1525, %v1564
        %v1645 = vmul.f32 %v1528, %v1565
        %v1646 = vmul.f32 %v1531, %v1566
        %v1647 = vmul.f32 %v1534, %v1567
        %v1648 = vmul.f32 %v1537, %v1568
        %v1649 = vmul.f32 %v1540, %v1569
        %v1650 = vmul.f32 %v1543, %v1570
        %v1651 = vmul.f32 %v1546, %v1571
        %v1652 = vmul.f32 %v1549, %v1572
        %v1653 = vmul.f32 %v1552, %v1573
        %v1654 = vmul.f32 %v1555, %v1574
        %v1655 = vmul.f32 %v1558, %v1575
        %v1656 = vmul.f32 %v1360, %v1576
        %v1657 = vmul.f32 %v1363, %v1577
        %v1658 = vmul.f32 %v1366, %v1578
        %v1659 = vmul.f32 %v1369, %v1579
        %v1660 = vmul.f32 %v1372, %v1580
        %v1661 = vmul.f32 %v1375, %v1581
        %v1662 = vmul.f32 %v1378, %v1582
        %v1663 = vmul.f32 %v1381, %v1583
        %v1664 = vmul.f32 %v1384, %v1584
        %v1665 = vmul.f32 %v1387, %v1585
        %v1666 = vmul.f32 %v1390, %v1586
        %v1667 = vmul.f32 %v1393, %v1587
        %v1668 = vmul.f32 %v1396, %v1588
        %v1669 = vmul.f32 %v1399, %v1589
        %v1670 = vmul.f32 %v1402, %v1590
        %v1671 = vmul.f32 %v1405, %v1591
        %v1672 = vadd.f32 %v1640, %v1656
        %v1673 = vadd.f32 %v1641, %v1657
        %v1674 = vadd.f32 %v1642, %v1658
        %v1675 = vadd.f32 %v1643, %v1659
        %v1676 = vadd.f32 %v1644, %v1660
        %v1677 = vadd.f32 %v1645, %v1661
        %v1678 = vadd.f32 %v1646, %v1662
        %v1679 = vadd.f32 %v1647, %v1663
        %v1680 = vadd.f32 %v1648, %v1664
        %v1681 = vadd.f32 %v1649, %v1665
        %v1682 = vadd.f32 %v1650, %v1666
        %v1683 = vadd.f32 %v1651, %v1667
        %v1684 = vadd.f32 %v1652, %v1668
        %v1685 = vadd.f32 %v1653, %v1669
        %v1686 = vadd.f32 %v1654, %v1670
        %v1687 = vadd.f32 %v1655, %v1671
        %1688 = vmatpush.msra.mxu0 %v1687
        %1689 = vmatpush.msra.mxu0 %v1686
        %1690 = vmatpush.msra.mxu0 %v1685
        %1691 = vmatpush.msra.mxu0 %v1684
        %1692 = vmatpush.msra.mxu0 %v1683
        %1693 = vmatpush.msra.mxu0 %v1682
        %1694 = vmatpush.msra.mxu0 %v1681
        %1695 = vmatpush.msra.mxu0 %v1680
        %1696 = vmatpush.msra.mxu0 %v1679
        %1697 = vmatpush.msra.mxu0 %v1678
        %1698 = vmatpush.msra.mxu0 %v1677
        %1699 = vmatpush.msra.mxu0 %v1676
        %1700 = vmatpush.msra.mxu0 %v1675
        %1701 = vmatpush.msra.mxu0 %v1674
        %1702 = vmatpush.msra.mxu0 %v1673
        %1703 = vmatpush.msra.mxu0 %v1672
        %1704 = vmatmul.f32.gmra.mxu0 %v1050
        %v1705 = vpop.f32.mrf.mxu0
        %v1706 = vadd.f32 0.0, %v1705
        %1707 = vmatmul.f32.gmra.mxu0 %v1051
        %v1708 = vpop.f32.mrf.mxu0
        %v1709 = vadd.f32 0.0, %v1708
        %1710 = vmatmul.f32.gmra.mxu0 %v1052
        %v1711 = vpop.f32.mrf.mxu0
        %v1712 = vadd.f32 0.0, %v1711
        %1713 = vmatmul.f32.gmra.mxu0 %v1053
        %v1714 = vpop.f32.mrf.mxu0
        %v1715 = vadd.f32 0.0, %v1714
        %1716 = vmatmul.f32.gmra.mxu0 %v1054
        %v1717 = vpop.f32.mrf.mxu0
        %v1718 = vadd.f32 0.0, %v1717
        %1719 = vmatmul.f32.gmra.mxu0 %v1055
        %v1720 = vpop.f32.mrf.mxu0
        %v1721 = vadd.f32 0.0, %v1720
        %1722 = vmatmul.f32.gmra.mxu0 %v1056
        %v1723 = vpop.f32.mrf.mxu0
        %v1724 = vadd.f32 0.0, %v1723
        %1725 = vmatmul.f32.gmra.mxu0 %v1057
        %v1726 = vpop.f32.mrf.mxu0
        %v1727 = vadd.f32 0.0, %v1726
        %1728 = vdwg.mxu0
        %1729 = vmatpush.msra.mxu0 %v1639
        %1730 = vmatpush.msra.mxu0 %v1638
        %1731 = vmatpush.msra.mxu0 %v1637
        %1732 = vmatpush.msra.mxu0 %v1636
        %1733 = vmatpush.msra.mxu0 %v1635
        %1734 = vmatpush.msra.mxu0 %v1634
        %1735 = vmatpush.msra.mxu0 %v1633
        %1736 = vmatpush.msra.mxu0 %v1632
        %1737 = vmatpush.msra.mxu0 %v1631
        %1738 = vmatpush.msra.mxu0 %v1630
        %1739 = vmatpush.msra.mxu0 %v1629
        %1740 = vmatpush.msra.mxu0 %v1628
        %1741 = vmatpush.msra.mxu0 %v1627
        %1742 = vmatpush.msra.mxu0 %v1626
        %1743 = vmatpush.msra.mxu0 %v1625
        %1744 = vmatpush.msra.mxu0 %v1624
        %1745 = vmatmul.f32.gmra.mxu0 %v970
        %v1746 = vpop.f32.mrf.mxu0
        %v1747 = vadd.f32 %v1706, %v1746
        %1748 = vmatmul.f32.gmra.mxu0 %v971
        %v1749 = vpop.f32.mrf.mxu0
        %v1750 = vadd.f32 %v1709, %v1749
        %1751 = vmatmul.f32.gmra.mxu0 %v972
        %v1752 = vpop.f32.mrf.mxu0
        %v1753 = vadd.f32 %v1712, %v1752
        %1754 = vmatmul.f32.gmra.mxu0 %v973
        %v1755 = vpop.f32.mrf.mxu0
        %v1756 = vadd.f32 %v1715, %v1755
        %1757 = vmatmul.f32.gmra.mxu0 %v974
        %v1758 = vpop.f32.mrf.mxu0
        %v1759 = vadd.f32 %v1718, %v1758
        %1760 = vmatmul.f32.gmra.mxu0 %v975
        %v1761 = vpop.f32.mrf.mxu0
        %v1762 = vadd.f32 %v1721, %v1761
        %1763 = vmatmul.f32.gmra.mxu0 %v976
        %v1764 = vpop.f32.mrf.mxu0
        %v1765 = vadd.f32 %v1724, %v1764
        %1766 = vmatmul.f32.gmra.mxu0 %v977
        %v1767 = vpop.f32.mrf.mxu0
        %v1768 = vadd.f32 %v1727, %v1767
        %1769 = vdwg.mxu0
        %v1770 = vmul.f32 %v970, %v1230
        %v1771 = vmul.f32 %v971, %v1230
        %v1772 = vmul.f32 %v972, %v1230
        %v1773 = vmul.f32 %v973, %v1230
        %v1774 = vmul.f32 %v974, %v1230
        %v1775 = vmul.f32 %v975, %v1230
        %v1776 = vmul.f32 %v976, %v1230
        %v1777 = vmul.f32 %v977, %v1230
        %v1778 = vmul.f32 %v1050, %v1244
        %v1779 = vmul.f32 %v1051, %v1244
        %v1780 = vmul.f32 %v1052, %v1244
        %v1781 = vmul.f32 %v1053, %v1244
        %v1782 = vmul.f32 %v1054, %v1244
        %v1783 = vmul.f32 %v1055, %v1244
        %v1784 = vmul.f32 %v1056, %v1244
        %v1785 = vmul.f32 %v1057, %v1244
        %v1786 = vadd.f32 %v1770, %v1778
        %v1787 = vadd.f32 %v1771, %v1779
        %v1788 = vadd.f32 %v1772, %v1780
        %v1789 = vadd.f32 %v1773, %v1781
        %v1790 = vadd.f32 %v1774, %v1782
        %v1791 = vadd.f32 %v1775, %v1783
        %v1792 = vadd.f32 %v1776, %v1784
        %v1793 = vadd.f32 %v1777, %v1785
        %v1794 = vmul.f32 %v1050, %v1230
        %v1795 = vmul.f32 %v1051, %v1230
        %v1796 = vmul.f32 %v1052, %v1230
        %v1797 = vmul.f32 %v1053, %v1230
        %v1798 = vmul.f32 %v1054, %v1230
        %v1799 = vmul.f32 %v1055, %v1230
        %v1800 = vmul.f32 %v1056, %v1230
        %v1801 = vmul.f32 %v1057, %v1230
        %v1802 = vmul.f32 %v970, %v1244
        %v1803 = vmul.f32 %v971, %v1244
        %v1804 = vmul.f32 %v972, %v1244
        %v1805 = vmul.f32 %v973, %v1244
        %v1806 = vmul.f32 %v974, %v1244
        %v1807 = vmul.f32 %v975, %v1244
        %v1808 = vmul.f32 %v976, %v1244
        %v1809 = vmul.f32 %v977, %v1244
        %v1810 = vadd.f32 %v1794, %v1802
        %v1811 = vadd.f32 %v1795, %v1803
        %v1812 = vadd.f32 %v1796, %v1804
        %v1813 = vadd.f32 %v1797, %v1805
        %v1814 = vadd.f32 %v1798, %v1806
        %v1815 = vadd.f32 %v1799, %v1807
        %v1816 = vadd.f32 %v1800, %v1808
        %v1817 = vadd.f32 %v1801, %v1809
        %1818 = vmatpush.msra.mxu0 %v1591
        %1819 = vmatpush.msra.mxu0 %v1590
        %1820 = vmatpush.msra.mxu0 %v1589
        %1821 = vmatpush.msra.mxu0 %v1588
        %1822 = vmatpush.msra.mxu0 %v1587
        %1823 = vmatpush.msra.mxu0 %v1586
        %1824 = vmatpush.msra.mxu0 %v1585
        %1825 = vmatpush.msra.mxu0 %v1584
        %1826 = vmatpush.msra.mxu0 %v1583
        %1827 = vmatpush.msra.mxu0 %v1582
        %1828 = vmatpush.msra.mxu0 %v1581
        %1829 = vmatpush.msra.mxu0 %v1580
        %1830 = vmatpush.msra.mxu0 %v1579
        %1831 = vmatpush.msra.mxu0 %v1578
        %1832 = vmatpush.msra.mxu0 %v1577
        %1833 = vmatpush.msra.mxu0 %v1576
        %1834 = vmatmul.f32.gmra.mxu0 %v1810
        %v1835 = vpop.f32.mrf.mxu0
        %v1836 = vadd.f32 0.0, %v1835
        %1837 = vmatmul.f32.gmra.mxu0 %v1811
        %v1838 = vpop.f32.mrf.mxu0
        %v1839 = vadd.f32 0.0, %v1838
        %1840 = vmatmul.f32.gmra.mxu0 %v1812
        %v1841 = vpop.f32.mrf.mxu0
        %v1842 = vadd.f32 0.0, %v1841
        %1843 = vmatmul.f32.gmra.mxu0 %v1813
        %v1844 = vpop.f32.mrf.mxu0
        %v1845 = vadd.f32 0.0, %v1844
        %1846 = vmatmul.f32.gmra.mxu0 %v1814
        %v1847 = vpop.f32.mrf.mxu0
        %v1848 = vadd.f32 0.0, %v1847
        %1849 = vmatmul.f32.gmra.mxu0 %v1815
        %v1850 = vpop.f32.mrf.mxu0
        %v1851 = vadd.f32 0.0, %v1850
        %1852 = vmatmul.f32.gmra.mxu0 %v1816
        %v1853 = vpop.f32.mrf.mxu0
        %v1854 = vadd.f32 0.0, %v1853
        %1855 = vmatmul.f32.gmra.mxu0 %v1817
        %v1856 = vpop.f32.mrf.mxu0
        %v1857 = vadd.f32 0.0, %v1856
        %1858 = vdwg.mxu0
        %1859 = vmatpush.msra.mxu0 %v1575
        %1860 = vmatpush.msra.mxu0 %v1574
        %1861 = vmatpush.msra.mxu0 %v1573
        %1862 = vmatpush.msra.mxu0 %v1572
        %1863 = vmatpush.msra.mxu0 %v1571
        %1864 = vmatpush.msra.mxu0 %v1570
        %1865 = vmatpush.msra.mxu0 %v1569
        %1866 = vmatpush.msra.mxu0 %v1568
        %1867 = vmatpush.msra.mxu0 %v1567
        %1868 = vmatpush.msra.mxu0 %v1566
        %1869 = vmatpush.msra.mxu0 %v1565
        %1870 = vmatpush.msra.mxu0 %v1564
        %1871 = vmatpush.msra.mxu0 %v1563
        %1872 = vmatpush.msra.mxu0 %v1562
        %1873 = vmatpush.msra.mxu0 %v1561
        %1874 = vmatpush.msra.mxu0 %v1560
        %1875 = vmatmul.f32.gmra.mxu0 %v1786
        %v1876 = vpop.f32.mrf.mxu0
        %v1877 = vadd.f32 %v1836, %v1876
        %1878 = vmatmul.f32.gmra.mxu0 %v1787
        %v1879 = vpop.f32.mrf.mxu0
        %v1880 = vadd.f32 %v1839, %v1879
        %1881 = vmatmul.f32.gmra.mxu0 %v1788
        %v1882 = vpop.f32.mrf.mxu0
        %v1883 = vadd.f32 %v1842, %v1882
        %1884 = vmatmul.f32.gmra.mxu0 %v1789
        %v1885 = vpop.f32.mrf.mxu0
        %v1886 = vadd.f32 %v1845, %v1885
        %1887 = vmatmul.f32.gmra.mxu0 %v1790
        %v1888 = vpop.f32.mrf.mxu0
        %v1889 = vadd.f32 %v1848, %v1888
        %1890 = vmatmul.f32.gmra.mxu0 %v1791
        %v1891 = vpop.f32.mrf.mxu0
        %v1892 = vadd.f32 %v1851, %v1891
        %1893 = vmatmul.f32.gmra.mxu0 %v1792
        %v1894 = vpop.f32.mrf.mxu0
        %v1895 = vadd.f32 %v1854, %v1894
        %1896 = vmatmul.f32.gmra.mxu0 %v1793
        %v1897 = vpop.f32.mrf.mxu0
        %v1898 = vadd.f32 %v1857, %v1897
        %1899 = vdwg.mxu0
        %v1900 = vadd.f32 %v1877, 1e-06
        %v1901 = vadd.f32 %v1880, 1e-06
        %v1902 = vadd.f32 %v1883, 1e-06
        %v1903 = vadd.f32 %v1886, 1e-06
        %v1904 = vadd.f32 %v1889, 1e-06
        %v1905 = vadd.f32 %v1892, 1e-06
        %v1906 = vadd.f32 %v1895, 1e-06
        %v1907 = vadd.f32 %v1898, 1e-06
        %v1908 = vrcp.pop %v1900
        %v1909 = vmul.f32 %v1900, %v1908
        %v1910 = vsub.f32 1.0, %v1909
        %v1911 = vmul.f32 %v1908, %v1910
        %v1912 = vadd.f32 %v1908, %v1911
        %vm1913 = vweird.f32 %v1900
        %vm1914 = vweird.f32 %v1908
        %vm1915 = vmor %vm1913, %vm1914
        %v1916 = vsel %vm1915, %v1908, %v1912
        %v1917 = vand.u32 2147483647, %v1900
        %vm1918 = vcmp.eq.f32.partialorder %v1917, 8.507059e+37
        %v1919 = vand.u32 %v1900, 2147483648
        %v1920 = vor.u32 1.1754944e-38, %v1919
        %v1921 = vsel %vm1918, %v1920, %v1916
        %v1922 = vmul.f32 %v1747, %v1921
        %v1923 = vrcp.pop %v1901
        %v1924 = vmul.f32 %v1901, %v1923
        %v1925 = vsub.f32 1.0, %v1924
        %v1926 = vmul.f32 %v1923, %v1925
        %v1927 = vadd.f32 %v1923, %v1926
        %vm1928 = vweird.f32 %v1901
        %vm1929 = vweird.f32 %v1923
        %vm1930 = vmor %vm1928, %vm1929
        %v1931 = vsel %vm1930, %v1923, %v1927
        %v1932 = vand.u32 2147483647, %v1901
        %vm1933 = vcmp.eq.f32.partialorder %v1932, 8.507059e+37
        %v1934 = vand.u32 %v1901, 2147483648
        %v1935 = vor.u32 1.1754944e-38, %v1934
        %v1936 = vsel %vm1933, %v1935, %v1931
        %v1937 = vmul.f32 %v1750, %v1936
        %v1938 = vrcp.pop %v1902
        %v1939 = vmul.f32 %v1902, %v1938
        %v1940 = vsub.f32 1.0, %v1939
        %v1941 = vmul.f32 %v1938, %v1940
        %v1942 = vadd.f32 %v1938, %v1941
        %vm1943 = vweird.f32 %v1902
        %vm1944 = vweird.f32 %v1938
        %vm1945 = vmor %vm1943, %vm1944
        %v1946 = vsel %vm1945, %v1938, %v1942
        %v1947 = vand.u32 2147483647, %v1902
        %vm1948 = vcmp.eq.f32.partialorder %v1947, 8.507059e+37
        %v1949 = vand.u32 %v1902, 2147483648
        %v1950 = vor.u32 1.1754944e-38, %v1949
        %v1951 = vsel %vm1948, %v1950, %v1946
        %v1952 = vmul.f32 %v1753, %v1951
        %v1953 = vrcp.pop %v1903
        %v1954 = vmul.f32 %v1903, %v1953
        %v1955 = vsub.f32 1.0, %v1954
        %v1956 = vmul.f32 %v1953, %v1955
        %v1957 = vadd.f32 %v1953, %v1956
        %vm1958 = vweird.f32 %v1903
        %vm1959 = vweird.f32 %v1953
        %vm1960 = vmor %vm1958, %vm1959
        %v1961 = vsel %vm1960, %v1953, %v1957
        %v1962 = vand.u32 2147483647, %v1903
        %vm1963 = vcmp.eq.f32.partialorder %v1962, 8.507059e+37
        %v1964 = vand.u32 %v1903, 2147483648
        %v1965 = vor.u32 1.1754944e-38, %v1964
        %v1966 = vsel %vm1963, %v1965, %v1961
        %v1967 = vmul.f32 %v1756, %v1966
        %v1968 = vrcp.pop %v1904
        %v1969 = vmul.f32 %v1904, %v1968
        %v1970 = vsub.f32 1.0, %v1969
        %v1971 = vmul.f32 %v1968, %v1970
        %v1972 = vadd.f32 %v1968, %v1971
        %vm1973 = vweird.f32 %v1904
        %vm1974 = vweird.f32 %v1968
        %vm1975 = vmor %vm1973, %vm1974
        %v1976 = vsel %vm1975, %v1968, %v1972
        %v1977 = vand.u32 2147483647, %v1904
        %vm1978 = vcmp.eq.f32.partialorder %v1977, 8.507059e+37
        %v1979 = vand.u32 %v1904, 2147483648
        %v1980 = vor.u32 1.1754944e-38, %v1979
        %v1981 = vsel %vm1978, %v1980, %v1976
        %v1982 = vmul.f32 %v1759, %v1981
        %v1983 = vrcp.pop %v1905
        %v1984 = vmul.f32 %v1905, %v1983
        %v1985 = vsub.f32 1.0, %v1984
        %v1986 = vmul.f32 %v1983, %v1985
        %v1987 = vadd.f32 %v1983, %v1986
        %vm1988 = vweird.f32 %v1905
        %vm1989 = vweird.f32 %v1983
        %vm1990 = vmor %vm1988, %vm1989
        %v1991 = vsel %vm1990, %v1983, %v1987
        %v1992 = vand.u32 2147483647, %v1905
        %vm1993 = vcmp.eq.f32.partialorder %v1992, 8.507059e+37
        %v1994 = vand.u32 %v1905, 2147483648
        %v1995 = vor.u32 1.1754944e-38, %v1994
        %v1996 = vsel %vm1993, %v1995, %v1991
        %v1997 = vmul.f32 %v1762, %v1996
        %v1998 = vrcp.pop %v1906
        %v1999 = vmul.f32 %v1906, %v1998
        %v2000 = vsub.f32 1.0, %v1999
        %v2001 = vmul.f32 %v1998, %v2000
        %v2002 = vadd.f32 %v1998, %v2001
        %vm2003 = vweird.f32 %v1906
        %vm2004 = vweird.f32 %v1998
        %vm2005 = vmor %vm2003, %vm2004
        %v2006 = vsel %vm2005, %v1998, %v2002
        %v2007 = vand.u32 2147483647, %v1906
        %vm2008 = vcmp.eq.f32.partialorder %v2007, 8.507059e+37
        %v2009 = vand.u32 %v1906, 2147483648
        %v2010 = vor.u32 1.1754944e-38, %v2009
        %v2011 = vsel %vm2008, %v2010, %v2006
        %v2012 = vmul.f32 %v1765, %v2011
        %v2013 = vrcp.pop %v1907
        %v2014 = vmul.f32 %v1907, %v2013
        %v2015 = vsub.f32 1.0, %v2014
        %v2016 = vmul.f32 %v2013, %v2015
        %v2017 = vadd.f32 %v2013, %v2016
        %vm2018 = vweird.f32 %v1907
        %vm2019 = vweird.f32 %v2013
        %vm2020 = vmor %vm2018, %vm2019
        %v2021 = vsel %vm2020, %v2013, %v2017
        %v2022 = vand.u32 2147483647, %v1907
        %vm2023 = vcmp.eq.f32.partialorder %v2022, 8.507059e+37
        %v2024 = vand.u32 %v1907, 2147483648
        %v2025 = vor.u32 1.1754944e-38, %v2024
        %v2026 = vsel %vm2023, %v2025, %v2021
        %v2027 = vmul.f32 %v1768, %v2026
        %2028 = vst [vmem:[#allocation2] sm:$0xff] 0.0
        %2029 = vst [vmem:[#allocation2 + $0x8] sm:$0xf] 0.0
        %2030 = vst [vmem:[#allocation2 + $0x10] sm:$0xff] 0.0
        %2031 = vst [vmem:[#allocation2 + $0x18] sm:$0xf] 0.0
        %2032 = vst [vmem:[#allocation2 + $0x20] sm:$0xff] 0.0
        %2033 = vst [vmem:[#allocation2 + $0x28] sm:$0xf] 0.0
        %2034 = vst [vmem:[#allocation2 + $0x30] sm:$0xff] 0.0
        %2035 = vst [vmem:[#allocation2 + $0x38] sm:$0xf] 0.0
        %2036 = vst [vmem:[#allocation2 + $0x40] sm:$0xff] 0.0
        %2037 = vst [vmem:[#allocation2 + $0x48] sm:$0xf] 0.0
        %2038 = vst [vmem:[#allocation2 + $0x50] sm:$0xff] 0.0
        %2039 = vst [vmem:[#allocation2 + $0x58] sm:$0xf] 0.0
        %2040 = vst [vmem:[#allocation2 + $0x60] sm:$0xff] 0.0
        %2041 = vst [vmem:[#allocation2 + $0x68] sm:$0xf] 0.0
        %2042 = vst [vmem:[#allocation2 + $0x70] sm:$0xff] 0.0
        %2043 = vst [vmem:[#allocation2 + $0x78] sm:$0xf] 0.0
        %2044 = vst [vmem:[#allocation2 + $0x80] sm:$0xff] 0.0
        %2045 = vst [vmem:[#allocation2 + $0x88] sm:$0xf] 0.0
        %2046 = vst [vmem:[#allocation2 + $0x90] sm:$0xff] 0.0
        %2047 = vst [vmem:[#allocation2 + $0x98] sm:$0xf] 0.0
        %2048 = vst [vmem:[#allocation2 + $0xa0] sm:$0xff] 0.0
        %2049 = vst [vmem:[#allocation2 + $0xa8] sm:$0xf] 0.0
        %2050 = vst [vmem:[#allocation2 + $0xb0] sm:$0xff] 0.0
        %2051 = vst [vmem:[#allocation2 + $0xb8] sm:$0xf] 0.0
        %s2052 = scalar_lea.vmem [#allocation2], 32
        %2053 = vst [vmem:[%s2052 + $0x2] sm:$0xff] %v843
        %2054 = vst [vmem:[%s2052 + $0x12] sm:$0xff] %v846
        %2055 = vst [vmem:[%s2052 + $0x22] sm:$0xff] %v849
        %2056 = vst [vmem:[%s2052 + $0x32] sm:$0xff] %v852
        %2057 = vst [vmem:[%s2052 + $0x42] sm:$0xff] %v855
        %2058 = vst [vmem:[%s2052 + $0x52] sm:$0xff] %v858
        %2059 = vst [vmem:[%s2052 + $0x62] sm:$0xff] %v861
        %2060 = vst [vmem:[%s2052 + $0x72] sm:$0xff] %v864
        %v2061 = vld [vmem:[#allocation15] sm:$0x1]
        %v2062 = vld [vmem:[#allocation2] sm:$0xff]
        %v2063 = vld [vmem:[#allocation2 + $0x10] sm:$0xff]
        %v2064 = vld [vmem:[#allocation2 + $0x20] sm:$0xff]
        %v2065 = vld [vmem:[#allocation2 + $0x30] sm:$0xff]
        %v2066 = vld [vmem:[#allocation2 + $0x40] sm:$0xff]
        %v2067 = vld [vmem:[#allocation2 + $0x50] sm:$0xff]
        %v2068 = vld [vmem:[#allocation2 + $0x60] sm:$0xff]
        %v2069 = vld [vmem:[#allocation2 + $0x70] sm:$0xff]
        %v2070 = vperm.slane %v2061, 0
        %v2071 = vmul.f32 %v2062, %v2070
        %v2072 = vmul.f32 %v2063, %v2070
        %v2073 = vmul.f32 %v2064, %v2070
        %v2074 = vmul.f32 %v2065, %v2070
        %v2075 = vmul.f32 %v2066, %v2070
        %v2076 = vmul.f32 %v2067, %v2070
        %v2077 = vmul.f32 %v2068, %v2070
        %v2078 = vmul.f32 %v2069, %v2070
        %v2079 = vadd.f32 %v2071, 0.0
        %v2080 = vadd.f32 %v2072, 0.0
        %v2081 = vadd.f32 %v2073, 0.0
        %v2082 = vadd.f32 %v2074, 0.0
        %v2083 = vadd.f32 %v2075, 0.0
        %v2084 = vadd.f32 %v2076, 0.0
        %v2085 = vadd.f32 %v2077, 0.0
        %v2086 = vadd.f32 %v2078, 0.0
        %v2087 = vld [vmem:[#allocation15 + $0x1] sm:$0x1]
        %v2088 = vld [vmem:[#allocation2 + $0x1] sm:$0xff]
        %v2089 = vld [vmem:[#allocation2 + $0x11] sm:$0xff]
        %v2090 = vld [vmem:[#allocation2 + $0x21] sm:$0xff]
        %v2091 = vld [vmem:[#allocation2 + $0x31] sm:$0xff]
        %v2092 = vld [vmem:[#allocation2 + $0x41] sm:$0xff]
        %v2093 = vld [vmem:[#allocation2 + $0x51] sm:$0xff]
        %v2094 = vld [vmem:[#allocation2 + $0x61] sm:$0xff]
        %v2095 = vld [vmem:[#allocation2 + $0x71] sm:$0xff]
        %v2096 = vperm.slane %v2087, 0
        %v2097 = vmul.f32 %v2088, %v2096
        %v2098 = vmul.f32 %v2089, %v2096
        %v2099 = vmul.f32 %v2090, %v2096
        %v2100 = vmul.f32 %v2091, %v2096
        %v2101 = vmul.f32 %v2092, %v2096
        %v2102 = vmul.f32 %v2093, %v2096
        %v2103 = vmul.f32 %v2094, %v2096
        %v2104 = vmul.f32 %v2095, %v2096
        %v2105 = vadd.f32 %v2079, %v2097
        %v2106 = vadd.f32 %v2080, %v2098
        %v2107 = vadd.f32 %v2081, %v2099
        %v2108 = vadd.f32 %v2082, %v2100
        %v2109 = vadd.f32 %v2083, %v2101
        %v2110 = vadd.f32 %v2084, %v2102
        %v2111 = vadd.f32 %v2085, %v2103
        %v2112 = vadd.f32 %v2086, %v2104
        %v2113 = vld [vmem:[#allocation15 + $0x2] sm:$0x1]
        %v2114 = vld [vmem:[#allocation2 + $0x2] sm:$0xff]
        %v2115 = vld [vmem:[#allocation2 + $0x12] sm:$0xff]
        %v2116 = vld [vmem:[#allocation2 + $0x22] sm:$0xff]
        %v2117 = vld [vmem:[#allocation2 + $0x32] sm:$0xff]
        %v2118 = vld [vmem:[#allocation2 + $0x42] sm:$0xff]
        %v2119 = vld [vmem:[#allocation2 + $0x52] sm:$0xff]
        %v2120 = vld [vmem:[#allocation2 + $0x62] sm:$0xff]
        %v2121 = vld [vmem:[#allocation2 + $0x72] sm:$0xff]
        %v2122 = vperm.slane %v2113, 0
        %v2123 = vmul.f32 %v2114, %v2122
        %v2124 = vmul.f32 %v2115, %v2122
        %v2125 = vmul.f32 %v2116, %v2122
        %v2126 = vmul.f32 %v2117, %v2122
        %v2127 = vmul.f32 %v2118, %v2122
        %v2128 = vmul.f32 %v2119, %v2122
        %v2129 = vmul.f32 %v2120, %v2122
        %v2130 = vmul.f32 %v2121, %v2122
        %v2131 = vadd.f32 %v2105, %v2123
        %v2132 = vadd.f32 %v2106, %v2124
        %v2133 = vadd.f32 %v2107, %v2125
        %v2134 = vadd.f32 %v2108, %v2126
        %v2135 = vadd.f32 %v2109, %v2127
        %v2136 = vadd.f32 %v2110, %v2128
        %v2137 = vadd.f32 %v2111, %v2129
        %v2138 = vadd.f32 %v2112, %v2130
        %v2139 = vld [vmem:[#allocation15 + $0x3] sm:$0x1]
        %v2140 = vld [vmem:[#allocation2 + $0x3] sm:$0xff]
        %v2141 = vld [vmem:[#allocation2 + $0x13] sm:$0xff]
        %v2142 = vld [vmem:[#allocation2 + $0x23] sm:$0xff]
        %v2143 = vld [vmem:[#allocation2 + $0x33] sm:$0xff]
        %v2144 = vld [vmem:[#allocation2 + $0x43] sm:$0xff]
        %v2145 = vld [vmem:[#allocation2 + $0x53] sm:$0xff]
        %v2146 = vld [vmem:[#allocation2 + $0x63] sm:$0xff]
        %v2147 = vld [vmem:[#allocation2 + $0x73] sm:$0xff]
        %v2148 = vperm.slane %v2139, 0
        %v2149 = vmul.f32 %v2140, %v2148
        %v2150 = vmul.f32 %v2141, %v2148
        %v2151 = vmul.f32 %v2142, %v2148
        %v2152 = vmul.f32 %v2143, %v2148
        %v2153 = vmul.f32 %v2144, %v2148
        %v2154 = vmul.f32 %v2145, %v2148
        %v2155 = vmul.f32 %v2146, %v2148
        %v2156 = vmul.f32 %v2147, %v2148
        %v2157 = vadd.f32 %v2131, %v2149
        %v2158 = vadd.f32 %v2132, %v2150
        %v2159 = vadd.f32 %v2133, %v2151
        %v2160 = vadd.f32 %v2134, %v2152
        %v2161 = vadd.f32 %v2135, %v2153
        %v2162 = vadd.f32 %v2136, %v2154
        %v2163 = vadd.f32 %v2137, %v2155
        %v2164 = vadd.f32 %v2138, %v2156
        %v2165 = vld [vmem:[#allocation15 + $0x4] sm:$0x1]
        %v2166 = vld [vmem:[#allocation2 + $0x4] sm:$0xff]
        %v2167 = vld [vmem:[#allocation2 + $0x14] sm:$0xff]
        %v2168 = vld [vmem:[#allocation2 + $0x24] sm:$0xff]
        %v2169 = vld [vmem:[#allocation2 + $0x34] sm:$0xff]
        %v2170 = vld [vmem:[#allocation2 + $0x44] sm:$0xff]
        %v2171 = vld [vmem:[#allocation2 + $0x54] sm:$0xff]
        %v2172 = vld [vmem:[#allocation2 + $0x64] sm:$0xff]
        %v2173 = vld [vmem:[#allocation2 + $0x74] sm:$0xff]
        %v2174 = vperm.slane %v2165, 0
        %v2175 = vmul.f32 %v2166, %v2174
        %v2176 = vmul.f32 %v2167, %v2174
        %v2177 = vmul.f32 %v2168, %v2174
        %v2178 = vmul.f32 %v2169, %v2174
        %v2179 = vmul.f32 %v2170, %v2174
        %v2180 = vmul.f32 %v2171, %v2174
        %v2181 = vmul.f32 %v2172, %v2174
        %v2182 = vmul.f32 %v2173, %v2174
        %v2183 = vadd.f32 %v2157, %v2175
        %v2184 = vadd.f32 %v2158, %v2176
        %v2185 = vadd.f32 %v2159, %v2177
        %v2186 = vadd.f32 %v2160, %v2178
        %v2187 = vadd.f32 %v2161, %v2179
        %v2188 = vadd.f32 %v2162, %v2180
        %v2189 = vadd.f32 %v2163, %v2181
        %v2190 = vadd.f32 %v2164, %v2182
        %s2191 = scalar_lea.vmem [#allocation15], 8
        %v2192 = vld [vmem:[%s2191] sm:$0x1]
        %s2193 = scalar_lea.vmem [#allocation2], 16
        %v2194 = vld [vmem:[%s2193] sm:$0xff]
        %v2195 = vld [vmem:[%s2193 + $0x10] sm:$0xff]
        %v2196 = vld [vmem:[%s2193 + $0x20] sm:$0xff]
        %v2197 = vld [vmem:[%s2193 + $0x30] sm:$0xff]
        %v2198 = vld [vmem:[%s2193 + $0x40] sm:$0xff]
        %v2199 = vld [vmem:[%s2193 + $0x50] sm:$0xff]
        %v2200 = vld [vmem:[%s2193 + $0x60] sm:$0xff]
        %v2201 = vld [vmem:[%s2193 + $0x70] sm:$0xff]
        %v2202 = vperm.slane %v2192, 0
        %v2203 = vmul.f32 %v2194, %v2202
        %v2204 = vmul.f32 %v2195, %v2202
        %v2205 = vmul.f32 %v2196, %v2202
        %v2206 = vmul.f32 %v2197, %v2202
        %v2207 = vmul.f32 %v2198, %v2202
        %v2208 = vmul.f32 %v2199, %v2202
        %v2209 = vmul.f32 %v2200, %v2202
        %v2210 = vmul.f32 %v2201, %v2202
        %v2211 = vadd.f32 %v2183, %v2203
        %v2212 = vadd.f32 %v2184, %v2204
        %v2213 = vadd.f32 %v2185, %v2205
        %v2214 = vadd.f32 %v2186, %v2206
        %v2215 = vadd.f32 %v2187, %v2207
        %v2216 = vadd.f32 %v2188, %v2208
        %v2217 = vadd.f32 %v2189, %v2209
        %v2218 = vadd.f32 %v2190, %v2210
        %v2219 = vld [vmem:[%s2191 + $0x1] sm:$0x1]
        %v2220 = vld [vmem:[%s2193 + $0x1] sm:$0xff]
        %v2221 = vld [vmem:[%s2193 + $0x11] sm:$0xff]
        %v2222 = vld [vmem:[%s2193 + $0x21] sm:$0xff]
        %v2223 = vld [vmem:[%s2193 + $0x31] sm:$0xff]
        %v2224 = vld [vmem:[%s2193 + $0x41] sm:$0xff]
        %v2225 = vld [vmem:[%s2193 + $0x51] sm:$0xff]
        %v2226 = vld [vmem:[%s2193 + $0x61] sm:$0xff]
        %v2227 = vld [vmem:[%s2193 + $0x71] sm:$0xff]
        %v2228 = vperm.slane %v2219, 0
        %v2229 = vmul.f32 %v2220, %v2228
        %v2230 = vmul.f32 %v2221, %v2228
        %v2231 = vmul.f32 %v2222, %v2228
        %v2232 = vmul.f32 %v2223, %v2228
        %v2233 = vmul.f32 %v2224, %v2228
        %v2234 = vmul.f32 %v2225, %v2228
        %v2235 = vmul.f32 %v2226, %v2228
        %v2236 = vmul.f32 %v2227, %v2228
        %v2237 = vadd.f32 %v2211, %v2229
        %v2238 = vadd.f32 %v2212, %v2230
        %v2239 = vadd.f32 %v2213, %v2231
        %v2240 = vadd.f32 %v2214, %v2232
        %v2241 = vadd.f32 %v2215, %v2233
        %v2242 = vadd.f32 %v2216, %v2234
        %v2243 = vadd.f32 %v2217, %v2235
        %v2244 = vadd.f32 %v2218, %v2236
        %v2245 = vld [vmem:[%s2191 + $0x2] sm:$0x1]
        %v2246 = vld [vmem:[%s2193 + $0x2] sm:$0xff]
        %v2247 = vld [vmem:[%s2193 + $0x12] sm:$0xff]
        %v2248 = vld [vmem:[%s2193 + $0x22] sm:$0xff]
        %v2249 = vld [vmem:[%s2193 + $0x32] sm:$0xff]
        %v2250 = vld [vmem:[%s2193 + $0x42] sm:$0xff]
        %v2251 = vld [vmem:[%s2193 + $0x52] sm:$0xff]
        %v2252 = vld [vmem:[%s2193 + $0x62] sm:$0xff]
        %v2253 = vld [vmem:[%s2193 + $0x72] sm:$0xff]
        %v2254 = vperm.slane %v2245, 0
        %v2255 = vmul.f32 %v2246, %v2254
        %v2256 = vmul.f32 %v2247, %v2254
        %v2257 = vmul.f32 %v2248, %v2254
        %v2258 = vmul.f32 %v2249, %v2254
        %v2259 = vmul.f32 %v2250, %v2254
        %v2260 = vmul.f32 %v2251, %v2254
        %v2261 = vmul.f32 %v2252, %v2254
        %v2262 = vmul.f32 %v2253, %v2254
        %v2263 = vadd.f32 %v2237, %v2255
        %v2264 = vadd.f32 %v2238, %v2256
        %v2265 = vadd.f32 %v2239, %v2257
        %v2266 = vadd.f32 %v2240, %v2258
        %v2267 = vadd.f32 %v2241, %v2259
        %v2268 = vadd.f32 %v2242, %v2260
        %v2269 = vadd.f32 %v2243, %v2261
        %v2270 = vadd.f32 %v2244, %v2262
        %v2271 = vld [vmem:[%s2191 + $0x3] sm:$0x1]
        %v2272 = vld [vmem:[%s2193 + $0x3] sm:$0xff]
        %v2273 = vld [vmem:[%s2193 + $0x13] sm:$0xff]
        %v2274 = vld [vmem:[%s2193 + $0x23] sm:$0xff]
        %v2275 = vld [vmem:[%s2193 + $0x33] sm:$0xff]
        %v2276 = vld [vmem:[%s2193 + $0x43] sm:$0xff]
        %v2277 = vld [vmem:[%s2193 + $0x53] sm:$0xff]
        %v2278 = vld [vmem:[%s2193 + $0x63] sm:$0xff]
        %v2279 = vld [vmem:[%s2193 + $0x73] sm:$0xff]
        %v2280 = vperm.slane %v2271, 0
        %v2281 = vmul.f32 %v2272, %v2280
        %v2282 = vmul.f32 %v2273, %v2280
        %v2283 = vmul.f32 %v2274, %v2280
        %v2284 = vmul.f32 %v2275, %v2280
        %v2285 = vmul.f32 %v2276, %v2280
        %v2286 = vmul.f32 %v2277, %v2280
        %v2287 = vmul.f32 %v2278, %v2280
        %v2288 = vmul.f32 %v2279, %v2280
        %v2289 = vadd.f32 %v2263, %v2281
        %v2290 = vadd.f32 %v2264, %v2282
        %v2291 = vadd.f32 %v2265, %v2283
        %v2292 = vadd.f32 %v2266, %v2284
        %v2293 = vadd.f32 %v2267, %v2285
        %v2294 = vadd.f32 %v2268, %v2286
        %v2295 = vadd.f32 %v2269, %v2287
        %v2296 = vadd.f32 %v2270, %v2288
        %v2297 = vld [vmem:[%s2191 + $0x4] sm:$0x1]
        %v2298 = vld [vmem:[%s2193 + $0x4] sm:$0xff]
        %v2299 = vld [vmem:[%s2193 + $0x14] sm:$0xff]
        %v2300 = vld [vmem:[%s2193 + $0x24] sm:$0xff]
        %v2301 = vld [vmem:[%s2193 + $0x34] sm:$0xff]
        %v2302 = vld [vmem:[%s2193 + $0x44] sm:$0xff]
        %v2303 = vld [vmem:[%s2193 + $0x54] sm:$0xff]
        %v2304 = vld [vmem:[%s2193 + $0x64] sm:$0xff]
        %v2305 = vld [vmem:[%s2193 + $0x74] sm:$0xff]
        %v2306 = vperm.slane %v2297, 0
        %v2307 = vmul.f32 %v2298, %v2306
        %v2308 = vmul.f32 %v2299, %v2306
        %v2309 = vmul.f32 %v2300, %v2306
        %v2310 = vmul.f32 %v2301, %v2306
        %v2311 = vmul.f32 %v2302, %v2306
        %v2312 = vmul.f32 %v2303, %v2306
        %v2313 = vmul.f32 %v2304, %v2306
        %v2314 = vmul.f32 %v2305, %v2306
        %v2315 = vadd.f32 %v2289, %v2307
        %v2316 = vadd.f32 %v2290, %v2308
        %v2317 = vadd.f32 %v2291, %v2309
        %v2318 = vadd.f32 %v2292, %v2310
        %v2319 = vadd.f32 %v2293, %v2311
        %v2320 = vadd.f32 %v2294, %v2312
        %v2321 = vadd.f32 %v2295, %v2313
        %v2322 = vadd.f32 %v2296, %v2314
        %s2323 = scalar_lea.vmem [#allocation15], 16
        %v2324 = vld [vmem:[%s2323] sm:$0x1]
        %v2325 = vld [vmem:[%s2052] sm:$0xff]
        %v2326 = vld [vmem:[%s2052 + $0x10] sm:$0xff]
        %v2327 = vld [vmem:[%s2052 + $0x20] sm:$0xff]
        %v2328 = vld [vmem:[%s2052 + $0x30] sm:$0xff]
        %v2329 = vld [vmem:[%s2052 + $0x40] sm:$0xff]
        %v2330 = vld [vmem:[%s2052 + $0x50] sm:$0xff]
        %v2331 = vld [vmem:[%s2052 + $0x60] sm:$0xff]
        %v2332 = vld [vmem:[%s2052 + $0x70] sm:$0xff]
        %v2333 = vperm.slane %v2324, 0
        %v2334 = vmul.f32 %v2325, %v2333
        %v2335 = vmul.f32 %v2326, %v2333
        %v2336 = vmul.f32 %v2327, %v2333
        %v2337 = vmul.f32 %v2328, %v2333
        %v2338 = vmul.f32 %v2329, %v2333
        %v2339 = vmul.f32 %v2330, %v2333
        %v2340 = vmul.f32 %v2331, %v2333
        %v2341 = vmul.f32 %v2332, %v2333
        %v2342 = vadd.f32 %v2315, %v2334
        %v2343 = vadd.f32 %v2316, %v2335
        %v2344 = vadd.f32 %v2317, %v2336
        %v2345 = vadd.f32 %v2318, %v2337
        %v2346 = vadd.f32 %v2319, %v2338
        %v2347 = vadd.f32 %v2320, %v2339
        %v2348 = vadd.f32 %v2321, %v2340
        %v2349 = vadd.f32 %v2322, %v2341
        %v2350 = vld [vmem:[%s2323 + $0x1] sm:$0x1]
        %v2351 = vld [vmem:[%s2052 + $0x1] sm:$0xff]
        %v2352 = vld [vmem:[%s2052 + $0x11] sm:$0xff]
        %v2353 = vld [vmem:[%s2052 + $0x21] sm:$0xff]
        %v2354 = vld [vmem:[%s2052 + $0x31] sm:$0xff]
        %v2355 = vld [vmem:[%s2052 + $0x41] sm:$0xff]
        %v2356 = vld [vmem:[%s2052 + $0x51] sm:$0xff]
        %v2357 = vld [vmem:[%s2052 + $0x61] sm:$0xff]
        %v2358 = vld [vmem:[%s2052 + $0x71] sm:$0xff]
        %v2359 = vperm.slane %v2350, 0
        %v2360 = vmul.f32 %v2351, %v2359
        %v2361 = vmul.f32 %v2352, %v2359
        %v2362 = vmul.f32 %v2353, %v2359
        %v2363 = vmul.f32 %v2354, %v2359
        %v2364 = vmul.f32 %v2355, %v2359
        %v2365 = vmul.f32 %v2356, %v2359
        %v2366 = vmul.f32 %v2357, %v2359
        %v2367 = vmul.f32 %v2358, %v2359
        %v2368 = vadd.f32 %v2342, %v2360
        %v2369 = vadd.f32 %v2343, %v2361
        %v2370 = vadd.f32 %v2344, %v2362
        %v2371 = vadd.f32 %v2345, %v2363
        %v2372 = vadd.f32 %v2346, %v2364
        %v2373 = vadd.f32 %v2347, %v2365
        %v2374 = vadd.f32 %v2348, %v2366
        %v2375 = vadd.f32 %v2349, %v2367
        %v2376 = vld [vmem:[%s2323 + $0x2] sm:$0x1]
        %v2377 = vld [vmem:[%s2052 + $0x2] sm:$0xff]
        %v2378 = vld [vmem:[%s2052 + $0x12] sm:$0xff]
        %v2379 = vld [vmem:[%s2052 + $0x22] sm:$0xff]
        %v2380 = vld [vmem:[%s2052 + $0x32] sm:$0xff]
        %v2381 = vld [vmem:[%s2052 + $0x42] sm:$0xff]
        %v2382 = vld [vmem:[%s2052 + $0x52] sm:$0xff]
        %v2383 = vld [vmem:[%s2052 + $0x62] sm:$0xff]
        %v2384 = vld [vmem:[%s2052 + $0x72] sm:$0xff]
        %v2385 = vperm.slane %v2376, 0
        %v2386 = vmul.f32 %v2377, %v2385
        %v2387 = vmul.f32 %v2378, %v2385
        %v2388 = vmul.f32 %v2379, %v2385
        %v2389 = vmul.f32 %v2380, %v2385
        %v2390 = vmul.f32 %v2381, %v2385
        %v2391 = vmul.f32 %v2382, %v2385
        %v2392 = vmul.f32 %v2383, %v2385
        %v2393 = vmul.f32 %v2384, %v2385
        %v2394 = vadd.f32 %v2368, %v2386
        %v2395 = vadd.f32 %v2369, %v2387
        %v2396 = vadd.f32 %v2370, %v2388
        %v2397 = vadd.f32 %v2371, %v2389
        %v2398 = vadd.f32 %v2372, %v2390
        %v2399 = vadd.f32 %v2373, %v2391
        %v2400 = vadd.f32 %v2374, %v2392
        %v2401 = vadd.f32 %v2375, %v2393
        %v2402 = vld [vmem:[%s2323 + $0x3] sm:$0x1]
        %v2403 = vld [vmem:[%s2052 + $0x3] sm:$0xff]
        %v2404 = vld [vmem:[%s2052 + $0x13] sm:$0xff]
        %v2405 = vld [vmem:[%s2052 + $0x23] sm:$0xff]
        %v2406 = vld [vmem:[%s2052 + $0x33] sm:$0xff]
        %v2407 = vld [vmem:[%s2052 + $0x43] sm:$0xff]
        %v2408 = vld [vmem:[%s2052 + $0x53] sm:$0xff]
        %v2409 = vld [vmem:[%s2052 + $0x63] sm:$0xff]
        %v2410 = vld [vmem:[%s2052 + $0x73] sm:$0xff]
        %v2411 = vperm.slane %v2402, 0
        %v2412 = vmul.f32 %v2403, %v2411
        %v2413 = vmul.f32 %v2404, %v2411
        %v2414 = vmul.f32 %v2405, %v2411
        %v2415 = vmul.f32 %v2406, %v2411
        %v2416 = vmul.f32 %v2407, %v2411
        %v2417 = vmul.f32 %v2408, %v2411
        %v2418 = vmul.f32 %v2409, %v2411
        %v2419 = vmul.f32 %v2410, %v2411
        %v2420 = vadd.f32 %v2394, %v2412
        %v2421 = vadd.f32 %v2395, %v2413
        %v2422 = vadd.f32 %v2396, %v2414
        %v2423 = vadd.f32 %v2397, %v2415
        %v2424 = vadd.f32 %v2398, %v2416
        %v2425 = vadd.f32 %v2399, %v2417
        %v2426 = vadd.f32 %v2400, %v2418
        %v2427 = vadd.f32 %v2401, %v2419
        %v2428 = vld [vmem:[%s2323 + $0x4] sm:$0x1]
        %v2429 = vld [vmem:[%s2052 + $0x4] sm:$0xff]
        %v2430 = vld [vmem:[%s2052 + $0x14] sm:$0xff]
        %v2431 = vld [vmem:[%s2052 + $0x24] sm:$0xff]
        %v2432 = vld [vmem:[%s2052 + $0x34] sm:$0xff]
        %v2433 = vld [vmem:[%s2052 + $0x44] sm:$0xff]
        %v2434 = vld [vmem:[%s2052 + $0x54] sm:$0xff]
        %v2435 = vld [vmem:[%s2052 + $0x64] sm:$0xff]
        %v2436 = vld [vmem:[%s2052 + $0x74] sm:$0xff]
        %v2437 = vperm.slane %v2428, 0
        %v2438 = vmul.f32 %v2429, %v2437
        %v2439 = vmul.f32 %v2430, %v2437
        %v2440 = vmul.f32 %v2431, %v2437
        %v2441 = vmul.f32 %v2432, %v2437
        %v2442 = vmul.f32 %v2433, %v2437
        %v2443 = vmul.f32 %v2434, %v2437
        %v2444 = vmul.f32 %v2435, %v2437
        %v2445 = vmul.f32 %v2436, %v2437
        %v2446 = vadd.f32 %v2420, %v2438
        %v2447 = vadd.f32 %v2421, %v2439
        %v2448 = vadd.f32 %v2422, %v2440
        %v2449 = vadd.f32 %v2423, %v2441
        %v2450 = vadd.f32 %v2424, %v2442
        %v2451 = vadd.f32 %v2425, %v2443
        %v2452 = vadd.f32 %v2426, %v2444
        %v2453 = vadd.f32 %v2427, %v2445
        %s2454 = scalar_lea.vmem [#allocation15], 24
        %v2455 = vld [vmem:[%s2454] sm:$0x1]
        %s2456 = scalar_lea.vmem [#allocation2], 48
        %v2457 = vld [vmem:[%s2456] sm:$0xff]
        %v2458 = vld [vmem:[%s2456 + $0x10] sm:$0xff]
        %v2459 = vld [vmem:[%s2456 + $0x20] sm:$0xff]
        %v2460 = vld [vmem:[%s2456 + $0x30] sm:$0xff]
        %v2461 = vld [vmem:[%s2456 + $0x40] sm:$0xff]
        %v2462 = vld [vmem:[%s2456 + $0x50] sm:$0xff]
        %v2463 = vld [vmem:[%s2456 + $0x60] sm:$0xff]
        %v2464 = vld [vmem:[%s2456 + $0x70] sm:$0xff]
        %v2465 = vperm.slane %v2455, 0
        %v2466 = vmul.f32 %v2457, %v2465
        %v2467 = vmul.f32 %v2458, %v2465
        %v2468 = vmul.f32 %v2459, %v2465
        %v2469 = vmul.f32 %v2460, %v2465
        %v2470 = vmul.f32 %v2461, %v2465
        %v2471 = vmul.f32 %v2462, %v2465
        %v2472 = vmul.f32 %v2463, %v2465
        %v2473 = vmul.f32 %v2464, %v2465
        %v2474 = vadd.f32 %v2446, %v2466
        %v2475 = vadd.f32 %v2447, %v2467
        %v2476 = vadd.f32 %v2448, %v2468
        %v2477 = vadd.f32 %v2449, %v2469
        %v2478 = vadd.f32 %v2450, %v2470
        %v2479 = vadd.f32 %v2451, %v2471
        %v2480 = vadd.f32 %v2452, %v2472
        %v2481 = vadd.f32 %v2453, %v2473
        %v2482 = vld [vmem:[%s2454 + $0x1] sm:$0x1]
        %v2483 = vld [vmem:[%s2456 + $0x1] sm:$0xff]
        %v2484 = vld [vmem:[%s2456 + $0x11] sm:$0xff]
        %v2485 = vld [vmem:[%s2456 + $0x21] sm:$0xff]
        %v2486 = vld [vmem:[%s2456 + $0x31] sm:$0xff]
        %v2487 = vld [vmem:[%s2456 + $0x41] sm:$0xff]
        %v2488 = vld [vmem:[%s2456 + $0x51] sm:$0xff]
        %v2489 = vld [vmem:[%s2456 + $0x61] sm:$0xff]
        %v2490 = vld [vmem:[%s2456 + $0x71] sm:$0xff]
        %v2491 = vperm.slane %v2482, 0
        %v2492 = vmul.f32 %v2483, %v2491
        %v2493 = vmul.f32 %v2484, %v2491
        %v2494 = vmul.f32 %v2485, %v2491
        %v2495 = vmul.f32 %v2486, %v2491
        %v2496 = vmul.f32 %v2487, %v2491
        %v2497 = vmul.f32 %v2488, %v2491
        %v2498 = vmul.f32 %v2489, %v2491
        %v2499 = vmul.f32 %v2490, %v2491
        %v2500 = vadd.f32 %v2474, %v2492
        %v2501 = vadd.f32 %v2475, %v2493
        %v2502 = vadd.f32 %v2476, %v2494
        %v2503 = vadd.f32 %v2477, %v2495
        %v2504 = vadd.f32 %v2478, %v2496
        %v2505 = vadd.f32 %v2479, %v2497
        %v2506 = vadd.f32 %v2480, %v2498
        %v2507 = vadd.f32 %v2481, %v2499
        %v2508 = vld [vmem:[%s2454 + $0x2] sm:$0x1]
        %v2509 = vld [vmem:[%s2456 + $0x2] sm:$0xff]
        %v2510 = vld [vmem:[%s2456 + $0x12] sm:$0xff]
        %v2511 = vld [vmem:[%s2456 + $0x22] sm:$0xff]
        %v2512 = vld [vmem:[%s2456 + $0x32] sm:$0xff]
        %v2513 = vld [vmem:[%s2456 + $0x42] sm:$0xff]
        %v2514 = vld [vmem:[%s2456 + $0x52] sm:$0xff]
        %v2515 = vld [vmem:[%s2456 + $0x62] sm:$0xff]
        %v2516 = vld [vmem:[%s2456 + $0x72] sm:$0xff]
        %v2517 = vperm.slane %v2508, 0
        %v2518 = vmul.f32 %v2509, %v2517
        %v2519 = vmul.f32 %v2510, %v2517
        %v2520 = vmul.f32 %v2511, %v2517
        %v2521 = vmul.f32 %v2512, %v2517
        %v2522 = vmul.f32 %v2513, %v2517
        %v2523 = vmul.f32 %v2514, %v2517
        %v2524 = vmul.f32 %v2515, %v2517
        %v2525 = vmul.f32 %v2516, %v2517
        %v2526 = vadd.f32 %v2500, %v2518
        %v2527 = vadd.f32 %v2501, %v2519
        %v2528 = vadd.f32 %v2502, %v2520
        %v2529 = vadd.f32 %v2503, %v2521
        %v2530 = vadd.f32 %v2504, %v2522
        %v2531 = vadd.f32 %v2505, %v2523
        %v2532 = vadd.f32 %v2506, %v2524
        %v2533 = vadd.f32 %v2507, %v2525
        %v2534 = vld [vmem:[%s2454 + $0x3] sm:$0x1]
        %v2535 = vld [vmem:[%s2456 + $0x3] sm:$0xff]
        %v2536 = vld [vmem:[%s2456 + $0x13] sm:$0xff]
        %v2537 = vld [vmem:[%s2456 + $0x23] sm:$0xff]
        %v2538 = vld [vmem:[%s2456 + $0x33] sm:$0xff]
        %v2539 = vld [vmem:[%s2456 + $0x43] sm:$0xff]
        %v2540 = vld [vmem:[%s2456 + $0x53] sm:$0xff]
        %v2541 = vld [vmem:[%s2456 + $0x63] sm:$0xff]
        %v2542 = vld [vmem:[%s2456 + $0x73] sm:$0xff]
        %v2543 = vperm.slane %v2534, 0
        %v2544 = vmul.f32 %v2535, %v2543
        %v2545 = vmul.f32 %v2536, %v2543
        %v2546 = vmul.f32 %v2537, %v2543
        %v2547 = vmul.f32 %v2538, %v2543
        %v2548 = vmul.f32 %v2539, %v2543
        %v2549 = vmul.f32 %v2540, %v2543
        %v2550 = vmul.f32 %v2541, %v2543
        %v2551 = vmul.f32 %v2542, %v2543
        %v2552 = vadd.f32 %v2526, %v2544
        %v2553 = vadd.f32 %v2527, %v2545
        %v2554 = vadd.f32 %v2528, %v2546
        %v2555 = vadd.f32 %v2529, %v2547
        %v2556 = vadd.f32 %v2530, %v2548
        %v2557 = vadd.f32 %v2531, %v2549
        %v2558 = vadd.f32 %v2532, %v2550
        %v2559 = vadd.f32 %v2533, %v2551
        %v2560 = vld [vmem:[%s2454 + $0x4] sm:$0x1]
        %v2561 = vld [vmem:[%s2456 + $0x4] sm:$0xff]
        %v2562 = vld [vmem:[%s2456 + $0x14] sm:$0xff]
        %v2563 = vld [vmem:[%s2456 + $0x24] sm:$0xff]
        %v2564 = vld [vmem:[%s2456 + $0x34] sm:$0xff]
        %v2565 = vld [vmem:[%s2456 + $0x44] sm:$0xff]
        %v2566 = vld [vmem:[%s2456 + $0x54] sm:$0xff]
        %v2567 = vld [vmem:[%s2456 + $0x64] sm:$0xff]
        %v2568 = vld [vmem:[%s2456 + $0x74] sm:$0xff]
        %v2569 = vperm.slane %v2560, 0
        %v2570 = vmul.f32 %v2561, %v2569
        %v2571 = vmul.f32 %v2562, %v2569
        %v2572 = vmul.f32 %v2563, %v2569
        %v2573 = vmul.f32 %v2564, %v2569
        %v2574 = vmul.f32 %v2565, %v2569
        %v2575 = vmul.f32 %v2566, %v2569
        %v2576 = vmul.f32 %v2567, %v2569
        %v2577 = vmul.f32 %v2568, %v2569
        %v2578 = vadd.f32 %v2552, %v2570
        %v2579 = vadd.f32 %v2553, %v2571
        %v2580 = vadd.f32 %v2554, %v2572
        %v2581 = vadd.f32 %v2555, %v2573
        %v2582 = vadd.f32 %v2556, %v2574
        %v2583 = vadd.f32 %v2557, %v2575
        %v2584 = vadd.f32 %v2558, %v2576
        %v2585 = vadd.f32 %v2559, %v2577
        %s2586 = scalar_lea.vmem [#allocation15], 32
        %v2587 = vld [vmem:[%s2586] sm:$0x1]
        %s2588 = scalar_lea.vmem [#allocation2], 64
        %v2589 = vld [vmem:[%s2588] sm:$0xff]
        %v2590 = vld [vmem:[%s2588 + $0x10] sm:$0xff]
        %v2591 = vld [vmem:[%s2588 + $0x20] sm:$0xff]
        %v2592 = vld [vmem:[%s2588 + $0x30] sm:$0xff]
        %v2593 = vld [vmem:[%s2588 + $0x40] sm:$0xff]
        %v2594 = vld [vmem:[%s2588 + $0x50] sm:$0xff]
        %v2595 = vld [vmem:[%s2588 + $0x60] sm:$0xff]
        %v2596 = vld [vmem:[%s2588 + $0x70] sm:$0xff]
        %v2597 = vperm.slane %v2587, 0
        %v2598 = vmul.f32 %v2589, %v2597
        %v2599 = vmul.f32 %v2590, %v2597
        %v2600 = vmul.f32 %v2591, %v2597
        %v2601 = vmul.f32 %v2592, %v2597
        %v2602 = vmul.f32 %v2593, %v2597
        %v2603 = vmul.f32 %v2594, %v2597
        %v2604 = vmul.f32 %v2595, %v2597
        %v2605 = vmul.f32 %v2596, %v2597
        %v2606 = vadd.f32 %v2578, %v2598
        %v2607 = vadd.f32 %v2579, %v2599
        %v2608 = vadd.f32 %v2580, %v2600
        %v2609 = vadd.f32 %v2581, %v2601
        %v2610 = vadd.f32 %v2582, %v2602
        %v2611 = vadd.f32 %v2583, %v2603
        %v2612 = vadd.f32 %v2584, %v2604
        %v2613 = vadd.f32 %v2585, %v2605
        %v2614 = vld [vmem:[%s2586 + $0x1] sm:$0x1]
        %v2615 = vld [vmem:[%s2588 + $0x1] sm:$0xff]
        %v2616 = vld [vmem:[%s2588 + $0x11] sm:$0xff]
        %v2617 = vld [vmem:[%s2588 + $0x21] sm:$0xff]
        %v2618 = vld [vmem:[%s2588 + $0x31] sm:$0xff]
        %v2619 = vld [vmem:[%s2588 + $0x41] sm:$0xff]
        %v2620 = vld [vmem:[%s2588 + $0x51] sm:$0xff]
        %v2621 = vld [vmem:[%s2588 + $0x61] sm:$0xff]
        %v2622 = vld [vmem:[%s2588 + $0x71] sm:$0xff]
        %v2623 = vperm.slane %v2614, 0
        %v2624 = vmul.f32 %v2615, %v2623
        %v2625 = vmul.f32 %v2616, %v2623
        %v2626 = vmul.f32 %v2617, %v2623
        %v2627 = vmul.f32 %v2618, %v2623
        %v2628 = vmul.f32 %v2619, %v2623
        %v2629 = vmul.f32 %v2620, %v2623
        %v2630 = vmul.f32 %v2621, %v2623
        %v2631 = vmul.f32 %v2622, %v2623
        %v2632 = vadd.f32 %v2606, %v2624
        %v2633 = vadd.f32 %v2607, %v2625
        %v2634 = vadd.f32 %v2608, %v2626
        %v2635 = vadd.f32 %v2609, %v2627
        %v2636 = vadd.f32 %v2610, %v2628
        %v2637 = vadd.f32 %v2611, %v2629
        %v2638 = vadd.f32 %v2612, %v2630
        %v2639 = vadd.f32 %v2613, %v2631
        %v2640 = vld [vmem:[%s2586 + $0x2] sm:$0x1]
        %v2641 = vld [vmem:[%s2588 + $0x2] sm:$0xff]
        %v2642 = vld [vmem:[%s2588 + $0x12] sm:$0xff]
        %v2643 = vld [vmem:[%s2588 + $0x22] sm:$0xff]
        %v2644 = vld [vmem:[%s2588 + $0x32] sm:$0xff]
        %v2645 = vld [vmem:[%s2588 + $0x42] sm:$0xff]
        %v2646 = vld [vmem:[%s2588 + $0x52] sm:$0xff]
        %v2647 = vld [vmem:[%s2588 + $0x62] sm:$0xff]
        %v2648 = vld [vmem:[%s2588 + $0x72] sm:$0xff]
        %v2649 = vperm.slane %v2640, 0
        %v2650 = vmul.f32 %v2641, %v2649
        %v2651 = vmul.f32 %v2642, %v2649
        %v2652 = vmul.f32 %v2643, %v2649
        %v2653 = vmul.f32 %v2644, %v2649
        %v2654 = vmul.f32 %v2645, %v2649
        %v2655 = vmul.f32 %v2646, %v2649
        %v2656 = vmul.f32 %v2647, %v2649
        %v2657 = vmul.f32 %v2648, %v2649
        %v2658 = vadd.f32 %v2632, %v2650
        %v2659 = vadd.f32 %v2633, %v2651
        %v2660 = vadd.f32 %v2634, %v2652
        %v2661 = vadd.f32 %v2635, %v2653
        %v2662 = vadd.f32 %v2636, %v2654
        %v2663 = vadd.f32 %v2637, %v2655
        %v2664 = vadd.f32 %v2638, %v2656
        %v2665 = vadd.f32 %v2639, %v2657
        %v2666 = vld [vmem:[%s2586 + $0x3] sm:$0x1]
        %v2667 = vld [vmem:[%s2588 + $0x3] sm:$0xff]
        %v2668 = vld [vmem:[%s2588 + $0x13] sm:$0xff]
        %v2669 = vld [vmem:[%s2588 + $0x23] sm:$0xff]
        %v2670 = vld [vmem:[%s2588 + $0x33] sm:$0xff]
        %v2671 = vld [vmem:[%s2588 + $0x43] sm:$0xff]
        %v2672 = vld [vmem:[%s2588 + $0x53] sm:$0xff]
        %v2673 = vld [vmem:[%s2588 + $0x63] sm:$0xff]
        %v2674 = vld [vmem:[%s2588 + $0x73] sm:$0xff]
        %v2675 = vperm.slane %v2666, 0
        %v2676 = vmul.f32 %v2667, %v2675
        %v2677 = vmul.f32 %v2668, %v2675
        %v2678 = vmul.f32 %v2669, %v2675
        %v2679 = vmul.f32 %v2670, %v2675
        %v2680 = vmul.f32 %v2671, %v2675
        %v2681 = vmul.f32 %v2672, %v2675
        %v2682 = vmul.f32 %v2673, %v2675
        %v2683 = vmul.f32 %v2674, %v2675
        %v2684 = vadd.f32 %v2658, %v2676
        %v2685 = vadd.f32 %v2659, %v2677
        %v2686 = vadd.f32 %v2660, %v2678
        %v2687 = vadd.f32 %v2661, %v2679
        %v2688 = vadd.f32 %v2662, %v2680
        %v2689 = vadd.f32 %v2663, %v2681
        %v2690 = vadd.f32 %v2664, %v2682
        %v2691 = vadd.f32 %v2665, %v2683
        %v2692 = vld [vmem:[%s2586 + $0x4] sm:$0x1]
        %v2693 = vld [vmem:[%s2588 + $0x4] sm:$0xff]
        %v2694 = vld [vmem:[%s2588 + $0x14] sm:$0xff]
        %v2695 = vld [vmem:[%s2588 + $0x24] sm:$0xff]
        %v2696 = vld [vmem:[%s2588 + $0x34] sm:$0xff]
        %v2697 = vld [vmem:[%s2588 + $0x44] sm:$0xff]
        %v2698 = vld [vmem:[%s2588 + $0x54] sm:$0xff]
        %v2699 = vld [vmem:[%s2588 + $0x64] sm:$0xff]
        %v2700 = vld [vmem:[%s2588 + $0x74] sm:$0xff]
        %v2701 = vperm.slane %v2692, 0
        %v2702 = vmul.f32 %v2693, %v2701
        %v2703 = vmul.f32 %v2694, %v2701
        %v2704 = vmul.f32 %v2695, %v2701
        %v2705 = vmul.f32 %v2696, %v2701
        %v2706 = vmul.f32 %v2697, %v2701
        %v2707 = vmul.f32 %v2698, %v2701
        %v2708 = vmul.f32 %v2699, %v2701
        %v2709 = vmul.f32 %v2700, %v2701
        %v2710 = vadd.f32 %v2684, %v2702
        %v2711 = vadd.f32 %v2685, %v2703
        %v2712 = vadd.f32 %v2686, %v2704
        %v2713 = vadd.f32 %v2687, %v2705
        %v2714 = vadd.f32 %v2688, %v2706
        %v2715 = vadd.f32 %v2689, %v2707
        %v2716 = vadd.f32 %v2690, %v2708
        %v2717 = vadd.f32 %v2691, %v2709
        %v2718 = vld [vmem:[%s11] sm:$0x1]
        %v2720 = vperm.slane %v2718, 0
        %v2722 = vadd.f32 %v2710, %v2720
        %v2723 = vadd.f32 %v2711, %v2720
        %v2724 = vadd.f32 %v2712, %v2720
        %v2725 = vadd.f32 %v2713, %v2720
        %v2726 = vadd.f32 %v2714, %v2720
        %v2727 = vadd.f32 %v2715, %v2720
        %v2728 = vadd.f32 %v2716, %v2720
        %v2729 = vadd.f32 %v2717, %v2720
        %v2730 = vadd.f32 %v1922, %v2722
        %v2731 = vadd.f32 %v1937, %v2723
        %v2732 = vadd.f32 %v1952, %v2724
        %v2733 = vadd.f32 %v1967, %v2725
        %v2734 = vadd.f32 %v1982, %v2726
        %v2735 = vadd.f32 %v1997, %v2727
        %v2736 = vadd.f32 %v2012, %v2728
        %v2737 = vadd.f32 %v2027, %v2729
        %v2738 = vmul.f32 %v2730, %v723
        %v2739 = vmul.f32 %v2731, %v726
        %v2740 = vmul.f32 %v2732, %v729
        %v2741 = vmul.f32 %v2733, %v732
        %v2742 = vmul.f32 %v2734, %v735
        %v2743 = vmul.f32 %v2735, %v738
        %v2744 = vmul.f32 %v2736, %v741
        %v2745 = vmul.f32 %v2737, %v744
        %v2746 = vld [vmem:[#allocation17] sm:$0xff]
        %v2747 = vld [vmem:[#allocation17 + $0x8] sm:$0xff]
        %v2748 = vld [vmem:[#allocation17 + $0x10] sm:$0xff]
        %v2749 = vld [vmem:[#allocation17 + $0x18] sm:$0xff]
        %v2750 = vld [vmem:[#allocation17 + $0x20] sm:$0xff]
        %v2751 = vld [vmem:[#allocation17 + $0x28] sm:$0xff]
        %v2752 = vld [vmem:[#allocation17 + $0x30] sm:$0xff]
        %v2753 = vld [vmem:[#allocation17 + $0x38] sm:$0xff]
        %v2754 = vld [vmem:[#allocation17 + $0x40] sm:$0xff]
        %v2755 = vld [vmem:[#allocation17 + $0x48] sm:$0xff]
        %v2756 = vld [vmem:[#allocation17 + $0x50] sm:$0xff]
        %v2757 = vld [vmem:[#allocation17 + $0x58] sm:$0xff]
        %v2758 = vld [vmem:[#allocation17 + $0x60] sm:$0xff]
        %v2759 = vld [vmem:[#allocation17 + $0x68] sm:$0xff]
        %v2760 = vld [vmem:[#allocation17 + $0x70] sm:$0xff]
        %v2761 = vld [vmem:[#allocation17 + $0x78] sm:$0xff]
        %v2762 = vld [vmem:[%s13] sm:$0x1]
        %v2764 = vperm.slane %v2762, 0
        %2766 = vmatpush.msra.mxu0 %v2761
        %2767 = vmatpush.msra.mxu0 %v2760
        %2768 = vmatpush.msra.mxu0 %v2759
        %2769 = vmatpush.msra.mxu0 %v2758
        %2770 = vmatpush.msra.mxu0 %v2757
        %2771 = vmatpush.msra.mxu0 %v2756
        %2772 = vmatpush.msra.mxu0 %v2755
        %2773 = vmatpush.msra.mxu0 %v2754
        %2774 = vmatpush.msra.mxu0 %v2753
        %2775 = vmatpush.msra.mxu0 %v2752
        %2776 = vmatpush.msra.mxu0 %v2751
        %2777 = vmatpush.msra.mxu0 %v2750
        %2778 = vmatpush.msra.mxu0 %v2749
        %2779 = vmatpush.msra.mxu0 %v2748
        %2780 = vmatpush.msra.mxu0 %v2747
        %2781 = vmatpush.msra.mxu0 %v2746
        %2782 = vmatmul.f32.gmra.mxu0 %v2738
        %v2783 = vpop.f32.mrf.mxu0
        %v2784 = vadd.f32 %v2764, %v2783
        %2785 = vmatmul.f32.gmra.mxu0 %v2739
        %v2786 = vpop.f32.mrf.mxu0
        %v2787 = vadd.f32 %v2764, %v2786
        %2788 = vmatmul.f32.gmra.mxu0 %v2740
        %v2789 = vpop.f32.mrf.mxu0
        %v2790 = vadd.f32 %v2764, %v2789
        %2791 = vmatmul.f32.gmra.mxu0 %v2741
        %v2792 = vpop.f32.mrf.mxu0
        %v2793 = vadd.f32 %v2764, %v2792
        %2794 = vmatmul.f32.gmra.mxu0 %v2742
        %v2795 = vpop.f32.mrf.mxu0
        %v2796 = vadd.f32 %v2764, %v2795
        %2797 = vmatmul.f32.gmra.mxu0 %v2743
        %v2798 = vpop.f32.mrf.mxu0
        %v2799 = vadd.f32 %v2764, %v2798
        %2800 = vmatmul.f32.gmra.mxu0 %v2744
        %v2801 = vpop.f32.mrf.mxu0
        %v2802 = vadd.f32 %v2764, %v2801
        %2803 = vmatmul.f32.gmra.mxu0 %v2745
        %v2804 = vpop.f32.mrf.mxu0
        %v2805 = vadd.f32 %v2764, %v2804
        %2806 = vdwg.mxu0
        %2807 = vst [vmem:[%s617] sm:$0xff] %v2784
        %2808 = vst [vmem:[%s617 + $0x8] sm:$0xff] %v2787
        %2809 = vst [vmem:[%s617 + $0x10] sm:$0xff] %v2790
        %2810 = vst [vmem:[%s617 + $0x18] sm:$0xff] %v2793
        %2811 = vst [vmem:[%s617 + $0x20] sm:$0xff] %v2796
        %2812 = vst [vmem:[%s617 + $0x28] sm:$0xff] %v2799
        %2813 = vst [vmem:[%s617 + $0x30] sm:$0xff] %v2802
        %2814 = vst [vmem:[%s617 + $0x38] sm:$0xff] %v2805
        %s2815 = sand.u32 %s342, 1
        %s2816 = scalar_lea.sflag [#allocation5], %s2815
        %s2817 = sand.u32 %s342, 1
        %s2818 = smul.addr %s2817, 64
        %s2819 = scalar_lea.vmem [#allocation18], %s2818
        // Predicated region
        $region113: #{tpu_custom_call.1} parent=75 // pred_check
          %p2820 = pneg %p352
        $region114: #{tpu_custom_call.1} parent=75 // pred_check_branch
          %2822 = sbr.rel (%p2820) target = $region116
        $region115: #{tpu_custom_call.1} parent=75 // pred_region
          %2824 = vsyncadd %s2816, 0
          %s2825 = smul.addr %s35, 8
          %s2826 = smul.addr %s2825, 8
          %s2827 = scalar_lea.hbm %s14, %s2826
          %s2828 = sshll.u32 %s2819, 4
          %s2829 = int_to_ptr.vmem [resolvable:$true] %s2828
          %s2830 = sshll.u32 %s2827, 4
          %s2831 = int_to_ptr.hbm [resolvable:$true] %s2830
          %2836 = dma.vmem_to_hbm [thread:$0]  %s2829, 1024, %s2831, %s2816, 128, 128, 8
        $region116: #{tpu_custom_call.1} parent=75 // pred_fallthru
          _
      $region76: #{tpu_custom_call.1} parent=5 // pred_fallthru
        _
      %p2837 = scmp.le.s32.totalorder 2, %s30
      // Predicated region
      $region117: #{tpu_custom_call.1} parent=5 // pred_check
        %p2838 = pneg %p2837
      $region118: #{tpu_custom_call.1} parent=5 // pred_check_branch
        %2840 = sbr.rel (%p2838) target = $region120
      $region119: #{tpu_custom_call.1} parent=5 // pred_region
        %s2841 = ssub.s32 %s30, 2
        // Predicated region
        $region121: #{tpu_custom_call.1} parent=119 // pred_check
          %p2842 = pneg %p358
        $region122: #{tpu_custom_call.1} parent=119 // pred_check_branch
          %2844 = sbr.rel (%p2842) target = $region124
        $region123: #{tpu_custom_call.1} parent=119 // pred_region
          %s2845 = sand.u32 %s343, 1
          %s2846 = scalar_lea.sflag [#allocation5], %s2845
          %s2847 = sand.u32 %s343, 1
          %s2848 = smul.addr %s2847, 64
          %s2849 = scalar_lea.vmem [#allocation18], %s2848
          %2851 = dma.done %s2846, 1024
        $region124: #{tpu_custom_call.1} parent=119 // pred_fallthru
          _
      $region120: #{tpu_custom_call.1} parent=5 // pred_fallthru
        _
    $region6: #{tpu_custom_call.1} parent=1 // loop_footer
      %s34 = sadd.s32 1, %s30
    $region7: #{tpu_custom_call.1} parent=1 // loop_footer_branch
      %29 = sbr.rel target = $region3
    $region8: #{tpu_custom_call.1} parent=1 // loop_exit
      _
    %2852 = vsyncpa [#allocation4], 1
    %s2853 = scalar_lea.sflag [#allocation4], 1
    %2854 = vsyncpa %s2853, 1
    %2855 = vsyncpa [#allocation7], 1
    %2856 = vsyncpa [#allocation10], 1
    %2857 = vsyncpa [#allocation13], 1
    %2858 = vsyncpa [#allocation16], 1
    %2859 = vsyncpa [#allocation5], 1
    %s2860 = scalar_lea.sflag [#allocation5], 1
    %2861 = vsyncpa %s2860, 1

</llo_original>
